<compile_context>
chip_gen: v6e
topology: v6e:2x2x1
jax: 0.10.0
libtpu: 0.0.40
codegen_flags: <defaults>
</compile_context>

<pallas_src>
import functools

import jax
import jax.numpy as jnp
from jax.experimental import pallas as pl
from jax.experimental.pallas import tpu as pltpu  # noqa: F401  (kept for prod variant)


# ----------------------------------------------------------------------------------
# Single fused Pallas kernel: bias build + all layers + final LN + fused logit heads
# ----------------------------------------------------------------------------------
def _stage_kernel(x_ref, br_ref, kc_ref, ln_ref, wqk_ref, wvo_ref, w1_ref, w2_ref,
                  fln_ref, hw_ref, o_ref, *, depth, heads):
    """Whole-array (no grid) kernel.

    x_ref:   (total, D)        batch-folded activations (total = B * N)
    br_ref:  (total, 1) f32    batch id of each query row
    kc_ref:  (1, total) f32    batch id of each key column, -1 where key is padded
    ln_ref:  (depth, 4, D)     [attn_gamma, attn_beta, ff_gamma, ff_beta]
    wqk_ref: (depth, heads, D, D)   pre-fused (Wq_h*scale) @ Wk_h^T
    wvo_ref: (depth, heads, D, D)   pre-fused  Wv_h @ Wo_h
    w1_ref:  (depth, 2, D, ff)      GEGLU [value_proj, gate_proj]
    w2_ref:  (depth, ff, D)
    fln_ref: (2, D)            final LayerNorm
    hw_ref:  (D, Cpad)         fused, 128-lane-padded logit-head weight
    o_ref:   (total, Cpad)     lane-dense logits for ALL heads at every position
    """
    total = x_ref.shape[0]
    x = x_ref[...]

    # Block-diagonal causal + key-padding additive bias, built in-kernel.
    row = jax.lax.broadcasted_iota(jnp.int32, (total, total), 0)
    col = jax.lax.broadcasted_iota(jnp.int32, (total, total), 1)
    allowed = (br_ref[...] == kc_ref[...]) & (col <= row)      # same batch & valid key & causal
    bias = jnp.where(allowed, 0.0, -1e30).astype(jnp.float32)  # (total, total)

    def layernorm(v, g, b, eps=1e-5):
        mu = jnp.mean(v, axis=-1, keepdims=True)
        var = jnp.mean((v - mu) ** 2, axis=-1, keepdims=True)
        return (v - mu) * jax.lax.rsqrt(var + eps) * g + b

    for l in range(depth):                       # static unroll, depth is small
        lnp = ln_ref[l]                          # (4, D)
        wqk_l = wqk_ref[l]                       # (heads, D, D)
        wvo_l = wvo_ref[l]                       # (heads, D, D)
        w1_l = w1_ref[l]                         # (2, D, ff)
        w2_l = w2_ref[l]                         # (ff, D)

        # ---- attention block (pre-norm, per-head fused QK / VO weights) ----
        xn = layernorm(x, lnp[0:1, :], lnp[1:2, :])
        attn = jnp.zeros_like(x)
        for h in range(heads):                   # static unroll over heads
            t = jnp.dot(xn, wqk_l[h], preferred_element_type=jnp.float32)          # (total, D)
            s = jax.lax.dot_general(t, xn, (((1,), (1,)), ((), ())),
                                    preferred_element_type=jnp.float32) + bias     # (total, total)
            s = s - jnp.max(s, axis=-1, keepdims=True)
            p = jnp.exp(s)
            p = p / jnp.sum(p, axis=-1, keepdims=True)          # exact softmax denom
            vo = jnp.dot(xn, wvo_l[h], preferred_element_type=jnp.float32)         # (total, D)
            attn = attn + jnp.dot(p, vo, preferred_element_type=jnp.float32)
        x = x + attn

        # ---- feed-forward block (pre-norm, GEGLU; no lane slicing of the hidden) ----
        xn = layernorm(x, lnp[2:3, :], lnp[3:4, :])
        a = jnp.dot(xn, w1_l[0], preferred_element_type=jnp.float32)                # (total, ff)
        g = jnp.dot(xn, w1_l[1], preferred_element_type=jnp.float32)                # (total, ff)
        x = x + jnp.dot(a * jax.nn.gelu(g), w2_l, preferred_element_type=jnp.float32)

    # ---- final LN + fused logit heads (one matmul, lane-dense 128-wide store) ----
    x = layernorm(x, fln_ref[0:1, :], fln_ref[1:2, :])
    o_ref[...] = jnp.dot(x, hw_ref[...], preferred_element_type=jnp.float32)


def fused_stage(tp, head_w, x_flat, batch_row, key_col):
    """One pallas_call, no grid: full arrays in VMEM, one invocation.

    NOTE(prod/v7x): at production dims add a depth grid axis with per-layer weight
    BlockSpecs (pipelined HBM->VMEM) + vmem_limit_bytes; whole-block weights only fit
    at toy dims.
    """
    total, _ = x_flat.shape
    cpad = head_w.shape[1]
    kernel = functools.partial(_stage_kernel, depth=tp["depth"], heads=tp["heads"])
    return pl.pallas_call(
        kernel,
        out_shape=jax.ShapeDtypeStruct((total, cpad), jnp.float32),
    )(x_flat, batch_row, key_col, tp["ln"], tp["wqk"], tp["wvo"],
      tp["w1"], tp["w2"], tp["final_ln"], head_w)


# ----------------------------------------------------------------------------------
# TokenConditionedTransformer / wrapper / SemanticStage forward
# ----------------------------------------------------------------------------------
def get_embeds(table, ids, pad_id=-1):
    mask = ids != pad_id
    safe = jnp.where(mask, ids, 0)
    emb = table[safe]
    return jnp.where(mask[..., None], emb, 0.0)


def semantic_stage_forward(params, clap_token_ids, semantic_token_ids, pad_id=-1):
    """SemanticStage.forward(clap_token_ids=..., semantic_token_ids=..., return_loss=False)."""
    seqs = params["token_sequences"]          # [(codebook_size, num_quantizers), ...]
    eos_ids = [cs for cs, _ in seqs]
    b = clap_token_ids.shape[0]
    dim = params["dim"]

    # ---- TokenConditionedTransformerWrapper.forward (eval, no loss) ----
    all_ids = [clap_token_ids.reshape(b, -1), semantic_token_ids.reshape(b, -1)]
    all_ids = [
        jnp.concatenate([ids, jnp.full((b, 1), eos, ids.dtype)], axis=-1)
        for ids, eos in zip(all_ids, eos_ids)
    ]
    masks, new_ids = [], []
    for ids, eos in zip(all_ids[:-1], eos_ids[:-1]):
        m = (ids != pad_id) & (ids != eos)
        new_ids.append(jnp.where(m, ids, 0))
        masks.append(jnp.concatenate([jnp.ones((b, 1), bool), m], axis=-1))
    new_ids.append(all_ids[-1])
    all_ids = new_ids
    pred_len = all_ids[-1].shape[-1]
    combined_mask = jnp.concatenate(masks + [jnp.ones((b, pred_len + 1), bool)], axis=-1)

    # ---- TokenConditionedTransformer.forward: embed + interleave start tokens ----
    # TODO(synk): this token prep (gathers/concats) still runs as wrapper HLOs; at
    # production sizes move it into the kernel via scalar-prefetch token ids.
    tok_list, split_at = [], []
    for (cs, nq), ids, table, start_tok in zip(
        seqs, all_ids, params["embeddings"], params["start_tokens"]
    ):
        if nq > 1:
            offsets = cs * jnp.arange(nq, dtype=ids.dtype)
            n_rep = -(-ids.shape[-1] // nq)            # ceil_div
            offsets = jnp.tile(offsets, n_rep)[: ids.shape[-1]][None, :]
            ids = ids + offsets
        emb = get_embeds(table, ids, pad_id=pad_id)     # (b, n, d)
        tok_list.append((start_tok, emb))
        n_tokens = emb.shape[1] + 1
        split_at.append(n_tokens if not split_at else split_at[-1] + n_tokens)

    pieces = []
    for start_tok, emb in tok_list:
        pieces.append(jnp.broadcast_to(start_tok[None, None, :], (b, 1, dim)))
        pieces.append(emb)
    x = jnp.concatenate(pieces, axis=1)                 # (b, N, d) f32
    N = x.shape[1]
    total = b * N

    # ---- fold batch onto sublanes; tiny per-position batch-id / key-validity vectors ----
    x_flat = x.reshape(total, dim)
    batch_ids = jnp.broadcast_to(jnp.arange(b, dtype=jnp.float32)[:, None], (b, N))
    batch_row = batch_ids.reshape(total, 1)
    key_col = jnp.where(combined_mask, batch_ids, -1.0).reshape(1, total)

    # ---- single fused Pallas call: transformer + final LN + all logit heads ----
    logits_full = fused_stage(params["transformer"], params["head_w"],
                              x_flat, batch_row, key_col)          # (total, Cpad)
    logits_full = logits_full.reshape(b, N, -1)

    # ---- split rows per sequence, pick this head's columns, select quantizer ----
    all_logits, col_off, prev = [], 0, 0
    for i, ((cs, nq), s) in enumerate(zip(seqs, split_at)):
        c = cs + 1
        part = logits_full[:, prev:s]
        pred = part if i == len(seqs) - 1 else part[:, :-1]
        lg = pred[:, :, col_off: col_off + nq * c]      # (b, n, nq*c)
        n = lg.shape[1]
        if nq > 1:
            lg = lg.reshape(b, n, nq, c)
            q_idx = (jnp.arange(n) % nq)[None, :, None, None]
            lg = jnp.take_along_axis(lg, q_idx, axis=2).reshape(b, n, c)
        else:
            lg = lg.reshape(b, n, c)
        all_logits.append(lg)
        col_off += nq * c
        prev = s
    return all_logits


# ----------------------------------------------------------------------------------
# Deterministic parameter initialization, stored directly in the fused kernel layout.
# ----------------------------------------------------------------------------------
def init_params(key, token_sequences, dim=32, depth=2, heads=4, dim_head=8, ff_mult=2):
    keys = iter(jax.random.split(key, 256))
    nk = lambda: next(keys)
    f32 = jnp.float32
    ff_inner = dim * ff_mult
    scale = dim_head ** -0.5

    params = {"token_sequences": token_sequences, "dim": dim,
              "start_tokens": [], "embeddings": []}

    # --- fused logit heads: (d, sum(nq*c)) transposed + 128-lane padded ---
    head_ws = []
    for cs, nq in token_sequences:
        c = cs + 1  # +eos
        params["start_tokens"].append(jax.random.normal(nk(), (dim,), f32))
        params["embeddings"].append(0.02 * jax.random.normal(nk(), (c * nq, dim), f32))
        w = 0.02 * jax.random.normal(nk(), (nq, c, dim), f32)   # einsum('q c d, ...')
        head_ws.append(jnp.transpose(w, (2, 0, 1)).reshape(dim, nq * c))
    head_w = jnp.concatenate(head_ws, axis=1)
    head_w = jnp.pad(head_w, ((0, 0), (0, (-head_w.shape[1]) % 128)))
    params["head_w"] = head_w                                    # (dim, Cpad)

    # --- transformer weights, pre-fused per head ---
    ln, wqk, wvo, w1, w2 = [], [], [], [], []
    for _ in range(depth):
        ln.append(jnp.stack([jnp.ones((dim,), f32), jnp.zeros((dim,), f32),
                             jnp.ones((dim,), f32), jnp.zeros((dim,), f32)]))
        wq = 0.02 * jax.random.normal(nk(), (dim, heads * dim_head), f32)
        wk = 0.02 * jax.random.normal(nk(), (dim, heads * dim_head), f32)
        wv = 0.02 * jax.random.normal(nk(), (dim, heads * dim_head), f32)
        wo = 0.02 * jax.random.normal(nk(), (heads * dim_head, dim), f32)
        wqh = jnp.transpose(wq.reshape(dim, heads, dim_head), (1, 0, 2))   # (h, D, dh)
        wkh = jnp.transpose(wk.reshape(dim, heads, dim_head), (1, 0, 2))   # (h, D, dh)
        wvh = jnp.transpose(wv.reshape(dim, heads, dim_head), (1, 0, 2))   # (h, D, dh)
        woh = wo.reshape(heads, dim_head, dim)                             # (h, dh, D)
        wqk.append(jnp.einsum('hik,hjk->hij', wqh * scale, wkh))           # (h, D, D)
        wvo.append(jnp.einsum('hik,hkj->hij', wvh, woh))                   # (h, D, D)
        w1f = 0.02 * jax.random.normal(nk(), (dim, ff_inner * 2), f32)
        w1.append(jnp.stack([w1f[:, :ff_inner], w1f[:, ff_inner:]]))       # (2, D, ff)
        w2.append(0.02 * jax.random.normal(nk(), (ff_inner, dim), f32))

    params["transformer"] = dict(
        depth=depth, heads=heads,
        ln=jnp.stack(ln),               # (depth, 4, D)
        wqk=jnp.stack(wqk),             # (depth, heads, D, D)
        wvo=jnp.stack(wvo),             # (depth, heads, D, D)
        w1=jnp.stack(w1),               # (depth, 2, D, ff)
        w2=jnp.stack(w2),               # (depth, ff, D)
        final_ln=jnp.stack([jnp.ones((dim,), f32), jnp.zeros((dim,), f32)]),  # (2, D)
    )
    return params


# ----------------------------------------------------------------------------------
if __name__ == "__main__":
    key = jax.random.PRNGKey(0)
    k_param, k_clap, k_sem = jax.random.split(key, 3)

    # token_sequences = [clap (codebook 16, 2 quantizers), semantic (codebook 24, 1 quantizer)]
    token_sequences = [(16, 2), (24, 1)]
    params = init_params(k_param, token_sequences, dim=32, depth=2, heads=4, dim_head=8)

    batch = 2
    clap_token_ids = jax.random.randint(k_clap, (batch, 4), 0, 16, dtype=jnp.int32)      # (b, n*q)
    semantic_token_ids = jax.random.randint(k_sem, (batch, 8), 0, 24, dtype=jnp.int32)   # (b, n)

    fwd = jax.jit(lambda clap, sem: semantic_stage_forward(params, clap, sem))
    all_logits = fwd(clap_token_ids, semantic_token_ids)
    for lg in all_logits:
        jax.block_until_ready(lg)

    # shapes: clap logits (2, 5, 17), semantic logits (2, 10, 25)
    assert all_logits[0].shape == (batch, 5, 17)
    assert all_logits[1].shape == (batch, 10, 25)
    print("KERNEL_OK")
</pallas_src>

<mosaic_0001>
module attributes {stable_mosaic.version = 11 : i64} {
  func.func @_stage_kernel(%arg0: memref<32x32xf32, #tpu.memory_space<vmem>>, %arg1: memref<32x1xf32, #tpu.memory_space<vmem>>, %arg2: memref<1x32xf32, #tpu.memory_space<vmem>>, %arg3: memref<2x4x32xf32, #tpu.memory_space<vmem>>, %arg4: memref<2x4x32x32xf32, #tpu.memory_space<vmem>>, %arg5: memref<2x4x32x32xf32, #tpu.memory_space<vmem>>, %arg6: memref<2x2x32x64xf32, #tpu.memory_space<vmem>>, %arg7: memref<2x64x32xf32, #tpu.memory_space<vmem>>, %arg8: memref<2x32xf32, #tpu.memory_space<vmem>>, %arg9: memref<32x128xf32, #tpu.memory_space<vmem>>, %arg10: memref<32x128xf32, #tpu.memory_space<vmem>>) attributes {dimension_semantics = [], scalar_prefetch = 0 : i64, scratch_operands = 0 : i64, tpu.core_type = #tpu.core_type<tc>} {
    %c0 = arith.constant 0 : index
    %c0_0 = arith.constant 0 : index
    %0 = vector.load %arg0[%c0, %c0_0] : memref<32x32xf32, #tpu.memory_space<vmem>>, vector<32x32xf32>
    %1 = tpu.iota {dimensions = array<i32: 0>} : vector<32x32xi32>
    %2 = tpu.iota {dimensions = array<i32: 1>} : vector<32x32xi32>
    %c0_1 = arith.constant 0 : index
    %c0_2 = arith.constant 0 : index
    %3 = vector.load %arg1[%c0_1, %c0_2] : memref<32x1xf32, #tpu.memory_space<vmem>>, vector<32x1xf32>
    %c0_3 = arith.constant 0 : index
    %c0_4 = arith.constant 0 : index
    %4 = vector.load %arg2[%c0_3, %c0_4] : memref<1x32xf32, #tpu.memory_space<vmem>>, vector<1x32xf32>
    %5 = vector.broadcast %3 : vector<32x1xf32> to vector<32x32xf32>
    %6 = vector.broadcast %4 : vector<1x32xf32> to vector<32x32xf32>
    %7 = arith.cmpf oeq, %5, %6 : vector<32x32xf32>
    %8 = arith.cmpi sle, %2, %1 : vector<32x32xi32>
    %9 = arith.andi %7, %8 : vector<32x32xi1>
    %cst = arith.constant 0.000000e+00 : f32
    %cst_5 = arith.constant -1.000000e+30 : f32
    %10 = vector.broadcast %cst : f32 to vector<32x32xf32>
    %11 = vector.broadcast %cst_5 : f32 to vector<32x32xf32>
    %12 = arith.select %9, %10, %11 : vector<32x32xi1>, vector<32x32xf32>
    %c0_6 = arith.constant 0 : index
    %c0_7 = arith.constant 0 : index
    %c0_8 = arith.constant 0 : index
    %13 = vector.load %arg3[%c0_6, %c0_7, %c0_8] : memref<2x4x32xf32, #tpu.memory_space<vmem>>, vector<1x4x32xf32>
    %14 = vector.shape_cast %13 : vector<1x4x32xf32> to vector<4x32xf32>
    %c0_9 = arith.constant 0 : index
    %c0_10 = arith.constant 0 : index
    %c0_11 = arith.constant 0 : index
    %c0_12 = arith.constant 0 : index
    %15 = vector.load %arg4[%c0_9, %c0_10, %c0_11, %c0_12] : memref<2x4x32x32xf32, #tpu.memory_space<vmem>>, vector<1x4x32x32xf32>
    %16 = vector.shape_cast %15 : vector<1x4x32x32xf32> to vector<4x32x32xf32>
    %c0_13 = arith.constant 0 : index
    %c0_14 = arith.constant 0 : index
    %c0_15 = arith.constant 0 : index
    %c0_16 = arith.constant 0 : index
    %17 = vector.load %arg5[%c0_13, %c0_14, %c0_15, %c0_16] : memref<2x4x32x32xf32, #tpu.memory_space<vmem>>, vector<1x4x32x32xf32>
    %18 = vector.shape_cast %17 : vector<1x4x32x32xf32> to vector<4x32x32xf32>
    %c0_17 = arith.constant 0 : index
    %c0_18 = arith.constant 0 : index
    %c0_19 = arith.constant 0 : index
    %c0_20 = arith.constant 0 : index
    %19 = vector.load %arg6[%c0_17, %c0_18, %c0_19, %c0_20] : memref<2x2x32x64xf32, #tpu.memory_space<vmem>>, vector<1x2x32x64xf32>
    %20 = vector.shape_cast %19 : vector<1x2x32x64xf32> to vector<2x32x64xf32>
    %c0_21 = arith.constant 0 : index
    %c0_22 = arith.constant 0 : index
    %c0_23 = arith.constant 0 : index
    %21 = vector.load %arg7[%c0_21, %c0_22, %c0_23] : memref<2x64x32xf32, #tpu.memory_space<vmem>>, vector<1x64x32xf32>
    %22 = vector.shape_cast %21 : vector<1x64x32xf32> to vector<64x32xf32>
    %23 = vector.extract_strided_slice %14 {offsets = [0, 0], sizes = [1, 32], strides = [1, 1]} : vector<4x32xf32> to vector<1x32xf32>
    %24 = vector.extract_strided_slice %14 {offsets = [1, 0], sizes = [1, 32], strides = [1, 1]} : vector<4x32xf32> to vector<1x32xf32>
    %cst_24 = arith.constant dense<0.000000e+00> : vector<32xf32>
    %25 = vector.multi_reduction <add>, %0, %cst_24 [1] : vector<32x32xf32> to vector<32xf32>
    %26 = vector.shape_cast %25 : vector<32xf32> to vector<32x1xf32>
    %cst_25 = arith.constant 3.200000e+01 : f32
    %27 = vector.broadcast %cst_25 : f32 to vector<32x1xf32>
    %28 = arith.divf %26, %27 : vector<32x1xf32>
    %29 = vector.broadcast %28 : vector<32x1xf32> to vector<32x32xf32>
    %30 = arith.subf %0, %29 : vector<32x32xf32>
    %31 = arith.mulf %30, %30 : vector<32x32xf32>
    %cst_26 = arith.constant dense<0.000000e+00> : vector<32xf32>
    %32 = vector.multi_reduction <add>, %31, %cst_26 [1] : vector<32x32xf32> to vector<32xf32>
    %33 = vector.shape_cast %32 : vector<32xf32> to vector<32x1xf32>
    %cst_27 = arith.constant 3.200000e+01 : f32
    %34 = vector.broadcast %cst_27 : f32 to vector<32x1xf32>
    %35 = arith.divf %33, %34 : vector<32x1xf32>
    %36 = vector.broadcast %28 : vector<32x1xf32> to vector<32x32xf32>
    %37 = arith.subf %0, %36 : vector<32x32xf32>
    %cst_28 = arith.constant 9.99999974E-6 : f32
    %38 = vector.broadcast %cst_28 : f32 to vector<32x1xf32>
    %39 = arith.addf %35, %38 : vector<32x1xf32>
    %40 = math.rsqrt %39 : vector<32x1xf32>
    %41 = vector.broadcast %40 : vector<32x1xf32> to vector<32x32xf32>
    %42 = arith.mulf %37, %41 : vector<32x32xf32>
    %43 = vector.broadcast %23 : vector<1x32xf32> to vector<32x32xf32>
    %44 = arith.mulf %42, %43 : vector<32x32xf32>
    %45 = vector.broadcast %24 : vector<1x32xf32> to vector<32x32xf32>
    %46 = arith.addf %44, %45 : vector<32x32xf32>
    %cst_29 = arith.constant 0.000000e+00 : f32
    %47 = vector.broadcast %cst_29 : f32 to vector<32x32xf32>
    %48 = vector.extract_strided_slice %16 {offsets = [0, 0, 0], sizes = [1, 32, 32], strides = [1, 1, 1]} : vector<4x32x32xf32> to vector<1x32x32xf32>
    %49 = vector.shape_cast %48 : vector<1x32x32xf32> to vector<32x32xf32>
    %cst_30 = arith.constant dense<0.000000e+00> : vector<32x32xf32>
    %50 = tpu.matmul %46, %49, %cst_30 {dimension_numbers = #tpu.dot_dimension_numbers<[1], [0], [0], [1], [0, 0, 1, 1], [], []>} : vector<32x32xf32>, vector<32x32xf32>, vector<32x32xf32> -> vector<32x32xf32>
    %cst_31 = arith.constant dense<0.000000e+00> : vector<32x32xf32>
    %51 = tpu.matmul %50, %46, %cst_31 {dimension_numbers = #tpu.dot_dimension_numbers<[1], [1], [0], [0], [0, 0, 1, 0], [], []>} : vector<32x32xf32>, vector<32x32xf32>, vector<32x32xf32> -> vector<32x32xf32>
    %52 = arith.addf %51, %12 : vector<32x32xf32>
    %cst_32 = arith.constant dense<0xFF800000> : vector<32xf32>
    %53 = vector.multi_reduction <maximumf>, %52, %cst_32 [1] : vector<32x32xf32> to vector<32xf32>
    %54 = vector.shape_cast %53 : vector<32xf32> to vector<32x1xf32>
    %55 = vector.broadcast %54 : vector<32x1xf32> to vector<32x32xf32>
    %56 = arith.subf %52, %55 : vector<32x32xf32>
    %57 = math.exp %56 : vector<32x32xf32>
    %cst_33 = arith.constant dense<0.000000e+00> : vector<32xf32>
    %58 = vector.multi_reduction <add>, %57, %cst_33 [1] : vector<32x32xf32> to vector<32xf32>
    %59 = vector.shape_cast %58 : vector<32xf32> to vector<32x1xf32>
    %60 = vector.broadcast %59 : vector<32x1xf32> to vector<32x32xf32>
    %61 = arith.divf %57, %60 : vector<32x32xf32>
    %62 = vector.extract_strided_slice %18 {offsets = [0, 0, 0], sizes = [1, 32, 32], strides = [1, 1, 1]} : vector<4x32x32xf32> to vector<1x32x32xf32>
    %63 = vector.shape_cast %62 : vector<1x32x32xf32> to vector<32x32xf32>
    %cst_34 = arith.constant dense<0.000000e+00> : vector<32x32xf32>
    %64 = tpu.matmul %46, %63, %cst_34 {dimension_numbers = #tpu.dot_dimension_numbers<[1], [0], [0], [1], [0, 0, 1, 1], [], []>} : vector<32x32xf32>, vector<32x32xf32>, vector<32x32xf32> -> vector<32x32xf32>
    %cst_35 = arith.constant dense<0.000000e+00> : vector<32x32xf32>
    %65 = tpu.matmul %61, %64, %cst_35 {dimension_numbers = #tpu.dot_dimension_numbers<[1], [0], [0], [1], [0, 0, 1, 1], [], []>} : vector<32x32xf32>, vector<32x32xf32>, vector<32x32xf32> -> vector<32x32xf32>
    %66 = arith.addf %47, %65 : vector<32x32xf32>
    %67 = vector.extract_strided_slice %16 {offsets = [1, 0, 0], sizes = [1, 32, 32], strides = [1, 1, 1]} : vector<4x32x32xf32> to vector<1x32x32xf32>
    %68 = vector.shape_cast %67 : vector<1x32x32xf32> to vector<32x32xf32>
    %cst_36 = arith.constant dense<0.000000e+00> : vector<32x32xf32>
    %69 = tpu.matmul %46, %68, %cst_36 {dimension_numbers = #tpu.dot_dimension_numbers<[1], [0], [0], [1], [0, 0, 1, 1], [], []>} : vector<32x32xf32>, vector<32x32xf32>, vector<32x32xf32> -> vector<32x32xf32>
    %cst_37 = arith.constant dense<0.000000e+00> : vector<32x32xf32>
    %70 = tpu.matmul %69, %46, %cst_37 {dimension_numbers = #tpu.dot_dimension_numbers<[1], [1], [0], [0], [0, 0, 1, 0], [], []>} : vector<32x32xf32>, vector<32x32xf32>, vector<32x32xf32> -> vector<32x32xf32>
    %71 = arith.addf %70, %12 : vector<32x32xf32>
    %cst_38 = arith.constant dense<0xFF800000> : vector<32xf32>
    %72 = vector.multi_reduction <maximumf>, %71, %cst_38 [1] : vector<32x32xf32> to vector<32xf32>
    %73 = vector.shape_cast %72 : vector<32xf32> to vector<32x1xf32>
    %74 = vector.broadcast %73 : vector<32x1xf32> to vector<32x32xf32>
    %75 = arith.subf %71, %74 : vector<32x32xf32>
    %76 = math.exp %75 : vector<32x32xf32>
    %cst_39 = arith.constant dense<0.000000e+00> : vector<32xf32>
    %77 = vector.multi_reduction <add>, %76, %cst_39 [1] : vector<32x32xf32> to vector<32xf32>
    %78 = vector.shape_cast %77 : vector<32xf32> to vector<32x1xf32>
    %79 = vector.broadcast %78 : vector<32x1xf32> to vector<32x32xf32>
    %80 = arith.divf %76, %79 : vector<32x32xf32>
    %81 = vector.extract_strided_slice %18 {offsets = [1, 0, 0], sizes = [1, 32, 32], strides = [1, 1, 1]} : vector<4x32x32xf32> to vector<1x32x32xf32>
    %82 = vector.shape_cast %81 : vector<1x32x32xf32> to vector<32x32xf32>
    %cst_40 = arith.constant dense<0.000000e+00> : vector<32x32xf32>
    %83 = tpu.matmul %46, %82, %cst_40 {dimension_numbers = #tpu.dot_dimension_numbers<[1], [0], [0], [1], [0, 0, 1, 1], [], []>} : vector<32x32xf32>, vector<32x32xf32>, vector<32x32xf32> -> vector<32x32xf32>
    %cst_41 = arith.constant dense<0.000000e+00> : vector<32x32xf32>
    %84 = tpu.matmul %80, %83, %cst_41 {dimension_numbers = #tpu.dot_dimension_numbers<[1], [0], [0], [1], [0, 0, 1, 1], [], []>} : vector<32x32xf32>, vector<32x32xf32>, vector<32x32xf32> -> vector<32x32xf32>
    %85 = arith.addf %66, %84 : vector<32x32xf32>
    %86 = vector.extract_strided_slice %16 {offsets = [2, 0, 0], sizes = [1, 32, 32], strides = [1, 1, 1]} : vector<4x32x32xf32> to vector<1x32x32xf32>
    %87 = vector.shape_cast %86 : vector<1x32x32xf32> to vector<32x32xf32>
    %cst_42 = arith.constant dense<0.000000e+00> : vector<32x32xf32>
    %88 = tpu.matmul %46, %87, %cst_42 {dimension_numbers = #tpu.dot_dimension_numbers<[1], [0], [0], [1], [0, 0, 1, 1], [], []>} : vector<32x32xf32>, vector<32x32xf32>, vector<32x32xf32> -> vector<32x32xf32>
    %cst_43 = arith.constant dense<0.000000e+00> : vector<32x32xf32>
    %89 = tpu.matmul %88, %46, %cst_43 {dimension_numbers = #tpu.dot_dimension_numbers<[1], [1], [0], [0], [0, 0, 1, 0], [], []>} : vector<32x32xf32>, vector<32x32xf32>, vector<32x32xf32> -> vector<32x32xf32>
    %90 = arith.addf %89, %12 : vector<32x32xf32>
    %cst_44 = arith.constant dense<0xFF800000> : vector<32xf32>
    %91 = vector.multi_reduction <maximumf>, %90, %cst_44 [1] : vector<32x32xf32> to vector<32xf32>
    %92 = vector.shape_cast %91 : vector<32xf32> to vector<32x1xf32>
    %93 = vector.broadcast %92 : vector<32x1xf32> to vector<32x32xf32>
    %94 = arith.subf %90, %93 : vector<32x32xf32>
    %95 = math.exp %94 : vector<32x32xf32>
    %cst_45 = arith.constant dense<0.000000e+00> : vector<32xf32>
    %96 = vector.multi_reduction <add>, %95, %cst_45 [1] : vector<32x32xf32> to vector<32xf32>
    %97 = vector.shape_cast %96 : vector<32xf32> to vector<32x1xf32>
    %98 = vector.broadcast %97 : vector<32x1xf32> to vector<32x32xf32>
    %99 = arith.divf %95, %98 : vector<32x32xf32>
    %100 = vector.extract_strided_slice %18 {offsets = [2, 0, 0], sizes = [1, 32, 32], strides = [1, 1, 1]} : vector<4x32x32xf32> to vector<1x32x32xf32>
    %101 = vector.shape_cast %100 : vector<1x32x32xf32> to vector<32x32xf32>
    %cst_46 = arith.constant dense<0.000000e+00> : vector<32x32xf32>
    %102 = tpu.matmul %46, %101, %cst_46 {dimension_numbers = #tpu.dot_dimension_numbers<[1], [0], [0], [1], [0, 0, 1, 1], [], []>} : vector<32x32xf32>, vector<32x32xf32>, vector<32x32xf32> -> vector<32x32xf32>
    %cst_47 = arith.constant dense<0.000000e+00> : vector<32x32xf32>
    %103 = tpu.matmul %99, %102, %cst_47 {dimension_numbers = #tpu.dot_dimension_numbers<[1], [0], [0], [1], [0, 0, 1, 1], [], []>} : vector<32x32xf32>, vector<32x32xf32>, vector<32x32xf32> -> vector<32x32xf32>
    %104 = arith.addf %85, %103 : vector<32x32xf32>
    %105 = vector.extract_strided_slice %16 {offsets = [3, 0, 0], sizes = [1, 32, 32], strides = [1, 1, 1]} : vector<4x32x32xf32> to vector<1x32x32xf32>
    %106 = vector.shape_cast %105 : vector<1x32x32xf32> to vector<32x32xf32>
    %cst_48 = arith.constant dense<0.000000e+00> : vector<32x32xf32>
    %107 = tpu.matmul %46, %106, %cst_48 {dimension_numbers = #tpu.dot_dimension_numbers<[1], [0], [0], [1], [0, 0, 1, 1], [], []>} : vector<32x32xf32>, vector<32x32xf32>, vector<32x32xf32> -> vector<32x32xf32>
    %cst_49 = arith.constant dense<0.000000e+00> : vector<32x32xf32>
    %108 = tpu.matmul %107, %46, %cst_49 {dimension_numbers = #tpu.dot_dimension_numbers<[1], [1], [0], [0], [0, 0, 1, 0], [], []>} : vector<32x32xf32>, vector<32x32xf32>, vector<32x32xf32> -> vector<32x32xf32>
    %109 = arith.addf %108, %12 : vector<32x32xf32>
    %cst_50 = arith.constant dense<0xFF800000> : vector<32xf32>
    %110 = vector.multi_reduction <maximumf>, %109, %cst_50 [1] : vector<32x32xf32> to vector<32xf32>
    %111 = vector.shape_cast %110 : vector<32xf32> to vector<32x1xf32>
    %112 = vector.broadcast %111 : vector<32x1xf32> to vector<32x32xf32>
    %113 = arith.subf %109, %112 : vector<32x32xf32>
    %114 = math.exp %113 : vector<32x32xf32>
    %cst_51 = arith.constant dense<0.000000e+00> : vector<32xf32>
    %115 = vector.multi_reduction <add>, %114, %cst_51 [1] : vector<32x32xf32> to vector<32xf32>
    %116 = vector.shape_cast %115 : vector<32xf32> to vector<32x1xf32>
    %117 = vector.broadcast %116 : vector<32x1xf32> to vector<32x32xf32>
    %118 = arith.divf %114, %117 : vector<32x32xf32>
    %119 = vector.extract_strided_slice %18 {offsets = [3, 0, 0], sizes = [1, 32, 32], strides = [1, 1, 1]} : vector<4x32x32xf32> to vector<1x32x32xf32>
    %120 = vector.shape_cast %119 : vector<1x32x32xf32> to vector<32x32xf32>
    %cst_52 = arith.constant dense<0.000000e+00> : vector<32x32xf32>
    %121 = tpu.matmul %46, %120, %cst_52 {dimension_numbers = #tpu.dot_dimension_numbers<[1], [0], [0], [1], [0, 0, 1, 1], [], []>} : vector<32x32xf32>, vector<32x32xf32>, vector<32x32xf32> -> vector<32x32xf32>
    %cst_53 = arith.constant dense<0.000000e+00> : vector<32x32xf32>
    %122 = tpu.matmul %118, %121, %cst_53 {dimension_numbers = #tpu.dot_dimension_numbers<[1], [0], [0], [1], [0, 0, 1, 1], [], []>} : vector<32x32xf32>, vector<32x32xf32>, vector<32x32xf32> -> vector<32x32xf32>
    %123 = arith.addf %104, %122 : vector<32x32xf32>
    %124 = arith.addf %0, %123 : vector<32x32xf32>
    %125 = vector.extract_strided_slice %14 {offsets = [2, 0], sizes = [1, 32], strides = [1, 1]} : vector<4x32xf32> to vector<1x32xf32>
    %126 = vector.extract_strided_slice %14 {offsets = [3, 0], sizes = [1, 32], strides = [1, 1]} : vector<4x32xf32> to vector<1x32xf32>
    %cst_54 = arith.constant dense<0.000000e+00> : vector<32xf32>
    %127 = vector.multi_reduction <add>, %124, %cst_54 [1] : vector<32x32xf32> to vector<32xf32>
    %128 = vector.shape_cast %127 : vector<32xf32> to vector<32x1xf32>
    %cst_55 = arith.constant 3.200000e+01 : f32
    %129 = vector.broadcast %cst_55 : f32 to vector<32x1xf32>
    %130 = arith.divf %128, %129 : vector<32x1xf32>
    %131 = vector.broadcast %130 : vector<32x1xf32> to vector<32x32xf32>
    %132 = arith.subf %124, %131 : vector<32x32xf32>
    %133 = arith.mulf %132, %132 : vector<32x32xf32>
    %cst_56 = arith.constant dense<0.000000e+00> : vector<32xf32>
    %134 = vector.multi_reduction <add>, %133, %cst_56 [1] : vector<32x32xf32> to vector<32xf32>
    %135 = vector.shape_cast %134 : vector<32xf32> to vector<32x1xf32>
    %cst_57 = arith.constant 3.200000e+01 : f32
    %136 = vector.broadcast %cst_57 : f32 to vector<32x1xf32>
    %137 = arith.divf %135, %136 : vector<32x1xf32>
    %138 = vector.broadcast %130 : vector<32x1xf32> to vector<32x32xf32>
    %139 = arith.subf %124, %138 : vector<32x32xf32>
    %cst_58 = arith.constant 9.99999974E-6 : f32
    %140 = vector.broadcast %cst_58 : f32 to vector<32x1xf32>
    %141 = arith.addf %137, %140 : vector<32x1xf32>
    %142 = math.rsqrt %141 : vector<32x1xf32>
    %143 = vector.broadcast %142 : vector<32x1xf32> to vector<32x32xf32>
    %144 = arith.mulf %139, %143 : vector<32x32xf32>
    %145 = vector.broadcast %125 : vector<1x32xf32> to vector<32x32xf32>
    %146 = arith.mulf %144, %145 : vector<32x32xf32>
    %147 = vector.broadcast %126 : vector<1x32xf32> to vector<32x32xf32>
    %148 = arith.addf %146, %147 : vector<32x32xf32>
    %149 = vector.extract_strided_slice %20 {offsets = [0, 0, 0], sizes = [1, 32, 64], strides = [1, 1, 1]} : vector<2x32x64xf32> to vector<1x32x64xf32>
    %150 = vector.shape_cast %149 : vector<1x32x64xf32> to vector<32x64xf32>
    %cst_59 = arith.constant dense<0.000000e+00> : vector<32x64xf32>
    %151 = tpu.matmul %148, %150, %cst_59 {dimension_numbers = #tpu.dot_dimension_numbers<[1], [0], [0], [1], [0, 0, 1, 1], [], []>} : vector<32x32xf32>, vector<32x64xf32>, vector<32x64xf32> -> vector<32x64xf32>
    %152 = vector.extract_strided_slice %20 {offsets = [1, 0, 0], sizes = [1, 32, 64], strides = [1, 1, 1]} : vector<2x32x64xf32> to vector<1x32x64xf32>
    %153 = vector.shape_cast %152 : vector<1x32x64xf32> to vector<32x64xf32>
    %cst_60 = arith.constant dense<0.000000e+00> : vector<32x64xf32>
    %154 = tpu.matmul %148, %153, %cst_60 {dimension_numbers = #tpu.dot_dimension_numbers<[1], [0], [0], [1], [0, 0, 1, 1], [], []>} : vector<32x32xf32>, vector<32x64xf32>, vector<32x64xf32> -> vector<32x64xf32>
    %155 = arith.mulf %154, %154 : vector<32x64xf32>
    %156 = arith.mulf %154, %155 : vector<32x64xf32>
    %cst_61 = arith.constant 4.471500e-02 : f32
    %157 = vector.broadcast %cst_61 : f32 to vector<32x64xf32>
    %158 = arith.mulf %157, %156 : vector<32x64xf32>
    %159 = arith.addf %154, %158 : vector<32x64xf32>
    %cst_62 = arith.constant 0.797884583 : f32
    %160 = vector.broadcast %cst_62 : f32 to vector<32x64xf32>
    %161 = arith.mulf %160, %159 : vector<32x64xf32>
    %162 = math.tanh %161 : vector<32x64xf32>
    %cst_63 = arith.constant 1.000000e+00 : f32
    %163 = vector.broadcast %cst_63 : f32 to vector<32x64xf32>
    %164 = arith.addf %163, %162 : vector<32x64xf32>
    %cst_64 = arith.constant 5.000000e-01 : f32
    %165 = vector.broadcast %cst_64 : f32 to vector<32x64xf32>
    %166 = arith.mulf %165, %164 : vector<32x64xf32>
    %167 = arith.mulf %154, %166 : vector<32x64xf32>
    %168 = arith.mulf %151, %167 : vector<32x64xf32>
    %cst_65 = arith.constant dense<0.000000e+00> : vector<32x32xf32>
    %169 = tpu.matmul %168, %22, %cst_65 {dimension_numbers = #tpu.dot_dimension_numbers<[1], [0], [0], [1], [0, 0, 1, 1], [], []>} : vector<32x64xf32>, vector<64x32xf32>, vector<32x32xf32> -> vector<32x32xf32>
    %170 = arith.addf %124, %169 : vector<32x32xf32>
    %c1 = arith.constant 1 : index
    %c0_66 = arith.constant 0 : index
    %c0_67 = arith.constant 0 : index
    %171 = vector.load %arg3[%c1, %c0_66, %c0_67] : memref<2x4x32xf32, #tpu.memory_space<vmem>>, vector<1x4x32xf32>
    %172 = vector.shape_cast %171 : vector<1x4x32xf32> to vector<4x32xf32>
    %c1_68 = arith.constant 1 : index
    %c0_69 = arith.constant 0 : index
    %c0_70 = arith.constant 0 : index
    %c0_71 = arith.constant 0 : index
    %173 = vector.load %arg4[%c1_68, %c0_69, %c0_70, %c0_71] : memref<2x4x32x32xf32, #tpu.memory_space<vmem>>, vector<1x4x32x32xf32>
    %174 = vector.shape_cast %173 : vector<1x4x32x32xf32> to vector<4x32x32xf32>
    %c1_72 = arith.constant 1 : index
    %c0_73 = arith.constant 0 : index
    %c0_74 = arith.constant 0 : index
    %c0_75 = arith.constant 0 : index
    %175 = vector.load %arg5[%c1_72, %c0_73, %c0_74, %c0_75] : memref<2x4x32x32xf32, #tpu.memory_space<vmem>>, vector<1x4x32x32xf32>
    %176 = vector.shape_cast %175 : vector<1x4x32x32xf32> to vector<4x32x32xf32>
    %c1_76 = arith.constant 1 : index
    %c0_77 = arith.constant 0 : index
    %c0_78 = arith.constant 0 : index
    %c0_79 = arith.constant 0 : index
    %177 = vector.load %arg6[%c1_76, %c0_77, %c0_78, %c0_79] : memref<2x2x32x64xf32, #tpu.memory_space<vmem>>, vector<1x2x32x64xf32>
    %178 = vector.shape_cast %177 : vector<1x2x32x64xf32> to vector<2x32x64xf32>
    %c1_80 = arith.constant 1 : index
    %c0_81 = arith.constant 0 : index
    %c0_82 = arith.constant 0 : index
    %179 = vector.load %arg7[%c1_80, %c0_81, %c0_82] : memref<2x64x32xf32, #tpu.memory_space<vmem>>, vector<1x64x32xf32>
    %180 = vector.shape_cast %179 : vector<1x64x32xf32> to vector<64x32xf32>
    %181 = vector.extract_strided_slice %172 {offsets = [0, 0], sizes = [1, 32], strides = [1, 1]} : vector<4x32xf32> to vector<1x32xf32>
    %182 = vector.extract_strided_slice %172 {offsets = [1, 0], sizes = [1, 32], strides = [1, 1]} : vector<4x32xf32> to vector<1x32xf32>
    %cst_83 = arith.constant dense<0.000000e+00> : vector<32xf32>
    %183 = vector.multi_reduction <add>, %170, %cst_83 [1] : vector<32x32xf32> to vector<32xf32>
    %184 = vector.shape_cast %183 : vector<32xf32> to vector<32x1xf32>
    %cst_84 = arith.constant 3.200000e+01 : f32
    %185 = vector.broadcast %cst_84 : f32 to vector<32x1xf32>
    %186 = arith.divf %184, %185 : vector<32x1xf32>
    %187 = vector.broadcast %186 : vector<32x1xf32> to vector<32x32xf32>
    %188 = arith.subf %170, %187 : vector<32x32xf32>
    %189 = arith.mulf %188, %188 : vector<32x32xf32>
    %cst_85 = arith.constant dense<0.000000e+00> : vector<32xf32>
    %190 = vector.multi_reduction <add>, %189, %cst_85 [1] : vector<32x32xf32> to vector<32xf32>
    %191 = vector.shape_cast %190 : vector<32xf32> to vector<32x1xf32>
    %cst_86 = arith.constant 3.200000e+01 : f32
    %192 = vector.broadcast %cst_86 : f32 to vector<32x1xf32>
    %193 = arith.divf %191, %192 : vector<32x1xf32>
    %194 = vector.broadcast %186 : vector<32x1xf32> to vector<32x32xf32>
    %195 = arith.subf %170, %194 : vector<32x32xf32>
    %cst_87 = arith.constant 9.99999974E-6 : f32
    %196 = vector.broadcast %cst_87 : f32 to vector<32x1xf32>
    %197 = arith.addf %193, %196 : vector<32x1xf32>
    %198 = math.rsqrt %197 : vector<32x1xf32>
    %199 = vector.broadcast %198 : vector<32x1xf32> to vector<32x32xf32>
    %200 = arith.mulf %195, %199 : vector<32x32xf32>
    %201 = vector.broadcast %181 : vector<1x32xf32> to vector<32x32xf32>
    %202 = arith.mulf %200, %201 : vector<32x32xf32>
    %203 = vector.broadcast %182 : vector<1x32xf32> to vector<32x32xf32>
    %204 = arith.addf %202, %203 : vector<32x32xf32>
    %cst_88 = arith.constant 0.000000e+00 : f32
    %205 = vector.broadcast %cst_88 : f32 to vector<32x32xf32>
    %206 = vector.extract_strided_slice %174 {offsets = [0, 0, 0], sizes = [1, 32, 32], strides = [1, 1, 1]} : vector<4x32x32xf32> to vector<1x32x32xf32>
    %207 = vector.shape_cast %206 : vector<1x32x32xf32> to vector<32x32xf32>
    %cst_89 = arith.constant dense<0.000000e+00> : vector<32x32xf32>
    %208 = tpu.matmul %204, %207, %cst_89 {dimension_numbers = #tpu.dot_dimension_numbers<[1], [0], [0], [1], [0, 0, 1, 1], [], []>} : vector<32x32xf32>, vector<32x32xf32>, vector<32x32xf32> -> vector<32x32xf32>
    %cst_90 = arith.constant dense<0.000000e+00> : vector<32x32xf32>
    %209 = tpu.matmul %208, %204, %cst_90 {dimension_numbers = #tpu.dot_dimension_numbers<[1], [1], [0], [0], [0, 0, 1, 0], [], []>} : vector<32x32xf32>, vector<32x32xf32>, vector<32x32xf32> -> vector<32x32xf32>
    %210 = arith.addf %209, %12 : vector<32x32xf32>
    %cst_91 = arith.constant dense<0xFF800000> : vector<32xf32>
    %211 = vector.multi_reduction <maximumf>, %210, %cst_91 [1] : vector<32x32xf32> to vector<32xf32>
    %212 = vector.shape_cast %211 : vector<32xf32> to vector<32x1xf32>
    %213 = vector.broadcast %212 : vector<32x1xf32> to vector<32x32xf32>
    %214 = arith.subf %210, %213 : vector<32x32xf32>
    %215 = math.exp %214 : vector<32x32xf32>
    %cst_92 = arith.constant dense<0.000000e+00> : vector<32xf32>
    %216 = vector.multi_reduction <add>, %215, %cst_92 [1] : vector<32x32xf32> to vector<32xf32>
    %217 = vector.shape_cast %216 : vector<32xf32> to vector<32x1xf32>
    %218 = vector.broadcast %217 : vector<32x1xf32> to vector<32x32xf32>
    %219 = arith.divf %215, %218 : vector<32x32xf32>
    %220 = vector.extract_strided_slice %176 {offsets = [0, 0, 0], sizes = [1, 32, 32], strides = [1, 1, 1]} : vector<4x32x32xf32> to vector<1x32x32xf32>
    %221 = vector.shape_cast %220 : vector<1x32x32xf32> to vector<32x32xf32>
    %cst_93 = arith.constant dense<0.000000e+00> : vector<32x32xf32>
    %222 = tpu.matmul %204, %221, %cst_93 {dimension_numbers = #tpu.dot_dimension_numbers<[1], [0], [0], [1], [0, 0, 1, 1], [], []>} : vector<32x32xf32>, vector<32x32xf32>, vector<32x32xf32> -> vector<32x32xf32>
    %cst_94 = arith.constant dense<0.000000e+00> : vector<32x32xf32>
    %223 = tpu.matmul %219, %222, %cst_94 {dimension_numbers = #tpu.dot_dimension_numbers<[1], [0], [0], [1], [0, 0, 1, 1], [], []>} : vector<32x32xf32>, vector<32x32xf32>, vector<32x32xf32> -> vector<32x32xf32>
    %224 = arith.addf %205, %223 : vector<32x32xf32>
    %225 = vector.extract_strided_slice %174 {offsets = [1, 0, 0], sizes = [1, 32, 32], strides = [1, 1, 1]} : vector<4x32x32xf32> to vector<1x32x32xf32>
    %226 = vector.shape_cast %225 : vector<1x32x32xf32> to vector<32x32xf32>
    %cst_95 = arith.constant dense<0.000000e+00> : vector<32x32xf32>
    %227 = tpu.matmul %204, %226, %cst_95 {dimension_numbers = #tpu.dot_dimension_numbers<[1], [0], [0], [1], [0, 0, 1, 1], [], []>} : vector<32x32xf32>, vector<32x32xf32>, vector<32x32xf32> -> vector<32x32xf32>
    %cst_96 = arith.constant dense<0.000000e+00> : vector<32x32xf32>
    %228 = tpu.matmul %227, %204, %cst_96 {dimension_numbers = #tpu.dot_dimension_numbers<[1], [1], [0], [0], [0, 0, 1, 0], [], []>} : vector<32x32xf32>, vector<32x32xf32>, vector<32x32xf32> -> vector<32x32xf32>
    %229 = arith.addf %228, %12 : vector<32x32xf32>
    %cst_97 = arith.constant dense<0xFF800000> : vector<32xf32>
    %230 = vector.multi_reduction <maximumf>, %229, %cst_97 [1] : vector<32x32xf32> to vector<32xf32>
    %231 = vector.shape_cast %230 : vector<32xf32> to vector<32x1xf32>
    %232 = vector.broadcast %231 : vector<32x1xf32> to vector<32x32xf32>
    %233 = arith.subf %229, %232 : vector<32x32xf32>
    %234 = math.exp %233 : vector<32x32xf32>
    %cst_98 = arith.constant dense<0.000000e+00> : vector<32xf32>
    %235 = vector.multi_reduction <add>, %234, %cst_98 [1] : vector<32x32xf32> to vector<32xf32>
    %236 = vector.shape_cast %235 : vector<32xf32> to vector<32x1xf32>
    %237 = vector.broadcast %236 : vector<32x1xf32> to vector<32x32xf32>
    %238 = arith.divf %234, %237 : vector<32x32xf32>
    %239 = vector.extract_strided_slice %176 {offsets = [1, 0, 0], sizes = [1, 32, 32], strides = [1, 1, 1]} : vector<4x32x32xf32> to vector<1x32x32xf32>
    %240 = vector.shape_cast %239 : vector<1x32x32xf32> to vector<32x32xf32>
    %cst_99 = arith.constant dense<0.000000e+00> : vector<32x32xf32>
    %241 = tpu.matmul %204, %240, %cst_99 {dimension_numbers = #tpu.dot_dimension_numbers<[1], [0], [0], [1], [0, 0, 1, 1], [], []>} : vector<32x32xf32>, vector<32x32xf32>, vector<32x32xf32> -> vector<32x32xf32>
    %cst_100 = arith.constant dense<0.000000e+00> : vector<32x32xf32>
    %242 = tpu.matmul %238, %241, %cst_100 {dimension_numbers = #tpu.dot_dimension_numbers<[1], [0], [0], [1], [0, 0, 1, 1], [], []>} : vector<32x32xf32>, vector<32x32xf32>, vector<32x32xf32> -> vector<32x32xf32>
    %243 = arith.addf %224, %242 : vector<32x32xf32>
    %244 = vector.extract_strided_slice %174 {offsets = [2, 0, 0], sizes = [1, 32, 32], strides = [1, 1, 1]} : vector<4x32x32xf32> to vector<1x32x32xf32>
    %245 = vector.shape_cast %244 : vector<1x32x32xf32> to vector<32x32xf32>
    %cst_101 = arith.constant dense<0.000000e+00> : vector<32x32xf32>
    %246 = tpu.matmul %204, %245, %cst_101 {dimension_numbers = #tpu.dot_dimension_numbers<[1], [0], [0], [1], [0, 0, 1, 1], [], []>} : vector<32x32xf32>, vector<32x32xf32>, vector<32x32xf32> -> vector<32x32xf32>
    %cst_102 = arith.constant dense<0.000000e+00> : vector<32x32xf32>
    %247 = tpu.matmul %246, %204, %cst_102 {dimension_numbers = #tpu.dot_dimension_numbers<[1], [1], [0], [0], [0, 0, 1, 0], [], []>} : vector<32x32xf32>, vector<32x32xf32>, vector<32x32xf32> -> vector<32x32xf32>
    %248 = arith.addf %247, %12 : vector<32x32xf32>
    %cst_103 = arith.constant dense<0xFF800000> : vector<32xf32>
    %249 = vector.multi_reduction <maximumf>, %248, %cst_103 [1] : vector<32x32xf32> to vector<32xf32>
    %250 = vector.shape_cast %249 : vector<32xf32> to vector<32x1xf32>
    %251 = vector.broadcast %250 : vector<32x1xf32> to vector<32x32xf32>
    %252 = arith.subf %248, %251 : vector<32x32xf32>
    %253 = math.exp %252 : vector<32x32xf32>
    %cst_104 = arith.constant dense<0.000000e+00> : vector<32xf32>
    %254 = vector.multi_reduction <add>, %253, %cst_104 [1] : vector<32x32xf32> to vector<32xf32>
    %255 = vector.shape_cast %254 : vector<32xf32> to vector<32x1xf32>
    %256 = vector.broadcast %255 : vector<32x1xf32> to vector<32x32xf32>
    %257 = arith.divf %253, %256 : vector<32x32xf32>
    %258 = vector.extract_strided_slice %176 {offsets = [2, 0, 0], sizes = [1, 32, 32], strides = [1, 1, 1]} : vector<4x32x32xf32> to vector<1x32x32xf32>
    %259 = vector.shape_cast %258 : vector<1x32x32xf32> to vector<32x32xf32>
    %cst_105 = arith.constant dense<0.000000e+00> : vector<32x32xf32>
    %260 = tpu.matmul %204, %259, %cst_105 {dimension_numbers = #tpu.dot_dimension_numbers<[1], [0], [0], [1], [0, 0, 1, 1], [], []>} : vector<32x32xf32>, vector<32x32xf32>, vector<32x32xf32> -> vector<32x32xf32>
    %cst_106 = arith.constant dense<0.000000e+00> : vector<32x32xf32>
    %261 = tpu.matmul %257, %260, %cst_106 {dimension_numbers = #tpu.dot_dimension_numbers<[1], [0], [0], [1], [0, 0, 1, 1], [], []>} : vector<32x32xf32>, vector<32x32xf32>, vector<32x32xf32> -> vector<32x32xf32>
    %262 = arith.addf %243, %261 : vector<32x32xf32>
    %263 = vector.extract_strided_slice %174 {offsets = [3, 0, 0], sizes = [1, 32, 32], strides = [1, 1, 1]} : vector<4x32x32xf32> to vector<1x32x32xf32>
    %264 = vector.shape_cast %263 : vector<1x32x32xf32> to vector<32x32xf32>
    %cst_107 = arith.constant dense<0.000000e+00> : vector<32x32xf32>
    %265 = tpu.matmul %204, %264, %cst_107 {dimension_numbers = #tpu.dot_dimension_numbers<[1], [0], [0], [1], [0, 0, 1, 1], [], []>} : vector<32x32xf32>, vector<32x32xf32>, vector<32x32xf32> -> vector<32x32xf32>
    %cst_108 = arith.constant dense<0.000000e+00> : vector<32x32xf32>
    %266 = tpu.matmul %265, %204, %cst_108 {dimension_numbers = #tpu.dot_dimension_numbers<[1], [1], [0], [0], [0, 0, 1, 0], [], []>} : vector<32x32xf32>, vector<32x32xf32>, vector<32x32xf32> -> vector<32x32xf32>
    %267 = arith.addf %266, %12 : vector<32x32xf32>
    %cst_109 = arith.constant dense<0xFF800000> : vector<32xf32>
    %268 = vector.multi_reduction <maximumf>, %267, %cst_109 [1] : vector<32x32xf32> to vector<32xf32>
    %269 = vector.shape_cast %268 : vector<32xf32> to vector<32x1xf32>
    %270 = vector.broadcast %269 : vector<32x1xf32> to vector<32x32xf32>
    %271 = arith.subf %267, %270 : vector<32x32xf32>
    %272 = math.exp %271 : vector<32x32xf32>
    %cst_110 = arith.constant dense<0.000000e+00> : vector<32xf32>
    %273 = vector.multi_reduction <add>, %272, %cst_110 [1] : vector<32x32xf32> to vector<32xf32>
    %274 = vector.shape_cast %273 : vector<32xf32> to vector<32x1xf32>
    %275 = vector.broadcast %274 : vector<32x1xf32> to vector<32x32xf32>
    %276 = arith.divf %272, %275 : vector<32x32xf32>
    %277 = vector.extract_strided_slice %176 {offsets = [3, 0, 0], sizes = [1, 32, 32], strides = [1, 1, 1]} : vector<4x32x32xf32> to vector<1x32x32xf32>
    %278 = vector.shape_cast %277 : vector<1x32x32xf32> to vector<32x32xf32>
    %cst_111 = arith.constant dense<0.000000e+00> : vector<32x32xf32>
    %279 = tpu.matmul %204, %278, %cst_111 {dimension_numbers = #tpu.dot_dimension_numbers<[1], [0], [0], [1], [0, 0, 1, 1], [], []>} : vector<32x32xf32>, vector<32x32xf32>, vector<32x32xf32> -> vector<32x32xf32>
    %cst_112 = arith.constant dense<0.000000e+00> : vector<32x32xf32>
    %280 = tpu.matmul %276, %279, %cst_112 {dimension_numbers = #tpu.dot_dimension_numbers<[1], [0], [0], [1], [0, 0, 1, 1], [], []>} : vector<32x32xf32>, vector<32x32xf32>, vector<32x32xf32> -> vector<32x32xf32>
    %281 = arith.addf %262, %280 : vector<32x32xf32>
    %282 = arith.addf %170, %281 : vector<32x32xf32>
    %283 = vector.extract_strided_slice %172 {offsets = [2, 0], sizes = [1, 32], strides = [1, 1]} : vector<4x32xf32> to vector<1x32xf32>
    %284 = vector.extract_strided_slice %172 {offsets = [3, 0], sizes = [1, 32], strides = [1, 1]} : vector<4x32xf32> to vector<1x32xf32>
    %cst_113 = arith.constant dense<0.000000e+00> : vector<32xf32>
    %285 = vector.multi_reduction <add>, %282, %cst_113 [1] : vector<32x32xf32> to vector<32xf32>
    %286 = vector.shape_cast %285 : vector<32xf32> to vector<32x1xf32>
    %cst_114 = arith.constant 3.200000e+01 : f32
    %287 = vector.broadcast %cst_114 : f32 to vector<32x1xf32>
    %288 = arith.divf %286, %287 : vector<32x1xf32>
    %289 = vector.broadcast %288 : vector<32x1xf32> to vector<32x32xf32>
    %290 = arith.subf %282, %289 : vector<32x32xf32>
    %291 = arith.mulf %290, %290 : vector<32x32xf32>
    %cst_115 = arith.constant dense<0.000000e+00> : vector<32xf32>
    %292 = vector.multi_reduction <add>, %291, %cst_115 [1] : vector<32x32xf32> to vector<32xf32>
    %293 = vector.shape_cast %292 : vector<32xf32> to vector<32x1xf32>
    %cst_116 = arith.constant 3.200000e+01 : f32
    %294 = vector.broadcast %cst_116 : f32 to vector<32x1xf32>
    %295 = arith.divf %293, %294 : vector<32x1xf32>
    %296 = vector.broadcast %288 : vector<32x1xf32> to vector<32x32xf32>
    %297 = arith.subf %282, %296 : vector<32x32xf32>
    %cst_117 = arith.constant 9.99999974E-6 : f32
    %298 = vector.broadcast %cst_117 : f32 to vector<32x1xf32>
    %299 = arith.addf %295, %298 : vector<32x1xf32>
    %300 = math.rsqrt %299 : vector<32x1xf32>
    %301 = vector.broadcast %300 : vector<32x1xf32> to vector<32x32xf32>
    %302 = arith.mulf %297, %301 : vector<32x32xf32>
    %303 = vector.broadcast %283 : vector<1x32xf32> to vector<32x32xf32>
    %304 = arith.mulf %302, %303 : vector<32x32xf32>
    %305 = vector.broadcast %284 : vector<1x32xf32> to vector<32x32xf32>
    %306 = arith.addf %304, %305 : vector<32x32xf32>
    %307 = vector.extract_strided_slice %178 {offsets = [0, 0, 0], sizes = [1, 32, 64], strides = [1, 1, 1]} : vector<2x32x64xf32> to vector<1x32x64xf32>
    %308 = vector.shape_cast %307 : vector<1x32x64xf32> to vector<32x64xf32>
    %cst_118 = arith.constant dense<0.000000e+00> : vector<32x64xf32>
    %309 = tpu.matmul %306, %308, %cst_118 {dimension_numbers = #tpu.dot_dimension_numbers<[1], [0], [0], [1], [0, 0, 1, 1], [], []>} : vector<32x32xf32>, vector<32x64xf32>, vector<32x64xf32> -> vector<32x64xf32>
    %310 = vector.extract_strided_slice %178 {offsets = [1, 0, 0], sizes = [1, 32, 64], strides = [1, 1, 1]} : vector<2x32x64xf32> to vector<1x32x64xf32>
    %311 = vector.shape_cast %310 : vector<1x32x64xf32> to vector<32x64xf32>
    %cst_119 = arith.constant dense<0.000000e+00> : vector<32x64xf32>
    %312 = tpu.matmul %306, %311, %cst_119 {dimension_numbers = #tpu.dot_dimension_numbers<[1], [0], [0], [1], [0, 0, 1, 1], [], []>} : vector<32x32xf32>, vector<32x64xf32>, vector<32x64xf32> -> vector<32x64xf32>
    %313 = arith.mulf %312, %312 : vector<32x64xf32>
    %314 = arith.mulf %312, %313 : vector<32x64xf32>
    %cst_120 = arith.constant 4.471500e-02 : f32
    %315 = vector.broadcast %cst_120 : f32 to vector<32x64xf32>
    %316 = arith.mulf %315, %314 : vector<32x64xf32>
    %317 = arith.addf %312, %316 : vector<32x64xf32>
    %cst_121 = arith.constant 0.797884583 : f32
    %318 = vector.broadcast %cst_121 : f32 to vector<32x64xf32>
    %319 = arith.mulf %318, %317 : vector<32x64xf32>
    %320 = math.tanh %319 : vector<32x64xf32>
    %cst_122 = arith.constant 1.000000e+00 : f32
    %321 = vector.broadcast %cst_122 : f32 to vector<32x64xf32>
    %322 = arith.addf %321, %320 : vector<32x64xf32>
    %cst_123 = arith.constant 5.000000e-01 : f32
    %323 = vector.broadcast %cst_123 : f32 to vector<32x64xf32>
    %324 = arith.mulf %323, %322 : vector<32x64xf32>
    %325 = arith.mulf %312, %324 : vector<32x64xf32>
    %326 = arith.mulf %309, %325 : vector<32x64xf32>
    %cst_124 = arith.constant dense<0.000000e+00> : vector<32x32xf32>
    %327 = tpu.matmul %326, %180, %cst_124 {dimension_numbers = #tpu.dot_dimension_numbers<[1], [0], [0], [1], [0, 0, 1, 1], [], []>} : vector<32x64xf32>, vector<64x32xf32>, vector<32x32xf32> -> vector<32x32xf32>
    %328 = arith.addf %282, %327 : vector<32x32xf32>
    %c0_125 = arith.constant 0 : index
    %c0_126 = arith.constant 0 : index
    %329 = vector.load %arg8[%c0_125, %c0_126] : memref<2x32xf32, #tpu.memory_space<vmem>>, vector<1x32xf32>
    %c1_127 = arith.constant 1 : index
    %c0_128 = arith.constant 0 : index
    %330 = vector.load %arg8[%c1_127, %c0_128] : memref<2x32xf32, #tpu.memory_space<vmem>>, vector<1x32xf32>
    %cst_129 = arith.constant dense<0.000000e+00> : vector<32xf32>
    %331 = vector.multi_reduction <add>, %328, %cst_129 [1] : vector<32x32xf32> to vector<32xf32>
    %332 = vector.shape_cast %331 : vector<32xf32> to vector<32x1xf32>
    %cst_130 = arith.constant 3.200000e+01 : f32
    %333 = vector.broadcast %cst_130 : f32 to vector<32x1xf32>
    %334 = arith.divf %332, %333 : vector<32x1xf32>
    %335 = vector.broadcast %334 : vector<32x1xf32> to vector<32x32xf32>
    %336 = arith.subf %328, %335 : vector<32x32xf32>
    %337 = arith.mulf %336, %336 : vector<32x32xf32>
    %cst_131 = arith.constant dense<0.000000e+00> : vector<32xf32>
    %338 = vector.multi_reduction <add>, %337, %cst_131 [1] : vector<32x32xf32> to vector<32xf32>
    %339 = vector.shape_cast %338 : vector<32xf32> to vector<32x1xf32>
    %cst_132 = arith.constant 3.200000e+01 : f32
    %340 = vector.broadcast %cst_132 : f32 to vector<32x1xf32>
    %341 = arith.divf %339, %340 : vector<32x1xf32>
    %342 = vector.broadcast %334 : vector<32x1xf32> to vector<32x32xf32>
    %343 = arith.subf %328, %342 : vector<32x32xf32>
    %cst_133 = arith.constant 9.99999974E-6 : f32
    %344 = vector.broadcast %cst_133 : f32 to vector<32x1xf32>
    %345 = arith.addf %341, %344 : vector<32x1xf32>
    %346 = math.rsqrt %345 : vector<32x1xf32>
    %347 = vector.broadcast %346 : vector<32x1xf32> to vector<32x32xf32>
    %348 = arith.mulf %343, %347 : vector<32x32xf32>
    %349 = vector.broadcast %329 : vector<1x32xf32> to vector<32x32xf32>
    %350 = arith.mulf %348, %349 : vector<32x32xf32>
    %351 = vector.broadcast %330 : vector<1x32xf32> to vector<32x32xf32>
    %352 = arith.addf %350, %351 : vector<32x32xf32>
    %c0_134 = arith.constant 0 : index
    %c0_135 = arith.constant 0 : index
    %353 = vector.load %arg9[%c0_134, %c0_135] : memref<32x128xf32, #tpu.memory_space<vmem>>, vector<32x128xf32>
    %cst_136 = arith.constant dense<0.000000e+00> : vector<32x128xf32>
    %354 = tpu.matmul %352, %353, %cst_136 {dimension_numbers = #tpu.dot_dimension_numbers<[1], [0], [0], [1], [0, 0, 1, 1], [], []>} : vector<32x32xf32>, vector<32x128xf32>, vector<32x128xf32> -> vector<32x128xf32>
    %c0_137 = arith.constant 0 : index
    %c0_138 = arith.constant 0 : index
    %355 = vector.load %arg10[%c0_137, %c0_138] : memref<32x128xf32, #tpu.memory_space<vmem>>, vector<32x128xf32>
    tpu.vector_store %arg10[%c0_137, %c0_138], %354 {strides = array<i32>} : memref<32x128xf32, #tpu.memory_space<vmem>>, vector<32x128xf32>,
    return
  }
}

</mosaic_0001>

<llo_original>
// kernel: tile.8
$region0: #{tile.8}
  #allocation0 [shape = 's32[1]{0}', space=sflag, size = 0x4, scoped, tag = 'scoped memory for tile.8']
  %s0 = inlined_call_operand.vmem [shape: s32[2], index: 0, kind: input, shape index: {}]
  %s1 = inlined_call_operand.vmem [shape: s32[3,2], index: 1, kind: output, shape index: {}]
  // Predicated region
  $region2: #{tile.8} parent=0 // pred_check
    _
  $region3: #{tile.8} parent=0 // pred_check_branch
    %3 = sbr.rel (0) target = $region5
  $region4: #{tile.8} parent=0 // pred_region
    _
  $region5: #{tile.8} parent=0 // pred_fallthru
    _
  %v4 = vld [vmem:[%s0] ss:$0 sm:$0xff]
  %5 = vst [vmem:[%s1] sm:$0xf] %v4

// kernel: tile.9
$region0: #{tile.9}
  %s0 = inlined_call_operand.vmem [shape: s32[3,2], index: 0, kind: input, shape index: {}]
  %s1 = inlined_call_operand.vmem [shape: s32[6], index: 1, kind: output, shape index: {}]
  $region1: #{tile.9} parent=0
    #allocation0 [shape = 'u8[4096]{0}', space=vmem, size = 0x1000, scoped, tag = 'scoped mem for output reshape']
    #allocation1 [shape = 'u8[4096]{0}', space=vmem, size = 0x1000, scoped, tag = 'scoped mem for input reshape']
    %s3 = sshll.u32 1, 4
    %s4 = ssub.s32 %s3, 1
    %v5 = vld [vmem:[%s0] sm:%s4]
    %6 = vst [vmem:[#allocation1] sm:%s4] %v5
    %v7 = vld [vmem:[#allocation1] sm:$0x1]
    %vm8 = vcmask 15360
    %9 = vst.msk [vmem:[#allocation0] sm:$0x1] %vm8, %v7
    %s10 = scalar_lea.vmem [#allocation1], 2
    %v11 = vld [vmem:[%s10] sm:$0x1]
    %12 = vrot.lane.b32.xlu0 %v11, 4
    %v13 = vpop.permute.xlu0 %12
    %vm14 = vcmask 48160
    %15 = vst.msk [vmem:[#allocation0] sm:$0x1] %vm14, %v13
    %s16 = scalar_lea.vmem [#allocation1], 1
    %v17 = vld [vmem:[%s16] sm:$0x1]
    %18 = vrot.lane.b32.xlu0 %v17, 2
    %v19 = vpop.permute.xlu0 %18
    %vm20 = vcmask 31760
    %21 = vst.msk [vmem:[#allocation0] sm:$0x1] %vm20, %v19
    %s23 = sshll.u32 1, 1
    %s24 = ssub.s32 %s23, 1
    %v26 = vld [vmem:[#allocation0] sm:%s24]
    %s27 = sshll.u32 1, 1
    %s28 = ssub.s32 %s27, 1
    %29 = vst [vmem:[%s1] sm:%s28] %v26

// kernel: _lambda_.1
$region0: #{_lambda_.1}
  #allocation0 [shape = 'u32[]', space=smem, size = 0x4, offset = 0x4, fixed_abs, tag = 'smem constant byte address 0x4 - core index']
  #allocation1 [shape = 'u32[144,128]{1,0:T(1,128)}', space=vmem, size = 0x12000, scoped, tag = 'internal scratch']
  %s0 = inlined_call_operand.vmem [shape: f32[32,32], index: 0, kind: input, shape index: {}]
  %s1 = inlined_call_operand.vmem [shape: f32[32,1], index: 1, kind: input, shape index: {}]
  %s2 = inlined_call_operand.vmem [shape: f32[1,32], index: 2, kind: input, shape index: {}]
  %s3 = inlined_call_operand.vmem [shape: f32[2,4,32], index: 3, kind: input, shape index: {}]
  %s4 = inlined_call_operand.vmem [shape: f32[2,4,32,32], index: 4, kind: input, shape index: {}]
  %s5 = inlined_call_operand.vmem [shape: f32[2,4,32,32], index: 5, kind: input, shape index: {}]
  %s6 = inlined_call_operand.vmem [shape: f32[2,2,32,64], index: 6, kind: input, shape index: {}]
  %s7 = inlined_call_operand.hbm [shape: f32[2,64,32], index: 7, kind: input, shape index: {}]
  %s8 = inlined_call_operand.vmem [shape: f32[2,32], index: 8, kind: input, shape index: {}]
  %s9 = inlined_call_operand.vmem [shape: f32[32,128], index: 9, kind: input, shape index: {}]
  %s10 = inlined_call_operand.vmem [shape: f32[32,128], index: 10, kind: output, shape index: {}]
  %s11 = sld [smem:[#allocation0]]
  $region54: #{_lambda_.1} parent=0
    _
  %s13 = ssub.s32 1, %s11
  %s14 = scalar_select 0, %s13, %s11
  $region1: #{_lambda_.1} parent=0
    #allocation2 [shape = 'u8[65536]{0}', space=vmem, size = 0x10000, scoped, tag = 'input window, operand 7, single buffered']
    #allocation3 [shape = 's32[1]{0}', space=sflag, size = 0x4, scoped, tag = 'scoped memory for _lambda_.1']
    %15 = vsyncpa [#allocation3], 0
    // Predicated region
    $region2: #{_lambda_.1} parent=1 // pred_check
      _
    $region3: #{_lambda_.1} parent=1 // pred_check_branch
      %17 = sbr.rel (0) target = $region5
    $region4: #{_lambda_.1} parent=1 // pred_region
      _
    $region5: #{_lambda_.1} parent=1 // pred_fallthru
      _
    // Predicated region
    $region6: #{_lambda_.1} parent=1 // pred_check
      _
    $region7: #{_lambda_.1} parent=1 // pred_check_branch
      %19 = sbr.rel (0) target = $region9
    $region8: #{_lambda_.1} parent=1 // pred_region
      _
    $region9: #{_lambda_.1} parent=1 // pred_fallthru
      _
    // Predicated region
    $region10: #{_lambda_.1} parent=1 // pred_check
      _
    $region11: #{_lambda_.1} parent=1 // pred_check_branch
      %21 = sbr.rel (0) target = $region13
    $region12: #{_lambda_.1} parent=1 // pred_region
      _
    $region13: #{_lambda_.1} parent=1 // pred_fallthru
      _
    // Predicated region
    $region14: #{_lambda_.1} parent=1 // pred_check
      _
    $region15: #{_lambda_.1} parent=1 // pred_check_branch
      %23 = sbr.rel (0) target = $region17
    $region16: #{_lambda_.1} parent=1 // pred_region
      _
    $region17: #{_lambda_.1} parent=1 // pred_fallthru
      _
    // Predicated region
    $region18: #{_lambda_.1} parent=1 // pred_check
      _
    $region19: #{_lambda_.1} parent=1 // pred_check_branch
      %25 = sbr.rel (0) target = $region21
    $region20: #{_lambda_.1} parent=1 // pred_region
      _
    $region21: #{_lambda_.1} parent=1 // pred_fallthru
      _
    // Predicated region
    $region22: #{_lambda_.1} parent=1 // pred_check
      _
    $region23: #{_lambda_.1} parent=1 // pred_check_branch
      %27 = sbr.rel (0) target = $region25
    $region24: #{_lambda_.1} parent=1 // pred_region
      _
    $region25: #{_lambda_.1} parent=1 // pred_fallthru
      _
    // Predicated region
    $region26: #{_lambda_.1} parent=1 // pred_check
      _
    $region27: #{_lambda_.1} parent=1 // pred_check_branch
      %29 = sbr.rel (0) target = $region29
    $region28: #{_lambda_.1} parent=1 // pred_region
      _
    $region29: #{_lambda_.1} parent=1 // pred_fallthru
      _
    // Predicated region
    $region30: #{_lambda_.1} parent=1 // pred_check
      _
    $region31: #{_lambda_.1} parent=1 // pred_check_branch
      %31 = sbr.rel (0) target = $region33
    $region32: #{_lambda_.1} parent=1 // pred_region
      %s33 = ssub.s32 2048, 2048
      %34 = vsyncadd [#allocation3], %s33
      %s35 = sshll.u32 [#allocation2], 4
      %s36 = int_to_ptr.vmem [resolvable:$true] %s35
      %41 = dma.hbm_to_vmem [thread:$0]  %s7, 2048, %s36, [#allocation3], 128, 128, 8
    $region33: #{_lambda_.1} parent=1 // pred_fallthru
      _
    // Predicated region
    $region34: #{_lambda_.1} parent=1 // pred_check
      _
    $region35: #{_lambda_.1} parent=1 // pred_check_branch
      %43 = sbr.rel (0) target = $region37
    $region36: #{_lambda_.1} parent=1 // pred_region
      _
    $region37: #{_lambda_.1} parent=1 // pred_fallthru
      _
    // Predicated region
    $region38: #{_lambda_.1} parent=1 // pred_check
      _
    $region39: #{_lambda_.1} parent=1 // pred_check_branch
      %45 = sbr.rel (0) target = $region41
    $region40: #{_lambda_.1} parent=1 // pred_region
      _
    $region41: #{_lambda_.1} parent=1 // pred_fallthru
      _
    // Predicated region
    $region42: #{_lambda_.1} parent=1 // pred_check
      _
    $region43: #{_lambda_.1} parent=1 // pred_check_branch
      %47 = sbr.rel (0) target = $region45
    $region44: #{_lambda_.1} parent=1 // pred_region
      %48 = dma.done [#allocation3], 2048
    $region45: #{_lambda_.1} parent=1 // pred_fallthru
      _
    %v49 = vld [vmem:[%s0] sm:$0xff]
    %v50 = vld [vmem:[%s0 + $0x8] sm:$0xff]
    %v51 = vld [vmem:[%s0 + $0x10] sm:$0xff]
    %v52 = vld [vmem:[%s0 + $0x18] sm:$0xff]
    %v53 = vlaneseq
    %v54 = vshrl.u32 %v53, 7
    %v55 = vadd.s32 %v54, 8
    %v56 = vadd.s32 %v54, 16
    %v57 = vadd.s32 %v54, 24
    %v58 = vlaneseq
    %v59 = vand.u32 %v58, 127
    %v60 = vld [vmem:[%s1] sm:$0xff]
    %v61 = vld [vmem:[%s1 + $0x8] sm:$0xff]
    %v62 = vld [vmem:[%s1 + $0x10] sm:$0xff]
    %v63 = vld [vmem:[%s1 + $0x18] sm:$0xff]
    %v64 = vld [vmem:[%s2] sm:$0x1]
    %66 = vset.pattern.permute.xlu0 0
    %67 = vperm.xlu0 %66, %v60
    %v68 = vpop.permute.xlu0 %67
    %71 = vset.pattern.permute.xlu0 0
    %72 = vperm.xlu0 %71, %v61
    %v73 = vpop.permute.xlu0 %72
    %76 = vset.pattern.permute.xlu0 0
    %77 = vperm.xlu0 %76, %v62
    %v78 = vpop.permute.xlu0 %77
    %81 = vset.pattern.permute.xlu0 0
    %82 = vperm.xlu0 %81, %v63
    %v83 = vpop.permute.xlu0 %82
    %v86 = vlaneseq
    %v87 = vshrl.u32 %v86, 7
    %v88 = vsub.s32 0, %v87
    %v89 = vrot.slane %v64, %v88
    %vm91 = vcmp.eq.f32.partialorder %v68, %v89
    %vm92 = vcmp.eq.f32.partialorder %v73, %v89
    %vm93 = vcmp.eq.f32.partialorder %v78, %v89
    %vm94 = vcmp.eq.f32.partialorder %v83, %v89
    %vm95 = vcmp.le.s32.totalorder %v59, %v54
    %vm96 = vcmp.le.s32.totalorder %v59, %v55
    %vm97 = vcmp.le.s32.totalorder %v59, %v56
    %vm98 = vcmp.le.s32.totalorder %v59, %v57
    %vm99 = vmand %vm91, %vm95
    %vm100 = vmand %vm92, %vm96
    %vm101 = vmand %vm93, %vm97
    %vm102 = vmand %vm94, %vm98
    %v103 = vsel %vm99, 0.0, -1e+30
    %v104 = vsel %vm100, 0.0, -1e+30
    %v105 = vsel %vm101, 0.0, -1e+30
    %v106 = vsel %vm102, 0.0, -1e+30
    %v107 = vld [vmem:[%s3] sm:$0xf]
    %v108 = vld [vmem:[%s4] sm:$0xff]
    %v109 = vld [vmem:[%s4 + $0x8] sm:$0xff]
    %v110 = vld [vmem:[%s4 + $0x10] sm:$0xff]
    %v111 = vld [vmem:[%s4 + $0x18] sm:$0xff]
    %v112 = vld [vmem:[%s4 + $0x20] sm:$0xff]
    %v113 = vld [vmem:[%s4 + $0x28] sm:$0xff]
    %v114 = vld [vmem:[%s4 + $0x30] sm:$0xff]
    %v115 = vld [vmem:[%s4 + $0x38] sm:$0xff]
    %v116 = vld [vmem:[%s4 + $0x40] sm:$0xff]
    %v117 = vld [vmem:[%s4 + $0x48] sm:$0xff]
    %v118 = vld [vmem:[%s4 + $0x50] sm:$0xff]
    %v119 = vld [vmem:[%s4 + $0x58] sm:$0xff]
    %v120 = vld [vmem:[%s4 + $0x60] sm:$0xff]
    %v121 = vld [vmem:[%s4 + $0x68] sm:$0xff]
    %v122 = vld [vmem:[%s4 + $0x70] sm:$0xff]
    %v123 = vld [vmem:[%s4 + $0x78] sm:$0xff]
    %v124 = vld [vmem:[%s5] sm:$0xff]
    %v125 = vld [vmem:[%s5 + $0x8] sm:$0xff]
    %v126 = vld [vmem:[%s5 + $0x10] sm:$0xff]
    %v127 = vld [vmem:[%s5 + $0x18] sm:$0xff]
    %v128 = vld [vmem:[%s5 + $0x20] sm:$0xff]
    %v129 = vld [vmem:[%s5 + $0x28] sm:$0xff]
    %v130 = vld [vmem:[%s5 + $0x30] sm:$0xff]
    %v131 = vld [vmem:[%s5 + $0x38] sm:$0xff]
    %v132 = vld [vmem:[%s5 + $0x40] sm:$0xff]
    %v133 = vld [vmem:[%s5 + $0x48] sm:$0xff]
    %v134 = vld [vmem:[%s5 + $0x50] sm:$0xff]
    %v135 = vld [vmem:[%s5 + $0x58] sm:$0xff]
    %v136 = vld [vmem:[%s5 + $0x60] sm:$0xff]
    %v137 = vld [vmem:[%s5 + $0x68] sm:$0xff]
    %v138 = vld [vmem:[%s5 + $0x70] sm:$0xff]
    %v139 = vld [vmem:[%s5 + $0x78] sm:$0xff]
    %v140 = vld [vmem:[%s6] sm:$0xff]
    %v141 = vld [vmem:[%s6 + $0x8] sm:$0xff]
    %v142 = vld [vmem:[%s6 + $0x10] sm:$0xff]
    %v143 = vld [vmem:[%s6 + $0x18] sm:$0xff]
    %v144 = vld [vmem:[%s6 + $0x20] sm:$0xff]
    %v145 = vld [vmem:[%s6 + $0x28] sm:$0xff]
    %v146 = vld [vmem:[%s6 + $0x30] sm:$0xff]
    %v147 = vld [vmem:[%s6 + $0x38] sm:$0xff]
    %v148 = vld [vmem:[#allocation2] sm:$0xff]
    %v149 = vld [vmem:[#allocation2 + $0x8] sm:$0xff]
    %v150 = vld [vmem:[#allocation2 + $0x10] sm:$0xff]
    %v151 = vld [vmem:[#allocation2 + $0x18] sm:$0xff]
    %v152 = vld [vmem:[#allocation2 + $0x20] sm:$0xff]
    %v153 = vld [vmem:[#allocation2 + $0x28] sm:$0xff]
    %v154 = vld [vmem:[#allocation2 + $0x30] sm:$0xff]
    %v155 = vld [vmem:[#allocation2 + $0x38] sm:$0xff]
    %vm156 = vcmask 261120
    %v157 = vsel %vm156, %v49, 0.0
    %158 = vadd.xlane.f32.xlu0 %v157
    %v159 = vpop.xlane.xlu0 %158
    %v160 = vsel %vm156, %v50, 0.0
    %161 = vadd.xlane.f32.xlu0 %v160
    %v162 = vpop.xlane.xlu0 %161
    %v163 = vsel %vm156, %v51, 0.0
    %164 = vadd.xlane.f32.xlu0 %v163
    %v165 = vpop.xlane.xlu0 %164
    %v166 = vsel %vm156, %v52, 0.0
    %167 = vadd.xlane.f32.xlu0 %v166
    %v168 = vpop.xlane.xlu0 %167
    %v169 = vrcp.pop 32.0
    %v170 = vmul.f32 %v159, %v169
    %v171 = vmul.f32 %v162, %v169
    %v172 = vmul.f32 %v165, %v169
    %v173 = vmul.f32 %v168, %v169
    %v174 = vsub.f32 %v49, %v170
    %v175 = vsub.f32 %v50, %v171
    %v176 = vsub.f32 %v51, %v172
    %v177 = vsub.f32 %v52, %v173
    %v178 = vmul.f32 %v174, %v174
    %v179 = vmul.f32 %v175, %v175
    %v180 = vmul.f32 %v176, %v176
    %v181 = vmul.f32 %v177, %v177
    %v182 = vsel %vm156, %v178, 0.0
    %183 = vadd.xlane.f32.xlu0 %v182
    %v184 = vpop.xlane.xlu0 %183
    %v185 = vsel %vm156, %v179, 0.0
    %186 = vadd.xlane.f32.xlu0 %v185
    %v187 = vpop.xlane.xlu0 %186
    %v188 = vsel %vm156, %v180, 0.0
    %189 = vadd.xlane.f32.xlu0 %v188
    %v190 = vpop.xlane.xlu0 %189
    %v191 = vsel %vm156, %v181, 0.0
    %192 = vadd.xlane.f32.xlu0 %v191
    %v193 = vpop.xlane.xlu0 %192
    %v194 = vmul.f32 %v184, %v169
    %v195 = vmul.f32 %v187, %v169
    %v196 = vmul.f32 %v190, %v169
    %v197 = vmul.f32 %v193, %v169
    %v198 = vadd.f32 %v194, 1e-05
    %v199 = vadd.f32 %v195, 1e-05
    %v200 = vadd.f32 %v196, 1e-05
    %v201 = vadd.f32 %v197, 1e-05
    %v202 = vrsqrt.pop %v198
    %v203 = vrsqrt.pop %v199
    %v204 = vrsqrt.pop %v200
    %v205 = vrsqrt.pop %v201
    %v206 = vmul.f32 %v174, %v202
    %v207 = vmul.f32 %v175, %v203
    %v208 = vmul.f32 %v176, %v204
    %v209 = vmul.f32 %v177, %v205
    %v210 = vlaneseq
    %v211 = vshrl.u32 %v210, 7
    %v212 = vsub.s32 0, %v211
    %v213 = vrot.slane %v107, %v212
    %v214 = vmul.f32 %v206, %v213
    %v215 = vmul.f32 %v207, %v213
    %v216 = vmul.f32 %v208, %v213
    %v217 = vmul.f32 %v209, %v213
    %v218 = vlaneseq
    %v219 = vshrl.u32 %v218, 7
    %v220 = vsub.s32 1, %v219
    %v221 = vrot.slane %v107, %v220
    %v222 = vadd.f32 %v214, %v221
    %v223 = vadd.f32 %v215, %v221
    %v224 = vadd.f32 %v216, %v221
    %v225 = vadd.f32 %v217, %v221
    %v227 = vsel %vm156, %v222, 0
    %v230 = vsel %vm156, %v223, 0
    %v233 = vsel %vm156, %v224, 0
    %v236 = vsel %vm156, %v225, 0
    %238 = vmatprep.subr.mxu0 0.0
    %239 = vmatpush1.msra.mxu0 0.0
    %240 = vmatprep.subr.mxu0 0.0
    %241 = vmatpush1.msra.mxu0 0.0
    %242 = vmatprep.subr.mxu0 0.0
    %243 = vmatpush1.msra.mxu0 0.0
    %244 = vmatprep.subr.mxu0 0.0
    %245 = vmatpush1.msra.mxu0 0.0
    %246 = vmatprep.subr.mxu0 0.0
    %247 = vmatpush1.msra.mxu0 0.0
    %248 = vmatprep.subr.mxu0 0.0
    %249 = vmatpush1.msra.mxu0 0.0
    %250 = vmatprep.subr.mxu0 0.0
    %251 = vmatpush1.msra.mxu0 0.0
    %252 = vmatprep.subr.mxu0 0.0
    %253 = vmatpush1.msra.mxu0 0.0
    %254 = vmatprep.subr.mxu0 0.0
    %255 = vmatpush1.msra.mxu0 0.0
    %256 = vmatprep.subr.mxu0 0.0
    %257 = vmatpush1.msra.mxu0 0.0
    %258 = vmatprep.subr.mxu0 0.0
    %259 = vmatpush1.msra.mxu0 0.0
    %260 = vmatprep.subr.mxu0 0.0
    %261 = vmatpush1.msra.mxu0 0.0
    %262 = vmatprep.subr.mxu0 0.0
    %263 = vmatpush1.msra.mxu0 %v111
    %264 = vmatprep.subr.mxu0 0.0
    %265 = vmatpush1.msra.mxu0 %v110
    %266 = vmatprep.subr.mxu0 0.0
    %267 = vmatpush1.msra.mxu0 %v109
    %268 = vmatprep.subr.mxu0 0.0
    %269 = vmatpush1.msra.mxu0 %v108
    %270 = vmatprep.subr.mxu0 0.0
    %271 = vmatpush2.msra.mxu0 0.0
    %272 = vmatprep.subr.mxu0 0.0
    %273 = vmatpush2.msra.mxu0 0.0
    %274 = vmatprep.subr.mxu0 0.0
    %275 = vmatpush2.msra.mxu0 0.0
    %276 = vmatprep.subr.mxu0 0.0
    %277 = vmatpush2.msra.mxu0 0.0
    %278 = vmatprep.subr.mxu0 0.0
    %279 = vmatpush2.msra.mxu0 0.0
    %280 = vmatprep.subr.mxu0 0.0
    %281 = vmatpush2.msra.mxu0 0.0
    %282 = vmatprep.subr.mxu0 0.0
    %283 = vmatpush2.msra.mxu0 0.0
    %284 = vmatprep.subr.mxu0 0.0
    %285 = vmatpush2.msra.mxu0 0.0
    %286 = vmatprep.subr.mxu0 0.0
    %287 = vmatpush2.msra.mxu0 0.0
    %288 = vmatprep.subr.mxu0 0.0
    %289 = vmatpush2.msra.mxu0 0.0
    %290 = vmatprep.subr.mxu0 0.0
    %291 = vmatpush2.msra.mxu0 0.0
    %292 = vmatprep.subr.mxu0 0.0
    %293 = vmatpush2.msra.mxu0 0.0
    %294 = vmatprep.subr.mxu0 0.0
    %295 = vmatpush2.msra.mxu0 0.0
    %296 = vmatprep.subr.mxu0 0.0
    %297 = vmatpush2.msra.mxu0 0.0
    %298 = vmatprep.subr.mxu0 0.0
    %299 = vmatpush2.msra.mxu0 0.0
    %300 = vmatprep.subr.mxu0 0.0
    %301 = vmatpush2.msra.mxu0 0.0
    %302 = vmatprep.mubr.f32.mxu0 0.0
    %303 = vmatmul.mubr.f32.gmra.mxu0 %v227
    %v304 = vpop.f32.mrf.mxu0
    %v305 = vadd.f32 0.0, %v304
    %v306 = vpop.f32.mrf.mxu0
    %307 = vmatprep.mubr.f32.mxu0 0.0
    %308 = vmatmul.mubr.f32.gmra.mxu0 %v230
    %v309 = vpop.f32.mrf.mxu0
    %v310 = vadd.f32 0.0, %v309
    %v311 = vpop.f32.mrf.mxu0
    %312 = vmatprep.mubr.f32.mxu0 0.0
    %313 = vmatmul.mubr.f32.gmra.mxu0 %v233
    %v314 = vpop.f32.mrf.mxu0
    %v315 = vadd.f32 0.0, %v314
    %v316 = vpop.f32.mrf.mxu0
    %317 = vmatprep.mubr.f32.mxu0 0.0
    %318 = vmatmul.mubr.f32.gmra.mxu0 %v236
    %v319 = vpop.f32.mrf.mxu0
    %v320 = vadd.f32 0.0, %v319
    %v321 = vpop.f32.mrf.mxu0
    %322 = vdwg.mxu0
    %v324 = vsel %vm156, %v305, 0
    %v327 = vsel %vm156, %v310, 0
    %v330 = vsel %vm156, %v315, 0
    %v333 = vsel %vm156, %v320, 0
    %335 = vmatprep.subr.mxu0 0.0
    %336 = vmatpush1.xpose.msra.mxu0 0.0
    %337 = vmatprep.subr.mxu0 0.0
    %338 = vmatpush1.xpose.msra.mxu0 0.0
    %339 = vmatprep.subr.mxu0 0.0
    %340 = vmatpush1.xpose.msra.mxu0 0.0
    %341 = vmatprep.subr.mxu0 0.0
    %342 = vmatpush1.xpose.msra.mxu0 0.0
    %343 = vmatprep.subr.mxu0 0.0
    %344 = vmatpush1.xpose.msra.mxu0 0.0
    %345 = vmatprep.subr.mxu0 0.0
    %346 = vmatpush1.xpose.msra.mxu0 0.0
    %347 = vmatprep.subr.mxu0 0.0
    %348 = vmatpush1.xpose.msra.mxu0 0.0
    %349 = vmatprep.subr.mxu0 0.0
    %350 = vmatpush1.xpose.msra.mxu0 0.0
    %351 = vmatprep.subr.mxu0 0.0
    %352 = vmatpush1.xpose.msra.mxu0 0.0
    %353 = vmatprep.subr.mxu0 0.0
    %354 = vmatpush1.xpose.msra.mxu0 0.0
    %355 = vmatprep.subr.mxu0 0.0
    %356 = vmatpush1.xpose.msra.mxu0 0.0
    %357 = vmatprep.subr.mxu0 0.0
    %358 = vmatpush1.xpose.msra.mxu0 0.0
    %359 = vmatprep.subr.mxu0 0.0
    %360 = vmatpush1.xpose.msra.mxu0 %v236
    %361 = vmatprep.subr.mxu0 0.0
    %362 = vmatpush1.xpose.msra.mxu0 %v233
    %363 = vmatprep.subr.mxu0 0.0
    %364 = vmatpush1.xpose.msra.mxu0 %v230
    %365 = vmatprep.subr.mxu0 0.0
    %366 = vmatpush1.xpose.msra.mxu0 %v227
    %367 = vmatprep.subr.mxu0 0.0
    %368 = vmatpush2.xpose.msra.mxu0 0.0
    %369 = vmatprep.subr.mxu0 0.0
    %370 = vmatpush2.xpose.msra.mxu0 0.0
    %371 = vmatprep.subr.mxu0 0.0
    %372 = vmatpush2.xpose.msra.mxu0 0.0
    %373 = vmatprep.subr.mxu0 0.0
    %374 = vmatpush2.xpose.msra.mxu0 0.0
    %375 = vmatprep.subr.mxu0 0.0
    %376 = vmatpush2.xpose.msra.mxu0 0.0
    %377 = vmatprep.subr.mxu0 0.0
    %378 = vmatpush2.xpose.msra.mxu0 0.0
    %379 = vmatprep.subr.mxu0 0.0
    %380 = vmatpush2.xpose.msra.mxu0 0.0
    %381 = vmatprep.subr.mxu0 0.0
    %382 = vmatpush2.xpose.msra.mxu0 0.0
    %383 = vmatprep.subr.mxu0 0.0
    %384 = vmatpush2.xpose.msra.mxu0 0.0
    %385 = vmatprep.subr.mxu0 0.0
    %386 = vmatpush2.xpose.msra.mxu0 0.0
    %387 = vmatprep.subr.mxu0 0.0
    %388 = vmatpush2.xpose.msra.mxu0 0.0
    %389 = vmatprep.subr.mxu0 0.0
    %390 = vmatpush2.xpose.msra.mxu0 0.0
    %391 = vmatprep.subr.mxu0 0.0
    %392 = vmatpush2.xpose.msra.mxu0 0.0
    %393 = vmatprep.subr.mxu0 0.0
    %394 = vmatpush2.xpose.msra.mxu0 0.0
    %395 = vmatprep.subr.mxu0 0.0
    %396 = vmatpush2.xpose.msra.mxu0 0.0
    %397 = vmatprep.subr.mxu0 0.0
    %398 = vmatpush2.xpose.msra.mxu0 0.0
    %399 = vmatprep.mubr.f32.mxu0 0.0
    %400 = vmatmul.mubr.f32.gmra.mxu0 %v324
    %v401 = vpop.f32.mrf.mxu0
    %v402 = vadd.f32 %v103, %v401
    %v403 = vpop.f32.mrf.mxu0
    %404 = vmatprep.mubr.f32.mxu0 0.0
    %405 = vmatmul.mubr.f32.gmra.mxu0 %v327
    %v406 = vpop.f32.mrf.mxu0
    %v407 = vadd.f32 %v104, %v406
    %v408 = vpop.f32.mrf.mxu0
    %409 = vmatprep.mubr.f32.mxu0 0.0
    %410 = vmatmul.mubr.f32.gmra.mxu0 %v330
    %v411 = vpop.f32.mrf.mxu0
    %v412 = vadd.f32 %v105, %v411
    %v413 = vpop.f32.mrf.mxu0
    %414 = vmatprep.mubr.f32.mxu0 0.0
    %415 = vmatmul.mubr.f32.gmra.mxu0 %v333
    %v416 = vpop.f32.mrf.mxu0
    %v417 = vadd.f32 %v106, %v416
    %v418 = vpop.f32.mrf.mxu0
    %419 = vdwg.mxu0
    %v420 = vsel %vm156, %v402, -inf
    %421 = vmax.xlane.f32.xlu0 %v420
    %v422 = vpop.xlane.xlu0 %421
    %v423 = vsel %vm156, %v407, -inf
    %424 = vmax.xlane.f32.xlu0 %v423
    %v425 = vpop.xlane.xlu0 %424
    %v426 = vsel %vm156, %v412, -inf
    %427 = vmax.xlane.f32.xlu0 %v426
    %v428 = vpop.xlane.xlu0 %427
    %v429 = vsel %vm156, %v417, -inf
    %430 = vmax.xlane.f32.xlu0 %v429
    %v431 = vpop.xlane.xlu0 %430
    %v432 = vsub.f32 %v402, %v422
    %v433 = vsub.f32 %v407, %v425
    %v434 = vsub.f32 %v412, %v428
    %v435 = vsub.f32 %v417, %v431
    %v436 = vmul.f32 %v432, 1.442695
    %v437 = vpow.pop %v436
    %v438 = vmul.f32 %v433, 1.442695
    %v439 = vpow.pop %v438
    %v440 = vmul.f32 %v434, 1.442695
    %v441 = vpow.pop %v440
    %v442 = vmul.f32 %v435, 1.442695
    %v443 = vpow.pop %v442
    %v444 = vsel %vm156, %v437, 0.0
    %445 = vadd.xlane.f32.xlu0 %v444
    %v446 = vpop.xlane.xlu0 %445
    %v447 = vsel %vm156, %v439, 0.0
    %448 = vadd.xlane.f32.xlu0 %v447
    %v449 = vpop.xlane.xlu0 %448
    %v450 = vsel %vm156, %v441, 0.0
    %451 = vadd.xlane.f32.xlu0 %v450
    %v452 = vpop.xlane.xlu0 %451
    %v453 = vsel %vm156, %v443, 0.0
    %454 = vadd.xlane.f32.xlu0 %v453
    %v455 = vpop.xlane.xlu0 %454
    %v456 = vrcp.pop %v446
    %v457 = vmul.f32 %v437, %v456
    %v458 = vrcp.pop %v449
    %v459 = vmul.f32 %v439, %v458
    %v460 = vrcp.pop %v452
    %v461 = vmul.f32 %v441, %v460
    %v462 = vrcp.pop %v455
    %v463 = vmul.f32 %v443, %v462
    %464 = vmatprep.subr.mxu0 0.0
    %465 = vmatpush1.msra.mxu0 0.0
    %466 = vmatprep.subr.mxu0 0.0
    %467 = vmatpush1.msra.mxu0 0.0
    %468 = vmatprep.subr.mxu0 0.0
    %469 = vmatpush1.msra.mxu0 0.0
    %470 = vmatprep.subr.mxu0 0.0
    %471 = vmatpush1.msra.mxu0 0.0
    %472 = vmatprep.subr.mxu0 0.0
    %473 = vmatpush1.msra.mxu0 0.0
    %474 = vmatprep.subr.mxu0 0.0
    %475 = vmatpush1.msra.mxu0 0.0
    %476 = vmatprep.subr.mxu0 0.0
    %477 = vmatpush1.msra.mxu0 0.0
    %478 = vmatprep.subr.mxu0 0.0
    %479 = vmatpush1.msra.mxu0 0.0
    %480 = vmatprep.subr.mxu0 0.0
    %481 = vmatpush1.msra.mxu0 0.0
    %482 = vmatprep.subr.mxu0 0.0
    %483 = vmatpush1.msra.mxu0 0.0
    %484 = vmatprep.subr.mxu0 0.0
    %485 = vmatpush1.msra.mxu0 0.0
    %486 = vmatprep.subr.mxu0 0.0
    %487 = vmatpush1.msra.mxu0 0.0
    %488 = vmatprep.subr.mxu0 0.0
    %489 = vmatpush1.msra.mxu0 %v127
    %490 = vmatprep.subr.mxu0 0.0
    %491 = vmatpush1.msra.mxu0 %v126
    %492 = vmatprep.subr.mxu0 0.0
    %493 = vmatpush1.msra.mxu0 %v125
    %494 = vmatprep.subr.mxu0 0.0
    %495 = vmatpush1.msra.mxu0 %v124
    %496 = vmatprep.subr.mxu0 0.0
    %497 = vmatpush2.msra.mxu0 0.0
    %498 = vmatprep.subr.mxu0 0.0
    %499 = vmatpush2.msra.mxu0 0.0
    %500 = vmatprep.subr.mxu0 0.0
    %501 = vmatpush2.msra.mxu0 0.0
    %502 = vmatprep.subr.mxu0 0.0
    %503 = vmatpush2.msra.mxu0 0.0
    %504 = vmatprep.subr.mxu0 0.0
    %505 = vmatpush2.msra.mxu0 0.0
    %506 = vmatprep.subr.mxu0 0.0
    %507 = vmatpush2.msra.mxu0 0.0
    %508 = vmatprep.subr.mxu0 0.0
    %509 = vmatpush2.msra.mxu0 0.0
    %510 = vmatprep.subr.mxu0 0.0
    %511 = vmatpush2.msra.mxu0 0.0
    %512 = vmatprep.subr.mxu0 0.0
    %513 = vmatpush2.msra.mxu0 0.0
    %514 = vmatprep.subr.mxu0 0.0
    %515 = vmatpush2.msra.mxu0 0.0
    %516 = vmatprep.subr.mxu0 0.0
    %517 = vmatpush2.msra.mxu0 0.0
    %518 = vmatprep.subr.mxu0 0.0
    %519 = vmatpush2.msra.mxu0 0.0
    %520 = vmatprep.subr.mxu0 0.0
    %521 = vmatpush2.msra.mxu0 0.0
    %522 = vmatprep.subr.mxu0 0.0
    %523 = vmatpush2.msra.mxu0 0.0
    %524 = vmatprep.subr.mxu0 0.0
    %525 = vmatpush2.msra.mxu0 0.0
    %526 = vmatprep.subr.mxu0 0.0
    %527 = vmatpush2.msra.mxu0 0.0
    %528 = vmatprep.mubr.f32.mxu0 0.0
    %529 = vmatmul.mubr.f32.gmra.mxu0 %v227
    %v530 = vpop.f32.mrf.mxu0
    %v531 = vadd.f32 0.0, %v530
    %v532 = vpop.f32.mrf.mxu0
    %533 = vmatprep.mubr.f32.mxu0 0.0
    %534 = vmatmul.mubr.f32.gmra.mxu0 %v230
    %v535 = vpop.f32.mrf.mxu0
    %v536 = vadd.f32 0.0, %v535
    %v537 = vpop.f32.mrf.mxu0
    %538 = vmatprep.mubr.f32.mxu0 0.0
    %539 = vmatmul.mubr.f32.gmra.mxu0 %v233
    %v540 = vpop.f32.mrf.mxu0
    %v541 = vadd.f32 0.0, %v540
    %v542 = vpop.f32.mrf.mxu0
    %543 = vmatprep.mubr.f32.mxu0 0.0
    %544 = vmatmul.mubr.f32.gmra.mxu0 %v236
    %v545 = vpop.f32.mrf.mxu0
    %v546 = vadd.f32 0.0, %v545
    %v547 = vpop.f32.mrf.mxu0
    %548 = vdwg.mxu0
    %549 = vmatprep.subr.mxu0 0.0
    %550 = vmatpush1.msra.mxu0 0.0
    %551 = vmatprep.subr.mxu0 0.0
    %552 = vmatpush1.msra.mxu0 0.0
    %553 = vmatprep.subr.mxu0 0.0
    %554 = vmatpush1.msra.mxu0 0.0
    %555 = vmatprep.subr.mxu0 0.0
    %556 = vmatpush1.msra.mxu0 0.0
    %557 = vmatprep.subr.mxu0 0.0
    %558 = vmatpush1.msra.mxu0 0.0
    %559 = vmatprep.subr.mxu0 0.0
    %560 = vmatpush1.msra.mxu0 0.0
    %561 = vmatprep.subr.mxu0 0.0
    %562 = vmatpush1.msra.mxu0 0.0
    %563 = vmatprep.subr.mxu0 0.0
    %564 = vmatpush1.msra.mxu0 0.0
    %565 = vmatprep.subr.mxu0 0.0
    %566 = vmatpush1.msra.mxu0 0.0
    %567 = vmatprep.subr.mxu0 0.0
    %568 = vmatpush1.msra.mxu0 0.0
    %569 = vmatprep.subr.mxu0 0.0
    %570 = vmatpush1.msra.mxu0 0.0
    %571 = vmatprep.subr.mxu0 0.0
    %572 = vmatpush1.msra.mxu0 0.0
    %573 = vmatprep.subr.mxu0 0.0
    %574 = vmatpush1.msra.mxu0 %v115
    %575 = vmatprep.subr.mxu0 0.0
    %576 = vmatpush1.msra.mxu0 %v114
    %577 = vmatprep.subr.mxu0 0.0
    %578 = vmatpush1.msra.mxu0 %v113
    %579 = vmatprep.subr.mxu0 0.0
    %580 = vmatpush1.msra.mxu0 %v112
    %581 = vmatprep.subr.mxu0 0.0
    %582 = vmatpush2.msra.mxu0 0.0
    %583 = vmatprep.subr.mxu0 0.0
    %584 = vmatpush2.msra.mxu0 0.0
    %585 = vmatprep.subr.mxu0 0.0
    %586 = vmatpush2.msra.mxu0 0.0
    %587 = vmatprep.subr.mxu0 0.0
    %588 = vmatpush2.msra.mxu0 0.0
    %589 = vmatprep.subr.mxu0 0.0
    %590 = vmatpush2.msra.mxu0 0.0
    %591 = vmatprep.subr.mxu0 0.0
    %592 = vmatpush2.msra.mxu0 0.0
    %593 = vmatprep.subr.mxu0 0.0
    %594 = vmatpush2.msra.mxu0 0.0
    %595 = vmatprep.subr.mxu0 0.0
    %596 = vmatpush2.msra.mxu0 0.0
    %597 = vmatprep.subr.mxu0 0.0
    %598 = vmatpush2.msra.mxu0 0.0
    %599 = vmatprep.subr.mxu0 0.0
    %600 = vmatpush2.msra.mxu0 0.0
    %601 = vmatprep.subr.mxu0 0.0
    %602 = vmatpush2.msra.mxu0 0.0
    %603 = vmatprep.subr.mxu0 0.0
    %604 = vmatpush2.msra.mxu0 0.0
    %605 = vmatprep.subr.mxu0 0.0
    %606 = vmatpush2.msra.mxu0 0.0
    %607 = vmatprep.subr.mxu0 0.0
    %608 = vmatpush2.msra.mxu0 0.0
    %609 = vmatprep.subr.mxu0 0.0
    %610 = vmatpush2.msra.mxu0 0.0
    %611 = vmatprep.subr.mxu0 0.0
    %612 = vmatpush2.msra.mxu0 0.0
    %613 = vmatprep.mubr.f32.mxu0 0.0
    %614 = vmatmul.mubr.f32.gmra.mxu0 %v227
    %v615 = vpop.f32.mrf.mxu0
    %v616 = vadd.f32 0.0, %v615
    %v617 = vpop.f32.mrf.mxu0
    %618 = vmatprep.mubr.f32.mxu0 0.0
    %619 = vmatmul.mubr.f32.gmra.mxu0 %v230
    %v620 = vpop.f32.mrf.mxu0
    %v621 = vadd.f32 0.0, %v620
    %v622 = vpop.f32.mrf.mxu0
    %623 = vmatprep.mubr.f32.mxu0 0.0
    %624 = vmatmul.mubr.f32.gmra.mxu0 %v233
    %v625 = vpop.f32.mrf.mxu0
    %v626 = vadd.f32 0.0, %v625
    %v627 = vpop.f32.mrf.mxu0
    %628 = vmatprep.mubr.f32.mxu0 0.0
    %629 = vmatmul.mubr.f32.gmra.mxu0 %v236
    %v630 = vpop.f32.mrf.mxu0
    %v631 = vadd.f32 0.0, %v630
    %v632 = vpop.f32.mrf.mxu0
    %633 = vdwg.mxu0
    %v635 = vsel %vm156, %v616, 0
    %v638 = vsel %vm156, %v621, 0
    %v641 = vsel %vm156, %v626, 0
    %v644 = vsel %vm156, %v631, 0
    %646 = vmatprep.subr.mxu0 0.0
    %647 = vmatpush1.xpose.msra.mxu0 0.0
    %648 = vmatprep.subr.mxu0 0.0
    %649 = vmatpush1.xpose.msra.mxu0 0.0
    %650 = vmatprep.subr.mxu0 0.0
    %651 = vmatpush1.xpose.msra.mxu0 0.0
    %652 = vmatprep.subr.mxu0 0.0
    %653 = vmatpush1.xpose.msra.mxu0 0.0
    %654 = vmatprep.subr.mxu0 0.0
    %655 = vmatpush1.xpose.msra.mxu0 0.0
    %656 = vmatprep.subr.mxu0 0.0
    %657 = vmatpush1.xpose.msra.mxu0 0.0
    %658 = vmatprep.subr.mxu0 0.0
    %659 = vmatpush1.xpose.msra.mxu0 0.0
    %660 = vmatprep.subr.mxu0 0.0
    %661 = vmatpush1.xpose.msra.mxu0 0.0
    %662 = vmatprep.subr.mxu0 0.0
    %663 = vmatpush1.xpose.msra.mxu0 0.0
    %664 = vmatprep.subr.mxu0 0.0
    %665 = vmatpush1.xpose.msra.mxu0 0.0
    %666 = vmatprep.subr.mxu0 0.0
    %667 = vmatpush1.xpose.msra.mxu0 0.0
    %668 = vmatprep.subr.mxu0 0.0
    %669 = vmatpush1.xpose.msra.mxu0 0.0
    %670 = vmatprep.subr.mxu0 0.0
    %671 = vmatpush1.xpose.msra.mxu0 %v236
    %672 = vmatprep.subr.mxu0 0.0
    %673 = vmatpush1.xpose.msra.mxu0 %v233
    %674 = vmatprep.subr.mxu0 0.0
    %675 = vmatpush1.xpose.msra.mxu0 %v230
    %676 = vmatprep.subr.mxu0 0.0
    %677 = vmatpush1.xpose.msra.mxu0 %v227
    %678 = vmatprep.subr.mxu0 0.0
    %679 = vmatpush2.xpose.msra.mxu0 0.0
    %680 = vmatprep.subr.mxu0 0.0
    %681 = vmatpush2.xpose.msra.mxu0 0.0
    %682 = vmatprep.subr.mxu0 0.0
    %683 = vmatpush2.xpose.msra.mxu0 0.0
    %684 = vmatprep.subr.mxu0 0.0
    %685 = vmatpush2.xpose.msra.mxu0 0.0
    %686 = vmatprep.subr.mxu0 0.0
    %687 = vmatpush2.xpose.msra.mxu0 0.0
    %688 = vmatprep.subr.mxu0 0.0
    %689 = vmatpush2.xpose.msra.mxu0 0.0
    %690 = vmatprep.subr.mxu0 0.0
    %691 = vmatpush2.xpose.msra.mxu0 0.0
    %692 = vmatprep.subr.mxu0 0.0
    %693 = vmatpush2.xpose.msra.mxu0 0.0
    %694 = vmatprep.subr.mxu0 0.0
    %695 = vmatpush2.xpose.msra.mxu0 0.0
    %696 = vmatprep.subr.mxu0 0.0
    %697 = vmatpush2.xpose.msra.mxu0 0.0
    %698 = vmatprep.subr.mxu0 0.0
    %699 = vmatpush2.xpose.msra.mxu0 0.0
    %700 = vmatprep.subr.mxu0 0.0
    %701 = vmatpush2.xpose.msra.mxu0 0.0
    %702 = vmatprep.subr.mxu0 0.0
    %703 = vmatpush2.xpose.msra.mxu0 0.0
    %704 = vmatprep.subr.mxu0 0.0
    %705 = vmatpush2.xpose.msra.mxu0 0.0
    %706 = vmatprep.subr.mxu0 0.0
    %707 = vmatpush2.xpose.msra.mxu0 0.0
    %708 = vmatprep.subr.mxu0 0.0
    %709 = vmatpush2.xpose.msra.mxu0 0.0
    %710 = vmatprep.mubr.f32.mxu0 0.0
    %711 = vmatmul.mubr.f32.gmra.mxu0 %v635
    %v712 = vpop.f32.mrf.mxu0
    %v713 = vadd.f32 %v103, %v712
    %v714 = vpop.f32.mrf.mxu0
    %715 = vmatprep.mubr.f32.mxu0 0.0
    %716 = vmatmul.mubr.f32.gmra.mxu0 %v638
    %v717 = vpop.f32.mrf.mxu0
    %v718 = vadd.f32 %v104, %v717
    %v719 = vpop.f32.mrf.mxu0
    %720 = vmatprep.mubr.f32.mxu0 0.0
    %721 = vmatmul.mubr.f32.gmra.mxu0 %v641
    %v722 = vpop.f32.mrf.mxu0
    %v723 = vadd.f32 %v105, %v722
    %v724 = vpop.f32.mrf.mxu0
    %725 = vmatprep.mubr.f32.mxu0 0.0
    %726 = vmatmul.mubr.f32.gmra.mxu0 %v644
    %v727 = vpop.f32.mrf.mxu0
    %v728 = vadd.f32 %v106, %v727
    %v729 = vpop.f32.mrf.mxu0
    %730 = vdwg.mxu0
    %v731 = vsel %vm156, %v713, -inf
    %732 = vmax.xlane.f32.xlu0 %v731
    %v733 = vpop.xlane.xlu0 %732
    %v734 = vsel %vm156, %v718, -inf
    %735 = vmax.xlane.f32.xlu0 %v734
    %v736 = vpop.xlane.xlu0 %735
    %v737 = vsel %vm156, %v723, -inf
    %738 = vmax.xlane.f32.xlu0 %v737
    %v739 = vpop.xlane.xlu0 %738
    %v740 = vsel %vm156, %v728, -inf
    %741 = vmax.xlane.f32.xlu0 %v740
    %v742 = vpop.xlane.xlu0 %741
    %v743 = vsub.f32 %v713, %v733
    %v744 = vsub.f32 %v718, %v736
    %v745 = vsub.f32 %v723, %v739
    %v746 = vsub.f32 %v728, %v742
    %v747 = vmul.f32 %v743, 1.442695
    %v748 = vpow.pop %v747
    %v749 = vmul.f32 %v744, 1.442695
    %v750 = vpow.pop %v749
    %v751 = vmul.f32 %v745, 1.442695
    %v752 = vpow.pop %v751
    %v753 = vmul.f32 %v746, 1.442695
    %v754 = vpow.pop %v753
    %v755 = vsel %vm156, %v748, 0.0
    %756 = vadd.xlane.f32.xlu0 %v755
    %v757 = vpop.xlane.xlu0 %756
    %v758 = vsel %vm156, %v750, 0.0
    %759 = vadd.xlane.f32.xlu0 %v758
    %v760 = vpop.xlane.xlu0 %759
    %v761 = vsel %vm156, %v752, 0.0
    %762 = vadd.xlane.f32.xlu0 %v761
    %v763 = vpop.xlane.xlu0 %762
    %v764 = vsel %vm156, %v754, 0.0
    %765 = vadd.xlane.f32.xlu0 %v764
    %v766 = vpop.xlane.xlu0 %765
    %v767 = vrcp.pop %v757
    %v768 = vmul.f32 %v748, %v767
    %v769 = vrcp.pop %v760
    %v770 = vmul.f32 %v750, %v769
    %v771 = vrcp.pop %v763
    %v772 = vmul.f32 %v752, %v771
    %v773 = vrcp.pop %v766
    %v774 = vmul.f32 %v754, %v773
    %775 = vmatprep.subr.mxu0 0.0
    %776 = vmatpush1.msra.mxu0 0.0
    %777 = vmatprep.subr.mxu0 0.0
    %778 = vmatpush1.msra.mxu0 0.0
    %779 = vmatprep.subr.mxu0 0.0
    %780 = vmatpush1.msra.mxu0 0.0
    %781 = vmatprep.subr.mxu0 0.0
    %782 = vmatpush1.msra.mxu0 0.0
    %783 = vmatprep.subr.mxu0 0.0
    %784 = vmatpush1.msra.mxu0 0.0
    %785 = vmatprep.subr.mxu0 0.0
    %786 = vmatpush1.msra.mxu0 0.0
    %787 = vmatprep.subr.mxu0 0.0
    %788 = vmatpush1.msra.mxu0 0.0
    %789 = vmatprep.subr.mxu0 0.0
    %790 = vmatpush1.msra.mxu0 0.0
    %791 = vmatprep.subr.mxu0 0.0
    %792 = vmatpush1.msra.mxu0 0.0
    %793 = vmatprep.subr.mxu0 0.0
    %794 = vmatpush1.msra.mxu0 0.0
    %795 = vmatprep.subr.mxu0 0.0
    %796 = vmatpush1.msra.mxu0 0.0
    %797 = vmatprep.subr.mxu0 0.0
    %798 = vmatpush1.msra.mxu0 0.0
    %799 = vmatprep.subr.mxu0 0.0
    %800 = vmatpush1.msra.mxu0 %v131
    %801 = vmatprep.subr.mxu0 0.0
    %802 = vmatpush1.msra.mxu0 %v130
    %803 = vmatprep.subr.mxu0 0.0
    %804 = vmatpush1.msra.mxu0 %v129
    %805 = vmatprep.subr.mxu0 0.0
    %806 = vmatpush1.msra.mxu0 %v128
    %807 = vmatprep.subr.mxu0 0.0
    %808 = vmatpush2.msra.mxu0 0.0
    %809 = vmatprep.subr.mxu0 0.0
    %810 = vmatpush2.msra.mxu0 0.0
    %811 = vmatprep.subr.mxu0 0.0
    %812 = vmatpush2.msra.mxu0 0.0
    %813 = vmatprep.subr.mxu0 0.0
    %814 = vmatpush2.msra.mxu0 0.0
    %815 = vmatprep.subr.mxu0 0.0
    %816 = vmatpush2.msra.mxu0 0.0
    %817 = vmatprep.subr.mxu0 0.0
    %818 = vmatpush2.msra.mxu0 0.0
    %819 = vmatprep.subr.mxu0 0.0
    %820 = vmatpush2.msra.mxu0 0.0
    %821 = vmatprep.subr.mxu0 0.0
    %822 = vmatpush2.msra.mxu0 0.0
    %823 = vmatprep.subr.mxu0 0.0
    %824 = vmatpush2.msra.mxu0 0.0
    %825 = vmatprep.subr.mxu0 0.0
    %826 = vmatpush2.msra.mxu0 0.0
    %827 = vmatprep.subr.mxu0 0.0
    %828 = vmatpush2.msra.mxu0 0.0
    %829 = vmatprep.subr.mxu0 0.0
    %830 = vmatpush2.msra.mxu0 0.0
    %831 = vmatprep.subr.mxu0 0.0
    %832 = vmatpush2.msra.mxu0 0.0
    %833 = vmatprep.subr.mxu0 0.0
    %834 = vmatpush2.msra.mxu0 0.0
    %835 = vmatprep.subr.mxu0 0.0
    %836 = vmatpush2.msra.mxu0 0.0
    %837 = vmatprep.subr.mxu0 0.0
    %838 = vmatpush2.msra.mxu0 0.0
    %839 = vmatprep.mubr.f32.mxu0 0.0
    %840 = vmatmul.mubr.f32.gmra.mxu0 %v227
    %v841 = vpop.f32.mrf.mxu0
    %v842 = vadd.f32 0.0, %v841
    %v843 = vpop.f32.mrf.mxu0
    %844 = vmatprep.mubr.f32.mxu0 0.0
    %845 = vmatmul.mubr.f32.gmra.mxu0 %v230
    %v846 = vpop.f32.mrf.mxu0
    %v847 = vadd.f32 0.0, %v846
    %v848 = vpop.f32.mrf.mxu0
    %849 = vmatprep.mubr.f32.mxu0 0.0
    %850 = vmatmul.mubr.f32.gmra.mxu0 %v233
    %v851 = vpop.f32.mrf.mxu0
    %v852 = vadd.f32 0.0, %v851
    %v853 = vpop.f32.mrf.mxu0
    %854 = vmatprep.mubr.f32.mxu0 0.0
    %855 = vmatmul.mubr.f32.gmra.mxu0 %v236
    %v856 = vpop.f32.mrf.mxu0
    %v857 = vadd.f32 0.0, %v856
    %v858 = vpop.f32.mrf.mxu0
    %859 = vdwg.mxu0
    %v861 = vsel %vm156, %v768, 0
    %v864 = vsel %vm156, %v770, 0
    %v867 = vsel %vm156, %v772, 0
    %v870 = vsel %vm156, %v774, 0
    %872 = vmatprep.subr.mxu0 0.0
    %873 = vmatpush1.msra.mxu0 0.0
    %874 = vmatprep.subr.mxu0 0.0
    %875 = vmatpush1.msra.mxu0 0.0
    %876 = vmatprep.subr.mxu0 0.0
    %877 = vmatpush1.msra.mxu0 0.0
    %878 = vmatprep.subr.mxu0 0.0
    %879 = vmatpush1.msra.mxu0 0.0
    %880 = vmatprep.subr.mxu0 0.0
    %881 = vmatpush1.msra.mxu0 0.0
    %882 = vmatprep.subr.mxu0 0.0
    %883 = vmatpush1.msra.mxu0 0.0
    %884 = vmatprep.subr.mxu0 0.0
    %885 = vmatpush1.msra.mxu0 0.0
    %886 = vmatprep.subr.mxu0 0.0
    %887 = vmatpush1.msra.mxu0 0.0
    %888 = vmatprep.subr.mxu0 0.0
    %889 = vmatpush1.msra.mxu0 0.0
    %890 = vmatprep.subr.mxu0 0.0
    %891 = vmatpush1.msra.mxu0 0.0
    %892 = vmatprep.subr.mxu0 0.0
    %893 = vmatpush1.msra.mxu0 0.0
    %894 = vmatprep.subr.mxu0 0.0
    %895 = vmatpush1.msra.mxu0 0.0
    %896 = vmatprep.subr.mxu0 0.0
    %897 = vmatpush1.msra.mxu0 %v857
    %898 = vmatprep.subr.mxu0 0.0
    %899 = vmatpush1.msra.mxu0 %v852
    %900 = vmatprep.subr.mxu0 0.0
    %901 = vmatpush1.msra.mxu0 %v847
    %902 = vmatprep.subr.mxu0 0.0
    %903 = vmatpush1.msra.mxu0 %v842
    %904 = vmatprep.subr.mxu0 0.0
    %905 = vmatpush2.msra.mxu0 0.0
    %906 = vmatprep.subr.mxu0 0.0
    %907 = vmatpush2.msra.mxu0 0.0
    %908 = vmatprep.subr.mxu0 0.0
    %909 = vmatpush2.msra.mxu0 0.0
    %910 = vmatprep.subr.mxu0 0.0
    %911 = vmatpush2.msra.mxu0 0.0
    %912 = vmatprep.subr.mxu0 0.0
    %913 = vmatpush2.msra.mxu0 0.0
    %914 = vmatprep.subr.mxu0 0.0
    %915 = vmatpush2.msra.mxu0 0.0
    %916 = vmatprep.subr.mxu0 0.0
    %917 = vmatpush2.msra.mxu0 0.0
    %918 = vmatprep.subr.mxu0 0.0
    %919 = vmatpush2.msra.mxu0 0.0
    %920 = vmatprep.subr.mxu0 0.0
    %921 = vmatpush2.msra.mxu0 0.0
    %922 = vmatprep.subr.mxu0 0.0
    %923 = vmatpush2.msra.mxu0 0.0
    %924 = vmatprep.subr.mxu0 0.0
    %925 = vmatpush2.msra.mxu0 0.0
    %926 = vmatprep.subr.mxu0 0.0
    %927 = vmatpush2.msra.mxu0 0.0
    %928 = vmatprep.subr.mxu0 0.0
    %929 = vmatpush2.msra.mxu0 0.0
    %930 = vmatprep.subr.mxu0 0.0
    %931 = vmatpush2.msra.mxu0 0.0
    %932 = vmatprep.subr.mxu0 0.0
    %933 = vmatpush2.msra.mxu0 0.0
    %934 = vmatprep.subr.mxu0 0.0
    %935 = vmatpush2.msra.mxu0 0.0
    %936 = vmatprep.mubr.f32.mxu0 0.0
    %937 = vmatmul.mubr.f32.gmra.mxu0 %v861
    %v938 = vpop.f32.mrf.mxu0
    %v939 = vadd.f32 0.0, %v938
    %v940 = vpop.f32.mrf.mxu0
    %941 = vmatprep.mubr.f32.mxu0 0.0
    %942 = vmatmul.mubr.f32.gmra.mxu0 %v864
    %v943 = vpop.f32.mrf.mxu0
    %v944 = vadd.f32 0.0, %v943
    %v945 = vpop.f32.mrf.mxu0
    %946 = vmatprep.mubr.f32.mxu0 0.0
    %947 = vmatmul.mubr.f32.gmra.mxu0 %v867
    %v948 = vpop.f32.mrf.mxu0
    %v949 = vadd.f32 0.0, %v948
    %v950 = vpop.f32.mrf.mxu0
    %951 = vmatprep.mubr.f32.mxu0 0.0
    %952 = vmatmul.mubr.f32.gmra.mxu0 %v870
    %v953 = vpop.f32.mrf.mxu0
    %v954 = vadd.f32 0.0, %v953
    %v955 = vpop.f32.mrf.mxu0
    %956 = vdwg.mxu0
    %v958 = vsel %vm156, %v457, 0
    %v961 = vsel %vm156, %v459, 0
    %v964 = vsel %vm156, %v461, 0
    %v967 = vsel %vm156, %v463, 0
    %969 = vmatprep.subr.mxu0 0.0
    %970 = vmatpush1.msra.mxu0 0.0
    %971 = vmatprep.subr.mxu0 0.0
    %972 = vmatpush1.msra.mxu0 0.0
    %973 = vmatprep.subr.mxu0 0.0
    %974 = vmatpush1.msra.mxu0 0.0
    %975 = vmatprep.subr.mxu0 0.0
    %976 = vmatpush1.msra.mxu0 0.0
    %977 = vmatprep.subr.mxu0 0.0
    %978 = vmatpush1.msra.mxu0 0.0
    %979 = vmatprep.subr.mxu0 0.0
    %980 = vmatpush1.msra.mxu0 0.0
    %981 = vmatprep.subr.mxu0 0.0
    %982 = vmatpush1.msra.mxu0 0.0
    %983 = vmatprep.subr.mxu0 0.0
    %984 = vmatpush1.msra.mxu0 0.0
    %985 = vmatprep.subr.mxu0 0.0
    %986 = vmatpush1.msra.mxu0 0.0
    %987 = vmatprep.subr.mxu0 0.0
    %988 = vmatpush1.msra.mxu0 0.0
    %989 = vmatprep.subr.mxu0 0.0
    %990 = vmatpush1.msra.mxu0 0.0
    %991 = vmatprep.subr.mxu0 0.0
    %992 = vmatpush1.msra.mxu0 0.0
    %993 = vmatprep.subr.mxu0 0.0
    %994 = vmatpush1.msra.mxu0 %v546
    %995 = vmatprep.subr.mxu0 0.0
    %996 = vmatpush1.msra.mxu0 %v541
    %997 = vmatprep.subr.mxu0 0.0
    %998 = vmatpush1.msra.mxu0 %v536
    %999 = vmatprep.subr.mxu0 0.0
    %1000 = vmatpush1.msra.mxu0 %v531
    %1001 = vmatprep.subr.mxu0 0.0
    %1002 = vmatpush2.msra.mxu0 0.0
    %1003 = vmatprep.subr.mxu0 0.0
    %1004 = vmatpush2.msra.mxu0 0.0
    %1005 = vmatprep.subr.mxu0 0.0
    %1006 = vmatpush2.msra.mxu0 0.0
    %1007 = vmatprep.subr.mxu0 0.0
    %1008 = vmatpush2.msra.mxu0 0.0
    %1009 = vmatprep.subr.mxu0 0.0
    %1010 = vmatpush2.msra.mxu0 0.0
    %1011 = vmatprep.subr.mxu0 0.0
    %1012 = vmatpush2.msra.mxu0 0.0
    %1013 = vmatprep.subr.mxu0 0.0
    %1014 = vmatpush2.msra.mxu0 0.0
    %1015 = vmatprep.subr.mxu0 0.0
    %1016 = vmatpush2.msra.mxu0 0.0
    %1017 = vmatprep.subr.mxu0 0.0
    %1018 = vmatpush2.msra.mxu0 0.0
    %1019 = vmatprep.subr.mxu0 0.0
    %1020 = vmatpush2.msra.mxu0 0.0
    %1021 = vmatprep.subr.mxu0 0.0
    %1022 = vmatpush2.msra.mxu0 0.0
    %1023 = vmatprep.subr.mxu0 0.0
    %1024 = vmatpush2.msra.mxu0 0.0
    %1025 = vmatprep.subr.mxu0 0.0
    %1026 = vmatpush2.msra.mxu0 0.0
    %1027 = vmatprep.subr.mxu0 0.0
    %1028 = vmatpush2.msra.mxu0 0.0
    %1029 = vmatprep.subr.mxu0 0.0
    %1030 = vmatpush2.msra.mxu0 0.0
    %1031 = vmatprep.subr.mxu0 0.0
    %1032 = vmatpush2.msra.mxu0 0.0
    %1033 = vmatprep.mubr.f32.mxu0 0.0
    %1034 = vmatmul.mubr.f32.gmra.mxu0 %v958
    %v1035 = vpop.f32.mrf.mxu0
    %v1036 = vadd.f32 %v939, %v1035
    %v1037 = vpop.f32.mrf.mxu0
    %1038 = vmatprep.mubr.f32.mxu0 0.0
    %1039 = vmatmul.mubr.f32.gmra.mxu0 %v961
    %v1040 = vpop.f32.mrf.mxu0
    %v1041 = vadd.f32 %v944, %v1040
    %v1042 = vpop.f32.mrf.mxu0
    %1043 = vmatprep.mubr.f32.mxu0 0.0
    %1044 = vmatmul.mubr.f32.gmra.mxu0 %v964
    %v1045 = vpop.f32.mrf.mxu0
    %v1046 = vadd.f32 %v949, %v1045
    %v1047 = vpop.f32.mrf.mxu0
    %1048 = vmatprep.mubr.f32.mxu0 0.0
    %1049 = vmatmul.mubr.f32.gmra.mxu0 %v967
    %v1050 = vpop.f32.mrf.mxu0
    %v1051 = vadd.f32 %v954, %v1050
    %v1052 = vpop.f32.mrf.mxu0
    %1053 = vdwg.mxu0
    %1054 = vmatprep.subr.mxu0 0.0
    %1055 = vmatpush1.msra.mxu0 0.0
    %1056 = vmatprep.subr.mxu0 0.0
    %1057 = vmatpush1.msra.mxu0 0.0
    %1058 = vmatprep.subr.mxu0 0.0
    %1059 = vmatpush1.msra.mxu0 0.0
    %1060 = vmatprep.subr.mxu0 0.0
    %1061 = vmatpush1.msra.mxu0 0.0
    %1062 = vmatprep.subr.mxu0 0.0
    %1063 = vmatpush1.msra.mxu0 0.0
    %1064 = vmatprep.subr.mxu0 0.0
    %1065 = vmatpush1.msra.mxu0 0.0
    %1066 = vmatprep.subr.mxu0 0.0
    %1067 = vmatpush1.msra.mxu0 0.0
    %1068 = vmatprep.subr.mxu0 0.0
    %1069 = vmatpush1.msra.mxu0 0.0
    %1070 = vmatprep.subr.mxu0 0.0
    %1071 = vmatpush1.msra.mxu0 0.0
    %1072 = vmatprep.subr.mxu0 0.0
    %1073 = vmatpush1.msra.mxu0 0.0
    %1074 = vmatprep.subr.mxu0 0.0
    %1075 = vmatpush1.msra.mxu0 0.0
    %1076 = vmatprep.subr.mxu0 0.0
    %1077 = vmatpush1.msra.mxu0 0.0
    %1078 = vmatprep.subr.mxu0 0.0
    %1079 = vmatpush1.msra.mxu0 %v119
    %1080 = vmatprep.subr.mxu0 0.0
    %1081 = vmatpush1.msra.mxu0 %v118
    %1082 = vmatprep.subr.mxu0 0.0
    %1083 = vmatpush1.msra.mxu0 %v117
    %1084 = vmatprep.subr.mxu0 0.0
    %1085 = vmatpush1.msra.mxu0 %v116
    %1086 = vmatprep.subr.mxu0 0.0
    %1087 = vmatpush2.msra.mxu0 0.0
    %1088 = vmatprep.subr.mxu0 0.0
    %1089 = vmatpush2.msra.mxu0 0.0
    %1090 = vmatprep.subr.mxu0 0.0
    %1091 = vmatpush2.msra.mxu0 0.0
    %1092 = vmatprep.subr.mxu0 0.0
    %1093 = vmatpush2.msra.mxu0 0.0
    %1094 = vmatprep.subr.mxu0 0.0
    %1095 = vmatpush2.msra.mxu0 0.0
    %1096 = vmatprep.subr.mxu0 0.0
    %1097 = vmatpush2.msra.mxu0 0.0
    %1098 = vmatprep.subr.mxu0 0.0
    %1099 = vmatpush2.msra.mxu0 0.0
    %1100 = vmatprep.subr.mxu0 0.0
    %1101 = vmatpush2.msra.mxu0 0.0
    %1102 = vmatprep.subr.mxu0 0.0
    %1103 = vmatpush2.msra.mxu0 0.0
    %1104 = vmatprep.subr.mxu0 0.0
    %1105 = vmatpush2.msra.mxu0 0.0
    %1106 = vmatprep.subr.mxu0 0.0
    %1107 = vmatpush2.msra.mxu0 0.0
    %1108 = vmatprep.subr.mxu0 0.0
    %1109 = vmatpush2.msra.mxu0 0.0
    %1110 = vmatprep.subr.mxu0 0.0
    %1111 = vmatpush2.msra.mxu0 0.0
    %1112 = vmatprep.subr.mxu0 0.0
    %1113 = vmatpush2.msra.mxu0 0.0
    %1114 = vmatprep.subr.mxu0 0.0
    %1115 = vmatpush2.msra.mxu0 0.0
    %1116 = vmatprep.subr.mxu0 0.0
    %1117 = vmatpush2.msra.mxu0 0.0
    %1118 = vmatprep.mubr.f32.mxu0 0.0
    %1119 = vmatmul.mubr.f32.gmra.mxu0 %v227
    %v1120 = vpop.f32.mrf.mxu0
    %v1121 = vadd.f32 0.0, %v1120
    %v1122 = vpop.f32.mrf.mxu0
    %1123 = vmatprep.mubr.f32.mxu0 0.0
    %1124 = vmatmul.mubr.f32.gmra.mxu0 %v230
    %v1125 = vpop.f32.mrf.mxu0
    %v1126 = vadd.f32 0.0, %v1125
    %v1127 = vpop.f32.mrf.mxu0
    %1128 = vmatprep.mubr.f32.mxu0 0.0
    %1129 = vmatmul.mubr.f32.gmra.mxu0 %v233
    %v1130 = vpop.f32.mrf.mxu0
    %v1131 = vadd.f32 0.0, %v1130
    %v1132 = vpop.f32.mrf.mxu0
    %1133 = vmatprep.mubr.f32.mxu0 0.0
    %1134 = vmatmul.mubr.f32.gmra.mxu0 %v236
    %v1135 = vpop.f32.mrf.mxu0
    %v1136 = vadd.f32 0.0, %v1135
    %v1137 = vpop.f32.mrf.mxu0
    %1138 = vdwg.mxu0
    %v1140 = vsel %vm156, %v1121, 0
    %v1143 = vsel %vm156, %v1126, 0
    %v1146 = vsel %vm156, %v1131, 0
    %v1149 = vsel %vm156, %v1136, 0
    %1151 = vmatprep.subr.mxu0 0.0
    %1152 = vmatpush1.xpose.msra.mxu0 0.0
    %1153 = vmatprep.subr.mxu0 0.0
    %1154 = vmatpush1.xpose.msra.mxu0 0.0
    %1155 = vmatprep.subr.mxu0 0.0
    %1156 = vmatpush1.xpose.msra.mxu0 0.0
    %1157 = vmatprep.subr.mxu0 0.0
    %1158 = vmatpush1.xpose.msra.mxu0 0.0
    %1159 = vmatprep.subr.mxu0 0.0
    %1160 = vmatpush1.xpose.msra.mxu0 0.0
    %1161 = vmatprep.subr.mxu0 0.0
    %1162 = vmatpush1.xpose.msra.mxu0 0.0
    %1163 = vmatprep.subr.mxu0 0.0
    %1164 = vmatpush1.xpose.msra.mxu0 0.0
    %1165 = vmatprep.subr.mxu0 0.0
    %1166 = vmatpush1.xpose.msra.mxu0 0.0
    %1167 = vmatprep.subr.mxu0 0.0
    %1168 = vmatpush1.xpose.msra.mxu0 0.0
    %1169 = vmatprep.subr.mxu0 0.0
    %1170 = vmatpush1.xpose.msra.mxu0 0.0
    %1171 = vmatprep.subr.mxu0 0.0
    %1172 = vmatpush1.xpose.msra.mxu0 0.0
    %1173 = vmatprep.subr.mxu0 0.0
    %1174 = vmatpush1.xpose.msra.mxu0 0.0
    %1175 = vmatprep.subr.mxu0 0.0
    %1176 = vmatpush1.xpose.msra.mxu0 %v236
    %1177 = vmatprep.subr.mxu0 0.0
    %1178 = vmatpush1.xpose.msra.mxu0 %v233
    %1179 = vmatprep.subr.mxu0 0.0
    %1180 = vmatpush1.xpose.msra.mxu0 %v230
    %1181 = vmatprep.subr.mxu0 0.0
    %1182 = vmatpush1.xpose.msra.mxu0 %v227
    %1183 = vmatprep.subr.mxu0 0.0
    %1184 = vmatpush2.xpose.msra.mxu0 0.0
    %1185 = vmatprep.subr.mxu0 0.0
    %1186 = vmatpush2.xpose.msra.mxu0 0.0
    %1187 = vmatprep.subr.mxu0 0.0
    %1188 = vmatpush2.xpose.msra.mxu0 0.0
    %1189 = vmatprep.subr.mxu0 0.0
    %1190 = vmatpush2.xpose.msra.mxu0 0.0
    %1191 = vmatprep.subr.mxu0 0.0
    %1192 = vmatpush2.xpose.msra.mxu0 0.0
    %1193 = vmatprep.subr.mxu0 0.0
    %1194 = vmatpush2.xpose.msra.mxu0 0.0
    %1195 = vmatprep.subr.mxu0 0.0
    %1196 = vmatpush2.xpose.msra.mxu0 0.0
    %1197 = vmatprep.subr.mxu0 0.0
    %1198 = vmatpush2.xpose.msra.mxu0 0.0
    %1199 = vmatprep.subr.mxu0 0.0
    %1200 = vmatpush2.xpose.msra.mxu0 0.0
    %1201 = vmatprep.subr.mxu0 0.0
    %1202 = vmatpush2.xpose.msra.mxu0 0.0
    %1203 = vmatprep.subr.mxu0 0.0
    %1204 = vmatpush2.xpose.msra.mxu0 0.0
    %1205 = vmatprep.subr.mxu0 0.0
    %1206 = vmatpush2.xpose.msra.mxu0 0.0
    %1207 = vmatprep.subr.mxu0 0.0
    %1208 = vmatpush2.xpose.msra.mxu0 0.0
    %1209 = vmatprep.subr.mxu0 0.0
    %1210 = vmatpush2.xpose.msra.mxu0 0.0
    %1211 = vmatprep.subr.mxu0 0.0
    %1212 = vmatpush2.xpose.msra.mxu0 0.0
    %1213 = vmatprep.subr.mxu0 0.0
    %1214 = vmatpush2.xpose.msra.mxu0 0.0
    %1215 = vmatprep.mubr.f32.mxu0 0.0
    %1216 = vmatmul.mubr.f32.gmra.mxu0 %v1140
    %v1217 = vpop.f32.mrf.mxu0
    %v1218 = vadd.f32 %v103, %v1217
    %v1219 = vpop.f32.mrf.mxu0
    %1220 = vmatprep.mubr.f32.mxu0 0.0
    %1221 = vmatmul.mubr.f32.gmra.mxu0 %v1143
    %v1222 = vpop.f32.mrf.mxu0
    %v1223 = vadd.f32 %v104, %v1222
    %v1224 = vpop.f32.mrf.mxu0
    %1225 = vmatprep.mubr.f32.mxu0 0.0
    %1226 = vmatmul.mubr.f32.gmra.mxu0 %v1146
    %v1227 = vpop.f32.mrf.mxu0
    %v1228 = vadd.f32 %v105, %v1227
    %v1229 = vpop.f32.mrf.mxu0
    %1230 = vmatprep.mubr.f32.mxu0 0.0
    %1231 = vmatmul.mubr.f32.gmra.mxu0 %v1149
    %v1232 = vpop.f32.mrf.mxu0
    %v1233 = vadd.f32 %v106, %v1232
    %v1234 = vpop.f32.mrf.mxu0
    %1235 = vdwg.mxu0
    %v1236 = vsel %vm156, %v1218, -inf
    %1237 = vmax.xlane.f32.xlu0 %v1236
    %v1238 = vpop.xlane.xlu0 %1237
    %v1239 = vsel %vm156, %v1223, -inf
    %1240 = vmax.xlane.f32.xlu0 %v1239
    %v1241 = vpop.xlane.xlu0 %1240
    %v1242 = vsel %vm156, %v1228, -inf
    %1243 = vmax.xlane.f32.xlu0 %v1242
    %v1244 = vpop.xlane.xlu0 %1243
    %v1245 = vsel %vm156, %v1233, -inf
    %1246 = vmax.xlane.f32.xlu0 %v1245
    %v1247 = vpop.xlane.xlu0 %1246
    %v1248 = vsub.f32 %v1218, %v1238
    %v1249 = vsub.f32 %v1223, %v1241
    %v1250 = vsub.f32 %v1228, %v1244
    %v1251 = vsub.f32 %v1233, %v1247
    %v1252 = vmul.f32 %v1248, 1.442695
    %v1253 = vpow.pop %v1252
    %v1254 = vmul.f32 %v1249, 1.442695
    %v1255 = vpow.pop %v1254
    %v1256 = vmul.f32 %v1250, 1.442695
    %v1257 = vpow.pop %v1256
    %v1258 = vmul.f32 %v1251, 1.442695
    %v1259 = vpow.pop %v1258
    %v1260 = vsel %vm156, %v1253, 0.0
    %1261 = vadd.xlane.f32.xlu0 %v1260
    %v1262 = vpop.xlane.xlu0 %1261
    %v1263 = vsel %vm156, %v1255, 0.0
    %1264 = vadd.xlane.f32.xlu0 %v1263
    %v1265 = vpop.xlane.xlu0 %1264
    %v1266 = vsel %vm156, %v1257, 0.0
    %1267 = vadd.xlane.f32.xlu0 %v1266
    %v1268 = vpop.xlane.xlu0 %1267
    %v1269 = vsel %vm156, %v1259, 0.0
    %1270 = vadd.xlane.f32.xlu0 %v1269
    %v1271 = vpop.xlane.xlu0 %1270
    %v1272 = vrcp.pop %v1262
    %v1273 = vmul.f32 %v1253, %v1272
    %v1274 = vrcp.pop %v1265
    %v1275 = vmul.f32 %v1255, %v1274
    %v1276 = vrcp.pop %v1268
    %v1277 = vmul.f32 %v1257, %v1276
    %v1278 = vrcp.pop %v1271
    %v1279 = vmul.f32 %v1259, %v1278
    %1280 = vmatprep.subr.mxu0 0.0
    %1281 = vmatpush1.msra.mxu0 0.0
    %1282 = vmatprep.subr.mxu0 0.0
    %1283 = vmatpush1.msra.mxu0 0.0
    %1284 = vmatprep.subr.mxu0 0.0
    %1285 = vmatpush1.msra.mxu0 0.0
    %1286 = vmatprep.subr.mxu0 0.0
    %1287 = vmatpush1.msra.mxu0 0.0
    %1288 = vmatprep.subr.mxu0 0.0
    %1289 = vmatpush1.msra.mxu0 0.0
    %1290 = vmatprep.subr.mxu0 0.0
    %1291 = vmatpush1.msra.mxu0 0.0
    %1292 = vmatprep.subr.mxu0 0.0
    %1293 = vmatpush1.msra.mxu0 0.0
    %1294 = vmatprep.subr.mxu0 0.0
    %1295 = vmatpush1.msra.mxu0 0.0
    %1296 = vmatprep.subr.mxu0 0.0
    %1297 = vmatpush1.msra.mxu0 0.0
    %1298 = vmatprep.subr.mxu0 0.0
    %1299 = vmatpush1.msra.mxu0 0.0
    %1300 = vmatprep.subr.mxu0 0.0
    %1301 = vmatpush1.msra.mxu0 0.0
    %1302 = vmatprep.subr.mxu0 0.0
    %1303 = vmatpush1.msra.mxu0 0.0
    %1304 = vmatprep.subr.mxu0 0.0
    %1305 = vmatpush1.msra.mxu0 %v135
    %1306 = vmatprep.subr.mxu0 0.0
    %1307 = vmatpush1.msra.mxu0 %v134
    %1308 = vmatprep.subr.mxu0 0.0
    %1309 = vmatpush1.msra.mxu0 %v133
    %1310 = vmatprep.subr.mxu0 0.0
    %1311 = vmatpush1.msra.mxu0 %v132
    %1312 = vmatprep.subr.mxu0 0.0
    %1313 = vmatpush2.msra.mxu0 0.0
    %1314 = vmatprep.subr.mxu0 0.0
    %1315 = vmatpush2.msra.mxu0 0.0
    %1316 = vmatprep.subr.mxu0 0.0
    %1317 = vmatpush2.msra.mxu0 0.0
    %1318 = vmatprep.subr.mxu0 0.0
    %1319 = vmatpush2.msra.mxu0 0.0
    %1320 = vmatprep.subr.mxu0 0.0
    %1321 = vmatpush2.msra.mxu0 0.0
    %1322 = vmatprep.subr.mxu0 0.0
    %1323 = vmatpush2.msra.mxu0 0.0
    %1324 = vmatprep.subr.mxu0 0.0
    %1325 = vmatpush2.msra.mxu0 0.0
    %1326 = vmatprep.subr.mxu0 0.0
    %1327 = vmatpush2.msra.mxu0 0.0
    %1328 = vmatprep.subr.mxu0 0.0
    %1329 = vmatpush2.msra.mxu0 0.0
    %1330 = vmatprep.subr.mxu0 0.0
    %1331 = vmatpush2.msra.mxu0 0.0
    %1332 = vmatprep.subr.mxu0 0.0
    %1333 = vmatpush2.msra.mxu0 0.0
    %1334 = vmatprep.subr.mxu0 0.0
    %1335 = vmatpush2.msra.mxu0 0.0
    %1336 = vmatprep.subr.mxu0 0.0
    %1337 = vmatpush2.msra.mxu0 0.0
    %1338 = vmatprep.subr.mxu0 0.0
    %1339 = vmatpush2.msra.mxu0 0.0
    %1340 = vmatprep.subr.mxu0 0.0
    %1341 = vmatpush2.msra.mxu0 0.0
    %1342 = vmatprep.subr.mxu0 0.0
    %1343 = vmatpush2.msra.mxu0 0.0
    %1344 = vmatprep.mubr.f32.mxu0 0.0
    %1345 = vmatmul.mubr.f32.gmra.mxu0 %v227
    %v1346 = vpop.f32.mrf.mxu0
    %v1347 = vadd.f32 0.0, %v1346
    %v1348 = vpop.f32.mrf.mxu0
    %1349 = vmatprep.mubr.f32.mxu0 0.0
    %1350 = vmatmul.mubr.f32.gmra.mxu0 %v230
    %v1351 = vpop.f32.mrf.mxu0
    %v1352 = vadd.f32 0.0, %v1351
    %v1353 = vpop.f32.mrf.mxu0
    %1354 = vmatprep.mubr.f32.mxu0 0.0
    %1355 = vmatmul.mubr.f32.gmra.mxu0 %v233
    %v1356 = vpop.f32.mrf.mxu0
    %v1357 = vadd.f32 0.0, %v1356
    %v1358 = vpop.f32.mrf.mxu0
    %1359 = vmatprep.mubr.f32.mxu0 0.0
    %1360 = vmatmul.mubr.f32.gmra.mxu0 %v236
    %v1361 = vpop.f32.mrf.mxu0
    %v1362 = vadd.f32 0.0, %v1361
    %v1363 = vpop.f32.mrf.mxu0
    %1364 = vdwg.mxu0
    %v1366 = vsel %vm156, %v1273, 0
    %v1369 = vsel %vm156, %v1275, 0
    %v1372 = vsel %vm156, %v1277, 0
    %v1375 = vsel %vm156, %v1279, 0
    %1377 = vmatprep.subr.mxu0 0.0
    %1378 = vmatpush1.msra.mxu0 0.0
    %1379 = vmatprep.subr.mxu0 0.0
    %1380 = vmatpush1.msra.mxu0 0.0
    %1381 = vmatprep.subr.mxu0 0.0
    %1382 = vmatpush1.msra.mxu0 0.0
    %1383 = vmatprep.subr.mxu0 0.0
    %1384 = vmatpush1.msra.mxu0 0.0
    %1385 = vmatprep.subr.mxu0 0.0
    %1386 = vmatpush1.msra.mxu0 0.0
    %1387 = vmatprep.subr.mxu0 0.0
    %1388 = vmatpush1.msra.mxu0 0.0
    %1389 = vmatprep.subr.mxu0 0.0
    %1390 = vmatpush1.msra.mxu0 0.0
    %1391 = vmatprep.subr.mxu0 0.0
    %1392 = vmatpush1.msra.mxu0 0.0
    %1393 = vmatprep.subr.mxu0 0.0
    %1394 = vmatpush1.msra.mxu0 0.0
    %1395 = vmatprep.subr.mxu0 0.0
    %1396 = vmatpush1.msra.mxu0 0.0
    %1397 = vmatprep.subr.mxu0 0.0
    %1398 = vmatpush1.msra.mxu0 0.0
    %1399 = vmatprep.subr.mxu0 0.0
    %1400 = vmatpush1.msra.mxu0 0.0
    %1401 = vmatprep.subr.mxu0 0.0
    %1402 = vmatpush1.msra.mxu0 %v1362
    %1403 = vmatprep.subr.mxu0 0.0
    %1404 = vmatpush1.msra.mxu0 %v1357
    %1405 = vmatprep.subr.mxu0 0.0
    %1406 = vmatpush1.msra.mxu0 %v1352
    %1407 = vmatprep.subr.mxu0 0.0
    %1408 = vmatpush1.msra.mxu0 %v1347
    %1409 = vmatprep.subr.mxu0 0.0
    %1410 = vmatpush2.msra.mxu0 0.0
    %1411 = vmatprep.subr.mxu0 0.0
    %1412 = vmatpush2.msra.mxu0 0.0
    %1413 = vmatprep.subr.mxu0 0.0
    %1414 = vmatpush2.msra.mxu0 0.0
    %1415 = vmatprep.subr.mxu0 0.0
    %1416 = vmatpush2.msra.mxu0 0.0
    %1417 = vmatprep.subr.mxu0 0.0
    %1418 = vmatpush2.msra.mxu0 0.0
    %1419 = vmatprep.subr.mxu0 0.0
    %1420 = vmatpush2.msra.mxu0 0.0
    %1421 = vmatprep.subr.mxu0 0.0
    %1422 = vmatpush2.msra.mxu0 0.0
    %1423 = vmatprep.subr.mxu0 0.0
    %1424 = vmatpush2.msra.mxu0 0.0
    %1425 = vmatprep.subr.mxu0 0.0
    %1426 = vmatpush2.msra.mxu0 0.0
    %1427 = vmatprep.subr.mxu0 0.0
    %1428 = vmatpush2.msra.mxu0 0.0
    %1429 = vmatprep.subr.mxu0 0.0
    %1430 = vmatpush2.msra.mxu0 0.0
    %1431 = vmatprep.subr.mxu0 0.0
    %1432 = vmatpush2.msra.mxu0 0.0
    %1433 = vmatprep.subr.mxu0 0.0
    %1434 = vmatpush2.msra.mxu0 0.0
    %1435 = vmatprep.subr.mxu0 0.0
    %1436 = vmatpush2.msra.mxu0 0.0
    %1437 = vmatprep.subr.mxu0 0.0
    %1438 = vmatpush2.msra.mxu0 0.0
    %1439 = vmatprep.subr.mxu0 0.0
    %1440 = vmatpush2.msra.mxu0 0.0
    %1441 = vmatprep.mubr.f32.mxu0 0.0
    %1442 = vmatmul.mubr.f32.gmra.mxu0 %v1366
    %v1443 = vpop.f32.mrf.mxu0
    %v1444 = vadd.f32 0.0, %v1443
    %v1445 = vpop.f32.mrf.mxu0
    %1446 = vmatprep.mubr.f32.mxu0 0.0
    %1447 = vmatmul.mubr.f32.gmra.mxu0 %v1369
    %v1448 = vpop.f32.mrf.mxu0
    %v1449 = vadd.f32 0.0, %v1448
    %v1450 = vpop.f32.mrf.mxu0
    %1451 = vmatprep.mubr.f32.mxu0 0.0
    %1452 = vmatmul.mubr.f32.gmra.mxu0 %v1372
    %v1453 = vpop.f32.mrf.mxu0
    %v1454 = vadd.f32 0.0, %v1453
    %v1455 = vpop.f32.mrf.mxu0
    %1456 = vmatprep.mubr.f32.mxu0 0.0
    %1457 = vmatmul.mubr.f32.gmra.mxu0 %v1375
    %v1458 = vpop.f32.mrf.mxu0
    %v1459 = vadd.f32 0.0, %v1458
    %v1460 = vpop.f32.mrf.mxu0
    %1461 = vdwg.mxu0
    %v1462 = vadd.f32 %v1036, %v1444
    %v1463 = vadd.f32 %v1041, %v1449
    %v1464 = vadd.f32 %v1046, %v1454
    %v1465 = vadd.f32 %v1051, %v1459
    %1466 = vmatprep.subr.mxu0 0.0
    %1467 = vmatpush1.msra.mxu0 0.0
    %1468 = vmatprep.subr.mxu0 0.0
    %1469 = vmatpush1.msra.mxu0 0.0
    %1470 = vmatprep.subr.mxu0 0.0
    %1471 = vmatpush1.msra.mxu0 0.0
    %1472 = vmatprep.subr.mxu0 0.0
    %1473 = vmatpush1.msra.mxu0 0.0
    %1474 = vmatprep.subr.mxu0 0.0
    %1475 = vmatpush1.msra.mxu0 0.0
    %1476 = vmatprep.subr.mxu0 0.0
    %1477 = vmatpush1.msra.mxu0 0.0
    %1478 = vmatprep.subr.mxu0 0.0
    %1479 = vmatpush1.msra.mxu0 0.0
    %1480 = vmatprep.subr.mxu0 0.0
    %1481 = vmatpush1.msra.mxu0 0.0
    %1482 = vmatprep.subr.mxu0 0.0
    %1483 = vmatpush1.msra.mxu0 0.0
    %1484 = vmatprep.subr.mxu0 0.0
    %1485 = vmatpush1.msra.mxu0 0.0
    %1486 = vmatprep.subr.mxu0 0.0
    %1487 = vmatpush1.msra.mxu0 0.0
    %1488 = vmatprep.subr.mxu0 0.0
    %1489 = vmatpush1.msra.mxu0 0.0
    %1490 = vmatprep.subr.mxu0 0.0
    %1491 = vmatpush1.msra.mxu0 %v123
    %1492 = vmatprep.subr.mxu0 0.0
    %1493 = vmatpush1.msra.mxu0 %v122
    %1494 = vmatprep.subr.mxu0 0.0
    %1495 = vmatpush1.msra.mxu0 %v121
    %1496 = vmatprep.subr.mxu0 0.0
    %1497 = vmatpush1.msra.mxu0 %v120
    %1498 = vmatprep.subr.mxu0 0.0
    %1499 = vmatpush2.msra.mxu0 0.0
    %1500 = vmatprep.subr.mxu0 0.0
    %1501 = vmatpush2.msra.mxu0 0.0
    %1502 = vmatprep.subr.mxu0 0.0
    %1503 = vmatpush2.msra.mxu0 0.0
    %1504 = vmatprep.subr.mxu0 0.0
    %1505 = vmatpush2.msra.mxu0 0.0
    %1506 = vmatprep.subr.mxu0 0.0
    %1507 = vmatpush2.msra.mxu0 0.0
    %1508 = vmatprep.subr.mxu0 0.0
    %1509 = vmatpush2.msra.mxu0 0.0
    %1510 = vmatprep.subr.mxu0 0.0
    %1511 = vmatpush2.msra.mxu0 0.0
    %1512 = vmatprep.subr.mxu0 0.0
    %1513 = vmatpush2.msra.mxu0 0.0
    %1514 = vmatprep.subr.mxu0 0.0
    %1515 = vmatpush2.msra.mxu0 0.0
    %1516 = vmatprep.subr.mxu0 0.0
    %1517 = vmatpush2.msra.mxu0 0.0
    %1518 = vmatprep.subr.mxu0 0.0
    %1519 = vmatpush2.msra.mxu0 0.0
    %1520 = vmatprep.subr.mxu0 0.0
    %1521 = vmatpush2.msra.mxu0 0.0
    %1522 = vmatprep.subr.mxu0 0.0
    %1523 = vmatpush2.msra.mxu0 0.0
    %1524 = vmatprep.subr.mxu0 0.0
    %1525 = vmatpush2.msra.mxu0 0.0
    %1526 = vmatprep.subr.mxu0 0.0
    %1527 = vmatpush2.msra.mxu0 0.0
    %1528 = vmatprep.subr.mxu0 0.0
    %1529 = vmatpush2.msra.mxu0 0.0
    %1530 = vmatprep.mubr.f32.mxu0 0.0
    %1531 = vmatmul.mubr.f32.gmra.mxu0 %v227
    %v1532 = vpop.f32.mrf.mxu0
    %v1533 = vadd.f32 0.0, %v1532
    %v1534 = vpop.f32.mrf.mxu0
    %1535 = vmatprep.mubr.f32.mxu0 0.0
    %1536 = vmatmul.mubr.f32.gmra.mxu0 %v230
    %v1537 = vpop.f32.mrf.mxu0
    %v1538 = vadd.f32 0.0, %v1537
    %v1539 = vpop.f32.mrf.mxu0
    %1540 = vmatprep.mubr.f32.mxu0 0.0
    %1541 = vmatmul.mubr.f32.gmra.mxu0 %v233
    %v1542 = vpop.f32.mrf.mxu0
    %v1543 = vadd.f32 0.0, %v1542
    %v1544 = vpop.f32.mrf.mxu0
    %1545 = vmatprep.mubr.f32.mxu0 0.0
    %1546 = vmatmul.mubr.f32.gmra.mxu0 %v236
    %v1547 = vpop.f32.mrf.mxu0
    %v1548 = vadd.f32 0.0, %v1547
    %v1549 = vpop.f32.mrf.mxu0
    %1550 = vdwg.mxu0
    %v1552 = vsel %vm156, %v1533, 0
    %v1555 = vsel %vm156, %v1538, 0
    %v1558 = vsel %vm156, %v1543, 0
    %v1561 = vsel %vm156, %v1548, 0
    %1563 = vmatprep.subr.mxu0 0.0
    %1564 = vmatpush1.xpose.msra.mxu0 0.0
    %1565 = vmatprep.subr.mxu0 0.0
    %1566 = vmatpush1.xpose.msra.mxu0 0.0
    %1567 = vmatprep.subr.mxu0 0.0
    %1568 = vmatpush1.xpose.msra.mxu0 0.0
    %1569 = vmatprep.subr.mxu0 0.0
    %1570 = vmatpush1.xpose.msra.mxu0 0.0
    %1571 = vmatprep.subr.mxu0 0.0
    %1572 = vmatpush1.xpose.msra.mxu0 0.0
    %1573 = vmatprep.subr.mxu0 0.0
    %1574 = vmatpush1.xpose.msra.mxu0 0.0
    %1575 = vmatprep.subr.mxu0 0.0
    %1576 = vmatpush1.xpose.msra.mxu0 0.0
    %1577 = vmatprep.subr.mxu0 0.0
    %1578 = vmatpush1.xpose.msra.mxu0 0.0
    %1579 = vmatprep.subr.mxu0 0.0
    %1580 = vmatpush1.xpose.msra.mxu0 0.0
    %1581 = vmatprep.subr.mxu0 0.0
    %1582 = vmatpush1.xpose.msra.mxu0 0.0
    %1583 = vmatprep.subr.mxu0 0.0
    %1584 = vmatpush1.xpose.msra.mxu0 0.0
    %1585 = vmatprep.subr.mxu0 0.0
    %1586 = vmatpush1.xpose.msra.mxu0 0.0
    %1587 = vmatprep.subr.mxu0 0.0
    %1588 = vmatpush1.xpose.msra.mxu0 %v236
    %1589 = vmatprep.subr.mxu0 0.0
    %1590 = vmatpush1.xpose.msra.mxu0 %v233
    %1591 = vmatprep.subr.mxu0 0.0
    %1592 = vmatpush1.xpose.msra.mxu0 %v230
    %1593 = vmatprep.subr.mxu0 0.0
    %1594 = vmatpush1.xpose.msra.mxu0 %v227
    %1595 = vmatprep.subr.mxu0 0.0
    %1596 = vmatpush2.xpose.msra.mxu0 0.0
    %1597 = vmatprep.subr.mxu0 0.0
    %1598 = vmatpush2.xpose.msra.mxu0 0.0
    %1599 = vmatprep.subr.mxu0 0.0
    %1600 = vmatpush2.xpose.msra.mxu0 0.0
    %1601 = vmatprep.subr.mxu0 0.0
    %1602 = vmatpush2.xpose.msra.mxu0 0.0
    %1603 = vmatprep.subr.mxu0 0.0
    %1604 = vmatpush2.xpose.msra.mxu0 0.0
    %1605 = vmatprep.subr.mxu0 0.0
    %1606 = vmatpush2.xpose.msra.mxu0 0.0
    %1607 = vmatprep.subr.mxu0 0.0
    %1608 = vmatpush2.xpose.msra.mxu0 0.0
    %1609 = vmatprep.subr.mxu0 0.0
    %1610 = vmatpush2.xpose.msra.mxu0 0.0
    %1611 = vmatprep.subr.mxu0 0.0
    %1612 = vmatpush2.xpose.msra.mxu0 0.0
    %1613 = vmatprep.subr.mxu0 0.0
    %1614 = vmatpush2.xpose.msra.mxu0 0.0
    %1615 = vmatprep.subr.mxu0 0.0
    %1616 = vmatpush2.xpose.msra.mxu0 0.0
    %1617 = vmatprep.subr.mxu0 0.0
    %1618 = vmatpush2.xpose.msra.mxu0 0.0
    %1619 = vmatprep.subr.mxu0 0.0
    %1620 = vmatpush2.xpose.msra.mxu0 0.0
    %1621 = vmatprep.subr.mxu0 0.0
    %1622 = vmatpush2.xpose.msra.mxu0 0.0
    %1623 = vmatprep.subr.mxu0 0.0
    %1624 = vmatpush2.xpose.msra.mxu0 0.0
    %1625 = vmatprep.subr.mxu0 0.0
    %1626 = vmatpush2.xpose.msra.mxu0 0.0
    %1627 = vmatprep.mubr.f32.mxu0 0.0
    %1628 = vmatmul.mubr.f32.gmra.mxu0 %v1552
    %v1629 = vpop.f32.mrf.mxu0
    %v1630 = vadd.f32 %v103, %v1629
    %v1631 = vpop.f32.mrf.mxu0
    %1632 = vmatprep.mubr.f32.mxu0 0.0
    %1633 = vmatmul.mubr.f32.gmra.mxu0 %v1555
    %v1634 = vpop.f32.mrf.mxu0
    %v1635 = vadd.f32 %v104, %v1634
    %v1636 = vpop.f32.mrf.mxu0
    %1637 = vmatprep.mubr.f32.mxu0 0.0
    %1638 = vmatmul.mubr.f32.gmra.mxu0 %v1558
    %v1639 = vpop.f32.mrf.mxu0
    %v1640 = vadd.f32 %v105, %v1639
    %v1641 = vpop.f32.mrf.mxu0
    %1642 = vmatprep.mubr.f32.mxu0 0.0
    %1643 = vmatmul.mubr.f32.gmra.mxu0 %v1561
    %v1644 = vpop.f32.mrf.mxu0
    %v1645 = vadd.f32 %v106, %v1644
    %v1646 = vpop.f32.mrf.mxu0
    %1647 = vdwg.mxu0
    %v1648 = vsel %vm156, %v1630, -inf
    %1649 = vmax.xlane.f32.xlu0 %v1648
    %v1650 = vpop.xlane.xlu0 %1649
    %v1651 = vsel %vm156, %v1635, -inf
    %1652 = vmax.xlane.f32.xlu0 %v1651
    %v1653 = vpop.xlane.xlu0 %1652
    %v1654 = vsel %vm156, %v1640, -inf
    %1655 = vmax.xlane.f32.xlu0 %v1654
    %v1656 = vpop.xlane.xlu0 %1655
    %v1657 = vsel %vm156, %v1645, -inf
    %1658 = vmax.xlane.f32.xlu0 %v1657
    %v1659 = vpop.xlane.xlu0 %1658
    %v1660 = vsub.f32 %v1630, %v1650
    %v1661 = vsub.f32 %v1635, %v1653
    %v1662 = vsub.f32 %v1640, %v1656
    %v1663 = vsub.f32 %v1645, %v1659
    %v1664 = vmul.f32 %v1660, 1.442695
    %v1665 = vpow.pop %v1664
    %v1666 = vmul.f32 %v1661, 1.442695
    %v1667 = vpow.pop %v1666
    %v1668 = vmul.f32 %v1662, 1.442695
    %v1669 = vpow.pop %v1668
    %v1670 = vmul.f32 %v1663, 1.442695
    %v1671 = vpow.pop %v1670
    %v1672 = vsel %vm156, %v1665, 0.0
    %1673 = vadd.xlane.f32.xlu0 %v1672
    %v1674 = vpop.xlane.xlu0 %1673
    %v1675 = vsel %vm156, %v1667, 0.0
    %1676 = vadd.xlane.f32.xlu0 %v1675
    %v1677 = vpop.xlane.xlu0 %1676
    %v1678 = vsel %vm156, %v1669, 0.0
    %1679 = vadd.xlane.f32.xlu0 %v1678
    %v1680 = vpop.xlane.xlu0 %1679
    %v1681 = vsel %vm156, %v1671, 0.0
    %1682 = vadd.xlane.f32.xlu0 %v1681
    %v1683 = vpop.xlane.xlu0 %1682
    %v1684 = vrcp.pop %v1674
    %v1685 = vmul.f32 %v1665, %v1684
    %v1686 = vrcp.pop %v1677
    %v1687 = vmul.f32 %v1667, %v1686
    %v1688 = vrcp.pop %v1680
    %v1689 = vmul.f32 %v1669, %v1688
    %v1690 = vrcp.pop %v1683
    %v1691 = vmul.f32 %v1671, %v1690
    %1692 = vmatprep.subr.mxu0 0.0
    %1693 = vmatpush1.msra.mxu0 0.0
    %1694 = vmatprep.subr.mxu0 0.0
    %1695 = vmatpush1.msra.mxu0 0.0
    %1696 = vmatprep.subr.mxu0 0.0
    %1697 = vmatpush1.msra.mxu0 0.0
    %1698 = vmatprep.subr.mxu0 0.0
    %1699 = vmatpush1.msra.mxu0 0.0
    %1700 = vmatprep.subr.mxu0 0.0
    %1701 = vmatpush1.msra.mxu0 0.0
    %1702 = vmatprep.subr.mxu0 0.0
    %1703 = vmatpush1.msra.mxu0 0.0
    %1704 = vmatprep.subr.mxu0 0.0
    %1705 = vmatpush1.msra.mxu0 0.0
    %1706 = vmatprep.subr.mxu0 0.0
    %1707 = vmatpush1.msra.mxu0 0.0
    %1708 = vmatprep.subr.mxu0 0.0
    %1709 = vmatpush1.msra.mxu0 0.0
    %1710 = vmatprep.subr.mxu0 0.0
    %1711 = vmatpush1.msra.mxu0 0.0
    %1712 = vmatprep.subr.mxu0 0.0
    %1713 = vmatpush1.msra.mxu0 0.0
    %1714 = vmatprep.subr.mxu0 0.0
    %1715 = vmatpush1.msra.mxu0 0.0
    %1716 = vmatprep.subr.mxu0 0.0
    %1717 = vmatpush1.msra.mxu0 %v139
    %1718 = vmatprep.subr.mxu0 0.0
    %1719 = vmatpush1.msra.mxu0 %v138
    %1720 = vmatprep.subr.mxu0 0.0
    %1721 = vmatpush1.msra.mxu0 %v137
    %1722 = vmatprep.subr.mxu0 0.0
    %1723 = vmatpush1.msra.mxu0 %v136
    %1724 = vmatprep.subr.mxu0 0.0
    %1725 = vmatpush2.msra.mxu0 0.0
    %1726 = vmatprep.subr.mxu0 0.0
    %1727 = vmatpush2.msra.mxu0 0.0
    %1728 = vmatprep.subr.mxu0 0.0
    %1729 = vmatpush2.msra.mxu0 0.0
    %1730 = vmatprep.subr.mxu0 0.0
    %1731 = vmatpush2.msra.mxu0 0.0
    %1732 = vmatprep.subr.mxu0 0.0
    %1733 = vmatpush2.msra.mxu0 0.0
    %1734 = vmatprep.subr.mxu0 0.0
    %1735 = vmatpush2.msra.mxu0 0.0
    %1736 = vmatprep.subr.mxu0 0.0
    %1737 = vmatpush2.msra.mxu0 0.0
    %1738 = vmatprep.subr.mxu0 0.0
    %1739 = vmatpush2.msra.mxu0 0.0
    %1740 = vmatprep.subr.mxu0 0.0
    %1741 = vmatpush2.msra.mxu0 0.0
    %1742 = vmatprep.subr.mxu0 0.0
    %1743 = vmatpush2.msra.mxu0 0.0
    %1744 = vmatprep.subr.mxu0 0.0
    %1745 = vmatpush2.msra.mxu0 0.0
    %1746 = vmatprep.subr.mxu0 0.0
    %1747 = vmatpush2.msra.mxu0 0.0
    %1748 = vmatprep.subr.mxu0 0.0
    %1749 = vmatpush2.msra.mxu0 0.0
    %1750 = vmatprep.subr.mxu0 0.0
    %1751 = vmatpush2.msra.mxu0 0.0
    %1752 = vmatprep.subr.mxu0 0.0
    %1753 = vmatpush2.msra.mxu0 0.0
    %1754 = vmatprep.subr.mxu0 0.0
    %1755 = vmatpush2.msra.mxu0 0.0
    %1756 = vmatprep.mubr.f32.mxu0 0.0
    %1757 = vmatmul.mubr.f32.gmra.mxu0 %v227
    %v1758 = vpop.f32.mrf.mxu0
    %v1759 = vadd.f32 0.0, %v1758
    %v1760 = vpop.f32.mrf.mxu0
    %1761 = vmatprep.mubr.f32.mxu0 0.0
    %1762 = vmatmul.mubr.f32.gmra.mxu0 %v230
    %v1763 = vpop.f32.mrf.mxu0
    %v1764 = vadd.f32 0.0, %v1763
    %v1765 = vpop.f32.mrf.mxu0
    %1766 = vmatprep.mubr.f32.mxu0 0.0
    %1767 = vmatmul.mubr.f32.gmra.mxu0 %v233
    %v1768 = vpop.f32.mrf.mxu0
    %v1769 = vadd.f32 0.0, %v1768
    %v1770 = vpop.f32.mrf.mxu0
    %1771 = vmatprep.mubr.f32.mxu0 0.0
    %1772 = vmatmul.mubr.f32.gmra.mxu0 %v236
    %v1773 = vpop.f32.mrf.mxu0
    %v1774 = vadd.f32 0.0, %v1773
    %v1775 = vpop.f32.mrf.mxu0
    %1776 = vdwg.mxu0
    %v1778 = vsel %vm156, %v1685, 0
    %v1781 = vsel %vm156, %v1687, 0
    %v1784 = vsel %vm156, %v1689, 0
    %v1787 = vsel %vm156, %v1691, 0
    %1789 = vmatprep.subr.mxu0 0.0
    %1790 = vmatpush1.msra.mxu0 0.0
    %1791 = vmatprep.subr.mxu0 0.0
    %1792 = vmatpush1.msra.mxu0 0.0
    %1793 = vmatprep.subr.mxu0 0.0
    %1794 = vmatpush1.msra.mxu0 0.0
    %1795 = vmatprep.subr.mxu0 0.0
    %1796 = vmatpush1.msra.mxu0 0.0
    %1797 = vmatprep.subr.mxu0 0.0
    %1798 = vmatpush1.msra.mxu0 0.0
    %1799 = vmatprep.subr.mxu0 0.0
    %1800 = vmatpush1.msra.mxu0 0.0
    %1801 = vmatprep.subr.mxu0 0.0
    %1802 = vmatpush1.msra.mxu0 0.0
    %1803 = vmatprep.subr.mxu0 0.0
    %1804 = vmatpush1.msra.mxu0 0.0
    %1805 = vmatprep.subr.mxu0 0.0
    %1806 = vmatpush1.msra.mxu0 0.0
    %1807 = vmatprep.subr.mxu0 0.0
    %1808 = vmatpush1.msra.mxu0 0.0
    %1809 = vmatprep.subr.mxu0 0.0
    %1810 = vmatpush1.msra.mxu0 0.0
    %1811 = vmatprep.subr.mxu0 0.0
    %1812 = vmatpush1.msra.mxu0 0.0
    %1813 = vmatprep.subr.mxu0 0.0
    %1814 = vmatpush1.msra.mxu0 %v1774
    %1815 = vmatprep.subr.mxu0 0.0
    %1816 = vmatpush1.msra.mxu0 %v1769
    %1817 = vmatprep.subr.mxu0 0.0
    %1818 = vmatpush1.msra.mxu0 %v1764
    %1819 = vmatprep.subr.mxu0 0.0
    %1820 = vmatpush1.msra.mxu0 %v1759
    %1821 = vmatprep.subr.mxu0 0.0
    %1822 = vmatpush2.msra.mxu0 0.0
    %1823 = vmatprep.subr.mxu0 0.0
    %1824 = vmatpush2.msra.mxu0 0.0
    %1825 = vmatprep.subr.mxu0 0.0
    %1826 = vmatpush2.msra.mxu0 0.0
    %1827 = vmatprep.subr.mxu0 0.0
    %1828 = vmatpush2.msra.mxu0 0.0
    %1829 = vmatprep.subr.mxu0 0.0
    %1830 = vmatpush2.msra.mxu0 0.0
    %1831 = vmatprep.subr.mxu0 0.0
    %1832 = vmatpush2.msra.mxu0 0.0
    %1833 = vmatprep.subr.mxu0 0.0
    %1834 = vmatpush2.msra.mxu0 0.0
    %1835 = vmatprep.subr.mxu0 0.0
    %1836 = vmatpush2.msra.mxu0 0.0
    %1837 = vmatprep.subr.mxu0 0.0
    %1838 = vmatpush2.msra.mxu0 0.0
    %1839 = vmatprep.subr.mxu0 0.0
    %1840 = vmatpush2.msra.mxu0 0.0
    %1841 = vmatprep.subr.mxu0 0.0
    %1842 = vmatpush2.msra.mxu0 0.0
    %1843 = vmatprep.subr.mxu0 0.0
    %1844 = vmatpush2.msra.mxu0 0.0
    %1845 = vmatprep.subr.mxu0 0.0
    %1846 = vmatpush2.msra.mxu0 0.0
    %1847 = vmatprep.subr.mxu0 0.0
    %1848 = vmatpush2.msra.mxu0 0.0
    %1849 = vmatprep.subr.mxu0 0.0
    %1850 = vmatpush2.msra.mxu0 0.0
    %1851 = vmatprep.subr.mxu0 0.0
    %1852 = vmatpush2.msra.mxu0 0.0
    %1853 = vmatprep.mubr.f32.mxu0 0.0
    %1854 = vmatmul.mubr.f32.gmra.mxu0 %v1778
    %v1855 = vpop.f32.mrf.mxu0
    %v1856 = vadd.f32 0.0, %v1855
    %v1857 = vpop.f32.mrf.mxu0
    %1858 = vmatprep.mubr.f32.mxu0 0.0
    %1859 = vmatmul.mubr.f32.gmra.mxu0 %v1781
    %v1860 = vpop.f32.mrf.mxu0
    %v1861 = vadd.f32 0.0, %v1860
    %v1862 = vpop.f32.mrf.mxu0
    %1863 = vmatprep.mubr.f32.mxu0 0.0
    %1864 = vmatmul.mubr.f32.gmra.mxu0 %v1784
    %v1865 = vpop.f32.mrf.mxu0
    %v1866 = vadd.f32 0.0, %v1865
    %v1867 = vpop.f32.mrf.mxu0
    %1868 = vmatprep.mubr.f32.mxu0 0.0
    %1869 = vmatmul.mubr.f32.gmra.mxu0 %v1787
    %v1870 = vpop.f32.mrf.mxu0
    %v1871 = vadd.f32 0.0, %v1870
    %v1872 = vpop.f32.mrf.mxu0
    %1873 = vdwg.mxu0
    %v1874 = vadd.f32 %v1462, %v1856
    %v1875 = vadd.f32 %v1463, %v1861
    %v1876 = vadd.f32 %v1464, %v1866
    %v1877 = vadd.f32 %v1465, %v1871
    %v1878 = vadd.f32 %v49, %v1874
    %v1879 = vadd.f32 %v50, %v1875
    %v1880 = vadd.f32 %v51, %v1876
    %v1881 = vadd.f32 %v52, %v1877
    %v1882 = vsel %vm156, %v1878, 0.0
    %1883 = vadd.xlane.f32.xlu0 %v1882
    %v1884 = vpop.xlane.xlu0 %1883
    %v1885 = vsel %vm156, %v1879, 0.0
    %1886 = vadd.xlane.f32.xlu0 %v1885
    %v1887 = vpop.xlane.xlu0 %1886
    %v1888 = vsel %vm156, %v1880, 0.0
    %1889 = vadd.xlane.f32.xlu0 %v1888
    %v1890 = vpop.xlane.xlu0 %1889
    %v1891 = vsel %vm156, %v1881, 0.0
    %1892 = vadd.xlane.f32.xlu0 %v1891
    %v1893 = vpop.xlane.xlu0 %1892
    %v1894 = vmul.f32 %v1884, %v169
    %v1895 = vmul.f32 %v1887, %v169
    %v1896 = vmul.f32 %v1890, %v169
    %v1897 = vmul.f32 %v1893, %v169
    %v1898 = vsub.f32 %v1878, %v1894
    %v1899 = vsub.f32 %v1879, %v1895
    %v1900 = vsub.f32 %v1880, %v1896
    %v1901 = vsub.f32 %v1881, %v1897
    %v1902 = vmul.f32 %v1898, %v1898
    %v1903 = vmul.f32 %v1899, %v1899
    %v1904 = vmul.f32 %v1900, %v1900
    %v1905 = vmul.f32 %v1901, %v1901
    %v1906 = vsel %vm156, %v1902, 0.0
    %1907 = vadd.xlane.f32.xlu0 %v1906
    %v1908 = vpop.xlane.xlu0 %1907
    %v1909 = vsel %vm156, %v1903, 0.0
    %1910 = vadd.xlane.f32.xlu0 %v1909
    %v1911 = vpop.xlane.xlu0 %1910
    %v1912 = vsel %vm156, %v1904, 0.0
    %1913 = vadd.xlane.f32.xlu0 %v1912
    %v1914 = vpop.xlane.xlu0 %1913
    %v1915 = vsel %vm156, %v1905, 0.0
    %1916 = vadd.xlane.f32.xlu0 %v1915
    %v1917 = vpop.xlane.xlu0 %1916
    %v1918 = vmul.f32 %v1908, %v169
    %v1919 = vmul.f32 %v1911, %v169
    %v1920 = vmul.f32 %v1914, %v169
    %v1921 = vmul.f32 %v1917, %v169
    %v1922 = vadd.f32 %v1918, 1e-05
    %v1923 = vadd.f32 %v1919, 1e-05
    %v1924 = vadd.f32 %v1920, 1e-05
    %v1925 = vadd.f32 %v1921, 1e-05
    %v1926 = vrsqrt.pop %v1922
    %v1927 = vrsqrt.pop %v1923
    %v1928 = vrsqrt.pop %v1924
    %v1929 = vrsqrt.pop %v1925
    %v1930 = vmul.f32 %v1898, %v1926
    %v1931 = vmul.f32 %v1899, %v1927
    %v1932 = vmul.f32 %v1900, %v1928
    %v1933 = vmul.f32 %v1901, %v1929
    %v1934 = vlaneseq
    %v1935 = vshrl.u32 %v1934, 7
    %v1936 = vsub.s32 2, %v1935
    %v1937 = vrot.slane %v107, %v1936
    %v1938 = vmul.f32 %v1930, %v1937
    %v1939 = vmul.f32 %v1931, %v1937
    %v1940 = vmul.f32 %v1932, %v1937
    %v1941 = vmul.f32 %v1933, %v1937
    %v1942 = vlaneseq
    %v1943 = vshrl.u32 %v1942, 7
    %v1944 = vsub.s32 3, %v1943
    %v1945 = vrot.slane %v107, %v1944
    %v1946 = vadd.f32 %v1938, %v1945
    %v1947 = vadd.f32 %v1939, %v1945
    %v1948 = vadd.f32 %v1940, %v1945
    %v1949 = vadd.f32 %v1941, %v1945
    %v1951 = vsel %vm156, %v1946, 0
    %v1954 = vsel %vm156, %v1947, 0
    %v1957 = vsel %vm156, %v1948, 0
    %v1960 = vsel %vm156, %v1949, 0
    %1962 = vmatprep.subr.mxu0 0.0
    %1963 = vmatpush1.msra.mxu0 0.0
    %1964 = vmatprep.subr.mxu0 0.0
    %1965 = vmatpush1.msra.mxu0 0.0
    %1966 = vmatprep.subr.mxu0 0.0
    %1967 = vmatpush1.msra.mxu0 0.0
    %1968 = vmatprep.subr.mxu0 0.0
    %1969 = vmatpush1.msra.mxu0 0.0
    %1970 = vmatprep.subr.mxu0 0.0
    %1971 = vmatpush1.msra.mxu0 0.0
    %1972 = vmatprep.subr.mxu0 0.0
    %1973 = vmatpush1.msra.mxu0 0.0
    %1974 = vmatprep.subr.mxu0 0.0
    %1975 = vmatpush1.msra.mxu0 0.0
    %1976 = vmatprep.subr.mxu0 0.0
    %1977 = vmatpush1.msra.mxu0 0.0
    %1978 = vmatprep.subr.mxu0 0.0
    %1979 = vmatpush1.msra.mxu0 0.0
    %1980 = vmatprep.subr.mxu0 0.0
    %1981 = vmatpush1.msra.mxu0 0.0
    %1982 = vmatprep.subr.mxu0 0.0
    %1983 = vmatpush1.msra.mxu0 0.0
    %1984 = vmatprep.subr.mxu0 0.0
    %1985 = vmatpush1.msra.mxu0 0.0
    %1986 = vmatprep.subr.mxu0 0.0
    %1987 = vmatpush1.msra.mxu0 %v143
    %1988 = vmatprep.subr.mxu0 0.0
    %1989 = vmatpush1.msra.mxu0 %v142
    %1990 = vmatprep.subr.mxu0 0.0
    %1991 = vmatpush1.msra.mxu0 %v141
    %1992 = vmatprep.subr.mxu0 0.0
    %1993 = vmatpush1.msra.mxu0 %v140
    %1994 = vmatprep.subr.mxu0 0.0
    %1995 = vmatpush2.msra.mxu0 0.0
    %1996 = vmatprep.subr.mxu0 0.0
    %1997 = vmatpush2.msra.mxu0 0.0
    %1998 = vmatprep.subr.mxu0 0.0
    %1999 = vmatpush2.msra.mxu0 0.0
    %2000 = vmatprep.subr.mxu0 0.0
    %2001 = vmatpush2.msra.mxu0 0.0
    %2002 = vmatprep.subr.mxu0 0.0
    %2003 = vmatpush2.msra.mxu0 0.0
    %2004 = vmatprep.subr.mxu0 0.0
    %2005 = vmatpush2.msra.mxu0 0.0
    %2006 = vmatprep.subr.mxu0 0.0
    %2007 = vmatpush2.msra.mxu0 0.0
    %2008 = vmatprep.subr.mxu0 0.0
    %2009 = vmatpush2.msra.mxu0 0.0
    %2010 = vmatprep.subr.mxu0 0.0
    %2011 = vmatpush2.msra.mxu0 0.0
    %2012 = vmatprep.subr.mxu0 0.0
    %2013 = vmatpush2.msra.mxu0 0.0
    %2014 = vmatprep.subr.mxu0 0.0
    %2015 = vmatpush2.msra.mxu0 0.0
    %2016 = vmatprep.subr.mxu0 0.0
    %2017 = vmatpush2.msra.mxu0 0.0
    %2018 = vmatprep.subr.mxu0 0.0
    %2019 = vmatpush2.msra.mxu0 0.0
    %2020 = vmatprep.subr.mxu0 0.0
    %2021 = vmatpush2.msra.mxu0 0.0
    %2022 = vmatprep.subr.mxu0 0.0
    %2023 = vmatpush2.msra.mxu0 0.0
    %2024 = vmatprep.subr.mxu0 0.0
    %2025 = vmatpush2.msra.mxu0 0.0
    %2026 = vmatprep.mubr.f32.mxu0 0.0
    %2027 = vmatmul.mubr.f32.gmra.mxu0 %v1951
    %v2028 = vpop.f32.mrf.mxu0
    %v2029 = vadd.f32 0.0, %v2028
    %v2030 = vpop.f32.mrf.mxu0
    %2031 = vmatprep.mubr.f32.mxu0 0.0
    %2032 = vmatmul.mubr.f32.gmra.mxu0 %v1954
    %v2033 = vpop.f32.mrf.mxu0
    %v2034 = vadd.f32 0.0, %v2033
    %v2035 = vpop.f32.mrf.mxu0
    %2036 = vmatprep.mubr.f32.mxu0 0.0
    %2037 = vmatmul.mubr.f32.gmra.mxu0 %v1957
    %v2038 = vpop.f32.mrf.mxu0
    %v2039 = vadd.f32 0.0, %v2038
    %v2040 = vpop.f32.mrf.mxu0
    %2041 = vmatprep.mubr.f32.mxu0 0.0
    %2042 = vmatmul.mubr.f32.gmra.mxu0 %v1960
    %v2043 = vpop.f32.mrf.mxu0
    %v2044 = vadd.f32 0.0, %v2043
    %v2045 = vpop.f32.mrf.mxu0
    %2046 = vdwg.mxu0
    %2047 = vmatprep.subr.mxu0 0.0
    %2048 = vmatpush1.msra.mxu0 0.0
    %2049 = vmatprep.subr.mxu0 0.0
    %2050 = vmatpush1.msra.mxu0 0.0
    %2051 = vmatprep.subr.mxu0 0.0
    %2052 = vmatpush1.msra.mxu0 0.0
    %2053 = vmatprep.subr.mxu0 0.0
    %2054 = vmatpush1.msra.mxu0 0.0
    %2055 = vmatprep.subr.mxu0 0.0
    %2056 = vmatpush1.msra.mxu0 0.0
    %2057 = vmatprep.subr.mxu0 0.0
    %2058 = vmatpush1.msra.mxu0 0.0
    %2059 = vmatprep.subr.mxu0 0.0
    %2060 = vmatpush1.msra.mxu0 0.0
    %2061 = vmatprep.subr.mxu0 0.0
    %2062 = vmatpush1.msra.mxu0 0.0
    %2063 = vmatprep.subr.mxu0 0.0
    %2064 = vmatpush1.msra.mxu0 0.0
    %2065 = vmatprep.subr.mxu0 0.0
    %2066 = vmatpush1.msra.mxu0 0.0
    %2067 = vmatprep.subr.mxu0 0.0
    %2068 = vmatpush1.msra.mxu0 0.0
    %2069 = vmatprep.subr.mxu0 0.0
    %2070 = vmatpush1.msra.mxu0 0.0
    %2071 = vmatprep.subr.mxu0 0.0
    %2072 = vmatpush1.msra.mxu0 %v147
    %2073 = vmatprep.subr.mxu0 0.0
    %2074 = vmatpush1.msra.mxu0 %v146
    %2075 = vmatprep.subr.mxu0 0.0
    %2076 = vmatpush1.msra.mxu0 %v145
    %2077 = vmatprep.subr.mxu0 0.0
    %2078 = vmatpush1.msra.mxu0 %v144
    %2079 = vmatprep.subr.mxu0 0.0
    %2080 = vmatpush2.msra.mxu0 0.0
    %2081 = vmatprep.subr.mxu0 0.0
    %2082 = vmatpush2.msra.mxu0 0.0
    %2083 = vmatprep.subr.mxu0 0.0
    %2084 = vmatpush2.msra.mxu0 0.0
    %2085 = vmatprep.subr.mxu0 0.0
    %2086 = vmatpush2.msra.mxu0 0.0
    %2087 = vmatprep.subr.mxu0 0.0
    %2088 = vmatpush2.msra.mxu0 0.0
    %2089 = vmatprep.subr.mxu0 0.0
    %2090 = vmatpush2.msra.mxu0 0.0
    %2091 = vmatprep.subr.mxu0 0.0
    %2092 = vmatpush2.msra.mxu0 0.0
    %2093 = vmatprep.subr.mxu0 0.0
    %2094 = vmatpush2.msra.mxu0 0.0
    %2095 = vmatprep.subr.mxu0 0.0
    %2096 = vmatpush2.msra.mxu0 0.0
    %2097 = vmatprep.subr.mxu0 0.0
    %2098 = vmatpush2.msra.mxu0 0.0
    %2099 = vmatprep.subr.mxu0 0.0
    %2100 = vmatpush2.msra.mxu0 0.0
    %2101 = vmatprep.subr.mxu0 0.0
    %2102 = vmatpush2.msra.mxu0 0.0
    %2103 = vmatprep.subr.mxu0 0.0
    %2104 = vmatpush2.msra.mxu0 0.0
    %2105 = vmatprep.subr.mxu0 0.0
    %2106 = vmatpush2.msra.mxu0 0.0
    %2107 = vmatprep.subr.mxu0 0.0
    %2108 = vmatpush2.msra.mxu0 0.0
    %2109 = vmatprep.subr.mxu0 0.0
    %2110 = vmatpush2.msra.mxu0 0.0
    %2111 = vmatprep.mubr.f32.mxu0 0.0
    %2112 = vmatmul.mubr.f32.gmra.mxu0 %v1951
    %v2113 = vpop.f32.mrf.mxu0
    %v2114 = vadd.f32 0.0, %v2113
    %v2115 = vpop.f32.mrf.mxu0
    %2116 = vmatprep.mubr.f32.mxu0 0.0
    %2117 = vmatmul.mubr.f32.gmra.mxu0 %v1954
    %v2118 = vpop.f32.mrf.mxu0
    %v2119 = vadd.f32 0.0, %v2118
    %v2120 = vpop.f32.mrf.mxu0
    %2121 = vmatprep.mubr.f32.mxu0 0.0
    %2122 = vmatmul.mubr.f32.gmra.mxu0 %v1957
    %v2123 = vpop.f32.mrf.mxu0
    %v2124 = vadd.f32 0.0, %v2123
    %v2125 = vpop.f32.mrf.mxu0
    %2126 = vmatprep.mubr.f32.mxu0 0.0
    %2127 = vmatmul.mubr.f32.gmra.mxu0 %v1960
    %v2128 = vpop.f32.mrf.mxu0
    %v2129 = vadd.f32 0.0, %v2128
    %v2130 = vpop.f32.mrf.mxu0
    %2131 = vdwg.mxu0
    %v2132 = vmul.f32 %v2114, %v2114
    %v2133 = vmul.f32 %v2119, %v2119
    %v2134 = vmul.f32 %v2124, %v2124
    %v2135 = vmul.f32 %v2129, %v2129
    %v2136 = vmul.f32 %v2114, %v2132
    %v2137 = vmul.f32 %v2119, %v2133
    %v2138 = vmul.f32 %v2124, %v2134
    %v2139 = vmul.f32 %v2129, %v2135
    %v2140 = vmul.f32 %v2136, 0.044715
    %v2141 = vmul.f32 %v2137, 0.044715
    %v2142 = vmul.f32 %v2138, 0.044715
    %v2143 = vmul.f32 %v2139, 0.044715
    %v2144 = vadd.f32 %v2114, %v2140
    %v2145 = vadd.f32 %v2119, %v2141
    %v2146 = vadd.f32 %v2124, %v2142
    %v2147 = vadd.f32 %v2129, %v2143
    %v2148 = vmul.f32 %v2144, 0.7978846
    %v2149 = vmul.f32 %v2145, 0.7978846
    %v2150 = vmul.f32 %v2146, 0.7978846
    %v2151 = vmul.f32 %v2147, 0.7978846
    %v2152 = vtanh.pop %v2148
    %v2153 = vtanh.pop %v2149
    %v2154 = vtanh.pop %v2150
    %v2155 = vtanh.pop %v2151
    %v2156 = vadd.f32 %v2152, 1.0
    %v2157 = vadd.f32 %v2153, 1.0
    %v2158 = vadd.f32 %v2154, 1.0
    %v2159 = vadd.f32 %v2155, 1.0
    %v2160 = vmul.f32 %v2156, 0.5
    %v2161 = vmul.f32 %v2157, 0.5
    %v2162 = vmul.f32 %v2158, 0.5
    %v2163 = vmul.f32 %v2159, 0.5
    %v2164 = vmul.f32 %v2114, %v2160
    %v2165 = vmul.f32 %v2119, %v2161
    %v2166 = vmul.f32 %v2124, %v2162
    %v2167 = vmul.f32 %v2129, %v2163
    %v2168 = vmul.f32 %v2029, %v2164
    %v2169 = vmul.f32 %v2034, %v2165
    %v2170 = vmul.f32 %v2039, %v2166
    %v2171 = vmul.f32 %v2044, %v2167
    %vm2172 = vcmask 523264
    %v2174 = vsel %vm2172, %v2168, 0
    %v2177 = vsel %vm2172, %v2169, 0
    %v2180 = vsel %vm2172, %v2170, 0
    %v2183 = vsel %vm2172, %v2171, 0
    %2185 = vmatprep.subr.mxu0 0.0
    %2186 = vmatpush1.msra.mxu0 0.0
    %2187 = vmatprep.subr.mxu0 0.0
    %2188 = vmatpush1.msra.mxu0 0.0
    %2189 = vmatprep.subr.mxu0 0.0
    %2190 = vmatpush1.msra.mxu0 0.0
    %2191 = vmatprep.subr.mxu0 0.0
    %2192 = vmatpush1.msra.mxu0 0.0
    %2193 = vmatprep.subr.mxu0 0.0
    %2194 = vmatpush1.msra.mxu0 0.0
    %2195 = vmatprep.subr.mxu0 0.0
    %2196 = vmatpush1.msra.mxu0 0.0
    %2197 = vmatprep.subr.mxu0 0.0
    %2198 = vmatpush1.msra.mxu0 0.0
    %2199 = vmatprep.subr.mxu0 0.0
    %2200 = vmatpush1.msra.mxu0 0.0
    %2201 = vmatprep.subr.mxu0 0.0
    %2202 = vmatpush1.msra.mxu0 %v155
    %2203 = vmatprep.subr.mxu0 0.0
    %2204 = vmatpush1.msra.mxu0 %v154
    %2205 = vmatprep.subr.mxu0 0.0
    %2206 = vmatpush1.msra.mxu0 %v153
    %2207 = vmatprep.subr.mxu0 0.0
    %2208 = vmatpush1.msra.mxu0 %v152
    %2209 = vmatprep.subr.mxu0 0.0
    %2210 = vmatpush1.msra.mxu0 %v151
    %2211 = vmatprep.subr.mxu0 0.0
    %2212 = vmatpush1.msra.mxu0 %v150
    %2213 = vmatprep.subr.mxu0 0.0
    %2214 = vmatpush1.msra.mxu0 %v149
    %2215 = vmatprep.subr.mxu0 0.0
    %2216 = vmatpush1.msra.mxu0 %v148
    %2217 = vmatprep.subr.mxu0 0.0
    %2218 = vmatpush2.msra.mxu0 0.0
    %2219 = vmatprep.subr.mxu0 0.0
    %2220 = vmatpush2.msra.mxu0 0.0
    %2221 = vmatprep.subr.mxu0 0.0
    %2222 = vmatpush2.msra.mxu0 0.0
    %2223 = vmatprep.subr.mxu0 0.0
    %2224 = vmatpush2.msra.mxu0 0.0
    %2225 = vmatprep.subr.mxu0 0.0
    %2226 = vmatpush2.msra.mxu0 0.0
    %2227 = vmatprep.subr.mxu0 0.0
    %2228 = vmatpush2.msra.mxu0 0.0
    %2229 = vmatprep.subr.mxu0 0.0
    %2230 = vmatpush2.msra.mxu0 0.0
    %2231 = vmatprep.subr.mxu0 0.0
    %2232 = vmatpush2.msra.mxu0 0.0
    %2233 = vmatprep.subr.mxu0 0.0
    %2234 = vmatpush2.msra.mxu0 0.0
    %2235 = vmatprep.subr.mxu0 0.0
    %2236 = vmatpush2.msra.mxu0 0.0
    %2237 = vmatprep.subr.mxu0 0.0
    %2238 = vmatpush2.msra.mxu0 0.0
    %2239 = vmatprep.subr.mxu0 0.0
    %2240 = vmatpush2.msra.mxu0 0.0
    %2241 = vmatprep.subr.mxu0 0.0
    %2242 = vmatpush2.msra.mxu0 0.0
    %2243 = vmatprep.subr.mxu0 0.0
    %2244 = vmatpush2.msra.mxu0 0.0
    %2245 = vmatprep.subr.mxu0 0.0
    %2246 = vmatpush2.msra.mxu0 0.0
    %2247 = vmatprep.subr.mxu0 0.0
    %2248 = vmatpush2.msra.mxu0 0.0
    %2249 = vmatprep.mubr.f32.mxu0 0.0
    %2250 = vmatmul.mubr.f32.gmra.mxu0 %v2174
    %v2251 = vpop.f32.mrf.mxu0
    %v2252 = vadd.f32 0.0, %v2251
    %v2253 = vpop.f32.mrf.mxu0
    %2254 = vmatprep.mubr.f32.mxu0 0.0
    %2255 = vmatmul.mubr.f32.gmra.mxu0 %v2177
    %v2256 = vpop.f32.mrf.mxu0
    %v2257 = vadd.f32 0.0, %v2256
    %v2258 = vpop.f32.mrf.mxu0
    %2259 = vmatprep.mubr.f32.mxu0 0.0
    %2260 = vmatmul.mubr.f32.gmra.mxu0 %v2180
    %v2261 = vpop.f32.mrf.mxu0
    %v2262 = vadd.f32 0.0, %v2261
    %v2263 = vpop.f32.mrf.mxu0
    %2264 = vmatprep.mubr.f32.mxu0 0.0
    %2265 = vmatmul.mubr.f32.gmra.mxu0 %v2183
    %v2266 = vpop.f32.mrf.mxu0
    %v2267 = vadd.f32 0.0, %v2266
    %v2268 = vpop.f32.mrf.mxu0
    %2269 = vdwg.mxu0
    %v2270 = vadd.f32 %v1878, %v2252
    %v2271 = vadd.f32 %v1879, %v2257
    %v2272 = vadd.f32 %v1880, %v2262
    %v2273 = vadd.f32 %v1881, %v2267
    %s2274 = scalar_lea.vmem %s3, 4
    %v2275 = vld [vmem:[%s2274] sm:$0xf]
    %s2276 = scalar_lea.vmem %s4, 128
    %v2277 = vld [vmem:[%s2276] sm:$0xff]
    %v2278 = vld [vmem:[%s2276 + $0x8] sm:$0xff]
    %v2279 = vld [vmem:[%s2276 + $0x10] sm:$0xff]
    %v2280 = vld [vmem:[%s2276 + $0x18] sm:$0xff]
    %v2281 = vld [vmem:[%s2276 + $0x20] sm:$0xff]
    %v2282 = vld [vmem:[%s2276 + $0x28] sm:$0xff]
    %v2283 = vld [vmem:[%s2276 + $0x30] sm:$0xff]
    %v2284 = vld [vmem:[%s2276 + $0x38] sm:$0xff]
    %v2285 = vld [vmem:[%s2276 + $0x40] sm:$0xff]
    %v2286 = vld [vmem:[%s2276 + $0x48] sm:$0xff]
    %v2287 = vld [vmem:[%s2276 + $0x50] sm:$0xff]
    %v2288 = vld [vmem:[%s2276 + $0x58] sm:$0xff]
    %v2289 = vld [vmem:[%s2276 + $0x60] sm:$0xff]
    %v2290 = vld [vmem:[%s2276 + $0x68] sm:$0xff]
    %v2291 = vld [vmem:[%s2276 + $0x70] sm:$0xff]
    %v2292 = vld [vmem:[%s2276 + $0x78] sm:$0xff]
    %s2293 = scalar_lea.vmem %s5, 128
    %v2294 = vld [vmem:[%s2293] sm:$0xff]
    %v2295 = vld [vmem:[%s2293 + $0x8] sm:$0xff]
    %v2296 = vld [vmem:[%s2293 + $0x10] sm:$0xff]
    %v2297 = vld [vmem:[%s2293 + $0x18] sm:$0xff]
    %v2298 = vld [vmem:[%s2293 + $0x20] sm:$0xff]
    %v2299 = vld [vmem:[%s2293 + $0x28] sm:$0xff]
    %v2300 = vld [vmem:[%s2293 + $0x30] sm:$0xff]
    %v2301 = vld [vmem:[%s2293 + $0x38] sm:$0xff]
    %v2302 = vld [vmem:[%s2293 + $0x40] sm:$0xff]
    %v2303 = vld [vmem:[%s2293 + $0x48] sm:$0xff]
    %v2304 = vld [vmem:[%s2293 + $0x50] sm:$0xff]
    %v2305 = vld [vmem:[%s2293 + $0x58] sm:$0xff]
    %v2306 = vld [vmem:[%s2293 + $0x60] sm:$0xff]
    %v2307 = vld [vmem:[%s2293 + $0x68] sm:$0xff]
    %v2308 = vld [vmem:[%s2293 + $0x70] sm:$0xff]
    %v2309 = vld [vmem:[%s2293 + $0x78] sm:$0xff]
    %s2310 = scalar_lea.vmem %s6, 64
    %v2311 = vld [vmem:[%s2310] sm:$0xff]
    %v2312 = vld [vmem:[%s2310 + $0x8] sm:$0xff]
    %v2313 = vld [vmem:[%s2310 + $0x10] sm:$0xff]
    %v2314 = vld [vmem:[%s2310 + $0x18] sm:$0xff]
    %v2315 = vld [vmem:[%s2310 + $0x20] sm:$0xff]
    %v2316 = vld [vmem:[%s2310 + $0x28] sm:$0xff]
    %v2317 = vld [vmem:[%s2310 + $0x30] sm:$0xff]
    %v2318 = vld [vmem:[%s2310 + $0x38] sm:$0xff]
    %s2319 = scalar_lea.vmem [#allocation2], 64
    %v2320 = vld [vmem:[%s2319] sm:$0xff]
    %v2321 = vld [vmem:[%s2319 + $0x8] sm:$0xff]
    %v2322 = vld [vmem:[%s2319 + $0x10] sm:$0xff]
    %v2323 = vld [vmem:[%s2319 + $0x18] sm:$0xff]
    %v2324 = vld [vmem:[%s2319 + $0x20] sm:$0xff]
    %v2325 = vld [vmem:[%s2319 + $0x28] sm:$0xff]
    %v2326 = vld [vmem:[%s2319 + $0x30] sm:$0xff]
    %v2327 = vld [vmem:[%s2319 + $0x38] sm:$0xff]
    %v2328 = vsel %vm156, %v2270, 0.0
    %2329 = vadd.xlane.f32.xlu0 %v2328
    %v2330 = vpop.xlane.xlu0 %2329
    %v2331 = vsel %vm156, %v2271, 0.0
    %2332 = vadd.xlane.f32.xlu0 %v2331
    %v2333 = vpop.xlane.xlu0 %2332
    %v2334 = vsel %vm156, %v2272, 0.0
    %2335 = vadd.xlane.f32.xlu0 %v2334
    %v2336 = vpop.xlane.xlu0 %2335
    %v2337 = vsel %vm156, %v2273, 0.0
    %2338 = vadd.xlane.f32.xlu0 %v2337
    %v2339 = vpop.xlane.xlu0 %2338
    %v2340 = vmul.f32 %v2330, %v169
    %v2341 = vmul.f32 %v2333, %v169
    %v2342 = vmul.f32 %v2336, %v169
    %v2343 = vmul.f32 %v2339, %v169
    %v2344 = vsub.f32 %v2270, %v2340
    %v2345 = vsub.f32 %v2271, %v2341
    %v2346 = vsub.f32 %v2272, %v2342
    %v2347 = vsub.f32 %v2273, %v2343
    %v2348 = vmul.f32 %v2344, %v2344
    %v2349 = vmul.f32 %v2345, %v2345
    %v2350 = vmul.f32 %v2346, %v2346
    %v2351 = vmul.f32 %v2347, %v2347
    %v2352 = vsel %vm156, %v2348, 0.0
    %2353 = vadd.xlane.f32.xlu0 %v2352
    %v2354 = vpop.xlane.xlu0 %2353
    %v2355 = vsel %vm156, %v2349, 0.0
    %2356 = vadd.xlane.f32.xlu0 %v2355
    %v2357 = vpop.xlane.xlu0 %2356
    %v2358 = vsel %vm156, %v2350, 0.0
    %2359 = vadd.xlane.f32.xlu0 %v2358
    %v2360 = vpop.xlane.xlu0 %2359
    %v2361 = vsel %vm156, %v2351, 0.0
    %2362 = vadd.xlane.f32.xlu0 %v2361
    %v2363 = vpop.xlane.xlu0 %2362
    %v2364 = vmul.f32 %v2354, %v169
    %v2365 = vmul.f32 %v2357, %v169
    %v2366 = vmul.f32 %v2360, %v169
    %v2367 = vmul.f32 %v2363, %v169
    %v2368 = vadd.f32 %v2364, 1e-05
    %v2369 = vadd.f32 %v2365, 1e-05
    %v2370 = vadd.f32 %v2366, 1e-05
    %v2371 = vadd.f32 %v2367, 1e-05
    %v2372 = vrsqrt.pop %v2368
    %v2373 = vrsqrt.pop %v2369
    %v2374 = vrsqrt.pop %v2370
    %v2375 = vrsqrt.pop %v2371
    %v2376 = vmul.f32 %v2344, %v2372
    %v2377 = vmul.f32 %v2345, %v2373
    %v2378 = vmul.f32 %v2346, %v2374
    %v2379 = vmul.f32 %v2347, %v2375
    %v2380 = vlaneseq
    %v2381 = vshrl.u32 %v2380, 7
    %v2382 = vsub.s32 0, %v2381
    %v2383 = vrot.slane %v2275, %v2382
    %v2384 = vmul.f32 %v2376, %v2383
    %v2385 = vmul.f32 %v2377, %v2383
    %v2386 = vmul.f32 %v2378, %v2383
    %v2387 = vmul.f32 %v2379, %v2383
    %v2388 = vlaneseq
    %v2389 = vshrl.u32 %v2388, 7
    %v2390 = vsub.s32 1, %v2389
    %v2391 = vrot.slane %v2275, %v2390
    %v2392 = vadd.f32 %v2384, %v2391
    %v2393 = vadd.f32 %v2385, %v2391
    %v2394 = vadd.f32 %v2386, %v2391
    %v2395 = vadd.f32 %v2387, %v2391
    %v2397 = vsel %vm156, %v2392, 0
    %v2400 = vsel %vm156, %v2393, 0
    %v2403 = vsel %vm156, %v2394, 0
    %v2406 = vsel %vm156, %v2395, 0
    %2408 = vmatprep.subr.mxu0 0.0
    %2409 = vmatpush1.msra.mxu0 0.0
    %2410 = vmatprep.subr.mxu0 0.0
    %2411 = vmatpush1.msra.mxu0 0.0
    %2412 = vmatprep.subr.mxu0 0.0
    %2413 = vmatpush1.msra.mxu0 0.0
    %2414 = vmatprep.subr.mxu0 0.0
    %2415 = vmatpush1.msra.mxu0 0.0
    %2416 = vmatprep.subr.mxu0 0.0
    %2417 = vmatpush1.msra.mxu0 0.0
    %2418 = vmatprep.subr.mxu0 0.0
    %2419 = vmatpush1.msra.mxu0 0.0
    %2420 = vmatprep.subr.mxu0 0.0
    %2421 = vmatpush1.msra.mxu0 0.0
    %2422 = vmatprep.subr.mxu0 0.0
    %2423 = vmatpush1.msra.mxu0 0.0
    %2424 = vmatprep.subr.mxu0 0.0
    %2425 = vmatpush1.msra.mxu0 0.0
    %2426 = vmatprep.subr.mxu0 0.0
    %2427 = vmatpush1.msra.mxu0 0.0
    %2428 = vmatprep.subr.mxu0 0.0
    %2429 = vmatpush1.msra.mxu0 0.0
    %2430 = vmatprep.subr.mxu0 0.0
    %2431 = vmatpush1.msra.mxu0 0.0
    %2432 = vmatprep.subr.mxu0 0.0
    %2433 = vmatpush1.msra.mxu0 %v2280
    %2434 = vmatprep.subr.mxu0 0.0
    %2435 = vmatpush1.msra.mxu0 %v2279
    %2436 = vmatprep.subr.mxu0 0.0
    %2437 = vmatpush1.msra.mxu0 %v2278
    %2438 = vmatprep.subr.mxu0 0.0
    %2439 = vmatpush1.msra.mxu0 %v2277
    %2440 = vmatprep.subr.mxu0 0.0
    %2441 = vmatpush2.msra.mxu0 0.0
    %2442 = vmatprep.subr.mxu0 0.0
    %2443 = vmatpush2.msra.mxu0 0.0
    %2444 = vmatprep.subr.mxu0 0.0
    %2445 = vmatpush2.msra.mxu0 0.0
    %2446 = vmatprep.subr.mxu0 0.0
    %2447 = vmatpush2.msra.mxu0 0.0
    %2448 = vmatprep.subr.mxu0 0.0
    %2449 = vmatpush2.msra.mxu0 0.0
    %2450 = vmatprep.subr.mxu0 0.0
    %2451 = vmatpush2.msra.mxu0 0.0
    %2452 = vmatprep.subr.mxu0 0.0
    %2453 = vmatpush2.msra.mxu0 0.0
    %2454 = vmatprep.subr.mxu0 0.0
    %2455 = vmatpush2.msra.mxu0 0.0
    %2456 = vmatprep.subr.mxu0 0.0
    %2457 = vmatpush2.msra.mxu0 0.0
    %2458 = vmatprep.subr.mxu0 0.0
    %2459 = vmatpush2.msra.mxu0 0.0
    %2460 = vmatprep.subr.mxu0 0.0
    %2461 = vmatpush2.msra.mxu0 0.0
    %2462 = vmatprep.subr.mxu0 0.0
    %2463 = vmatpush2.msra.mxu0 0.0
    %2464 = vmatprep.subr.mxu0 0.0
    %2465 = vmatpush2.msra.mxu0 0.0
    %2466 = vmatprep.subr.mxu0 0.0
    %2467 = vmatpush2.msra.mxu0 0.0
    %2468 = vmatprep.subr.mxu0 0.0
    %2469 = vmatpush2.msra.mxu0 0.0
    %2470 = vmatprep.subr.mxu0 0.0
    %2471 = vmatpush2.msra.mxu0 0.0
    %2472 = vmatprep.mubr.f32.mxu0 0.0
    %2473 = vmatmul.mubr.f32.gmra.mxu0 %v2397
    %v2474 = vpop.f32.mrf.mxu0
    %v2475 = vadd.f32 0.0, %v2474
    %v2476 = vpop.f32.mrf.mxu0
    %2477 = vmatprep.mubr.f32.mxu0 0.0
    %2478 = vmatmul.mubr.f32.gmra.mxu0 %v2400
    %v2479 = vpop.f32.mrf.mxu0
    %v2480 = vadd.f32 0.0, %v2479
    %v2481 = vpop.f32.mrf.mxu0
    %2482 = vmatprep.mubr.f32.mxu0 0.0
    %2483 = vmatmul.mubr.f32.gmra.mxu0 %v2403
    %v2484 = vpop.f32.mrf.mxu0
    %v2485 = vadd.f32 0.0, %v2484
    %v2486 = vpop.f32.mrf.mxu0
    %2487 = vmatprep.mubr.f32.mxu0 0.0
    %2488 = vmatmul.mubr.f32.gmra.mxu0 %v2406
    %v2489 = vpop.f32.mrf.mxu0
    %v2490 = vadd.f32 0.0, %v2489
    %v2491 = vpop.f32.mrf.mxu0
    %2492 = vdwg.mxu0
    %v2494 = vsel %vm156, %v2475, 0
    %v2497 = vsel %vm156, %v2480, 0
    %v2500 = vsel %vm156, %v2485, 0
    %v2503 = vsel %vm156, %v2490, 0
    %2505 = vmatprep.subr.mxu0 0.0
    %2506 = vmatpush1.xpose.msra.mxu0 0.0
    %2507 = vmatprep.subr.mxu0 0.0
    %2508 = vmatpush1.xpose.msra.mxu0 0.0
    %2509 = vmatprep.subr.mxu0 0.0
    %2510 = vmatpush1.xpose.msra.mxu0 0.0
    %2511 = vmatprep.subr.mxu0 0.0
    %2512 = vmatpush1.xpose.msra.mxu0 0.0
    %2513 = vmatprep.subr.mxu0 0.0
    %2514 = vmatpush1.xpose.msra.mxu0 0.0
    %2515 = vmatprep.subr.mxu0 0.0
    %2516 = vmatpush1.xpose.msra.mxu0 0.0
    %2517 = vmatprep.subr.mxu0 0.0
    %2518 = vmatpush1.xpose.msra.mxu0 0.0
    %2519 = vmatprep.subr.mxu0 0.0
    %2520 = vmatpush1.xpose.msra.mxu0 0.0
    %2521 = vmatprep.subr.mxu0 0.0
    %2522 = vmatpush1.xpose.msra.mxu0 0.0
    %2523 = vmatprep.subr.mxu0 0.0
    %2524 = vmatpush1.xpose.msra.mxu0 0.0
    %2525 = vmatprep.subr.mxu0 0.0
    %2526 = vmatpush1.xpose.msra.mxu0 0.0
    %2527 = vmatprep.subr.mxu0 0.0
    %2528 = vmatpush1.xpose.msra.mxu0 0.0
    %2529 = vmatprep.subr.mxu0 0.0
    %2530 = vmatpush1.xpose.msra.mxu0 %v2406
    %2531 = vmatprep.subr.mxu0 0.0
    %2532 = vmatpush1.xpose.msra.mxu0 %v2403
    %2533 = vmatprep.subr.mxu0 0.0
    %2534 = vmatpush1.xpose.msra.mxu0 %v2400
    %2535 = vmatprep.subr.mxu0 0.0
    %2536 = vmatpush1.xpose.msra.mxu0 %v2397
    %2537 = vmatprep.subr.mxu0 0.0
    %2538 = vmatpush2.xpose.msra.mxu0 0.0
    %2539 = vmatprep.subr.mxu0 0.0
    %2540 = vmatpush2.xpose.msra.mxu0 0.0
    %2541 = vmatprep.subr.mxu0 0.0
    %2542 = vmatpush2.xpose.msra.mxu0 0.0
    %2543 = vmatprep.subr.mxu0 0.0
    %2544 = vmatpush2.xpose.msra.mxu0 0.0
    %2545 = vmatprep.subr.mxu0 0.0
    %2546 = vmatpush2.xpose.msra.mxu0 0.0
    %2547 = vmatprep.subr.mxu0 0.0
    %2548 = vmatpush2.xpose.msra.mxu0 0.0
    %2549 = vmatprep.subr.mxu0 0.0
    %2550 = vmatpush2.xpose.msra.mxu0 0.0
    %2551 = vmatprep.subr.mxu0 0.0
    %2552 = vmatpush2.xpose.msra.mxu0 0.0
    %2553 = vmatprep.subr.mxu0 0.0
    %2554 = vmatpush2.xpose.msra.mxu0 0.0
    %2555 = vmatprep.subr.mxu0 0.0
    %2556 = vmatpush2.xpose.msra.mxu0 0.0
    %2557 = vmatprep.subr.mxu0 0.0
    %2558 = vmatpush2.xpose.msra.mxu0 0.0
    %2559 = vmatprep.subr.mxu0 0.0
    %2560 = vmatpush2.xpose.msra.mxu0 0.0
    %2561 = vmatprep.subr.mxu0 0.0
    %2562 = vmatpush2.xpose.msra.mxu0 0.0
    %2563 = vmatprep.subr.mxu0 0.0
    %2564 = vmatpush2.xpose.msra.mxu0 0.0
    %2565 = vmatprep.subr.mxu0 0.0
    %2566 = vmatpush2.xpose.msra.mxu0 0.0
    %2567 = vmatprep.subr.mxu0 0.0
    %2568 = vmatpush2.xpose.msra.mxu0 0.0
    %2569 = vmatprep.mubr.f32.mxu0 0.0
    %2570 = vmatmul.mubr.f32.gmra.mxu0 %v2494
    %v2571 = vpop.f32.mrf.mxu0
    %v2572 = vadd.f32 %v103, %v2571
    %v2573 = vpop.f32.mrf.mxu0
    %2574 = vmatprep.mubr.f32.mxu0 0.0
    %2575 = vmatmul.mubr.f32.gmra.mxu0 %v2497
    %v2576 = vpop.f32.mrf.mxu0
    %v2577 = vadd.f32 %v104, %v2576
    %v2578 = vpop.f32.mrf.mxu0
    %2579 = vmatprep.mubr.f32.mxu0 0.0
    %2580 = vmatmul.mubr.f32.gmra.mxu0 %v2500
    %v2581 = vpop.f32.mrf.mxu0
    %v2582 = vadd.f32 %v105, %v2581
    %v2583 = vpop.f32.mrf.mxu0
    %2584 = vmatprep.mubr.f32.mxu0 0.0
    %2585 = vmatmul.mubr.f32.gmra.mxu0 %v2503
    %v2586 = vpop.f32.mrf.mxu0
    %v2587 = vadd.f32 %v106, %v2586
    %v2588 = vpop.f32.mrf.mxu0
    %2589 = vdwg.mxu0
    %v2590 = vsel %vm156, %v2572, -inf
    %2591 = vmax.xlane.f32.xlu0 %v2590
    %v2592 = vpop.xlane.xlu0 %2591
    %v2593 = vsel %vm156, %v2577, -inf
    %2594 = vmax.xlane.f32.xlu0 %v2593
    %v2595 = vpop.xlane.xlu0 %2594
    %v2596 = vsel %vm156, %v2582, -inf
    %2597 = vmax.xlane.f32.xlu0 %v2596
    %v2598 = vpop.xlane.xlu0 %2597
    %v2599 = vsel %vm156, %v2587, -inf
    %2600 = vmax.xlane.f32.xlu0 %v2599
    %v2601 = vpop.xlane.xlu0 %2600
    %v2602 = vsub.f32 %v2572, %v2592
    %v2603 = vsub.f32 %v2577, %v2595
    %v2604 = vsub.f32 %v2582, %v2598
    %v2605 = vsub.f32 %v2587, %v2601
    %v2606 = vmul.f32 %v2602, 1.442695
    %v2607 = vpow.pop %v2606
    %v2608 = vmul.f32 %v2603, 1.442695
    %v2609 = vpow.pop %v2608
    %v2610 = vmul.f32 %v2604, 1.442695
    %v2611 = vpow.pop %v2610
    %v2612 = vmul.f32 %v2605, 1.442695
    %v2613 = vpow.pop %v2612
    %v2614 = vsel %vm156, %v2607, 0.0
    %2615 = vadd.xlane.f32.xlu0 %v2614
    %v2616 = vpop.xlane.xlu0 %2615
    %v2617 = vsel %vm156, %v2609, 0.0
    %2618 = vadd.xlane.f32.xlu0 %v2617
    %v2619 = vpop.xlane.xlu0 %2618
    %v2620 = vsel %vm156, %v2611, 0.0
    %2621 = vadd.xlane.f32.xlu0 %v2620
    %v2622 = vpop.xlane.xlu0 %2621
    %v2623 = vsel %vm156, %v2613, 0.0
    %2624 = vadd.xlane.f32.xlu0 %v2623
    %v2625 = vpop.xlane.xlu0 %2624
    %v2626 = vrcp.pop %v2616
    %v2627 = vmul.f32 %v2607, %v2626
    %v2628 = vrcp.pop %v2619
    %v2629 = vmul.f32 %v2609, %v2628
    %v2630 = vrcp.pop %v2622
    %v2631 = vmul.f32 %v2611, %v2630
    %v2632 = vrcp.pop %v2625
    %v2633 = vmul.f32 %v2613, %v2632
    %2634 = vmatprep.subr.mxu0 0.0
    %2635 = vmatpush1.msra.mxu0 0.0
    %2636 = vmatprep.subr.mxu0 0.0
    %2637 = vmatpush1.msra.mxu0 0.0
    %2638 = vmatprep.subr.mxu0 0.0
    %2639 = vmatpush1.msra.mxu0 0.0
    %2640 = vmatprep.subr.mxu0 0.0
    %2641 = vmatpush1.msra.mxu0 0.0
    %2642 = vmatprep.subr.mxu0 0.0
    %2643 = vmatpush1.msra.mxu0 0.0
    %2644 = vmatprep.subr.mxu0 0.0
    %2645 = vmatpush1.msra.mxu0 0.0
    %2646 = vmatprep.subr.mxu0 0.0
    %2647 = vmatpush1.msra.mxu0 0.0
    %2648 = vmatprep.subr.mxu0 0.0
    %2649 = vmatpush1.msra.mxu0 0.0
    %2650 = vmatprep.subr.mxu0 0.0
    %2651 = vmatpush1.msra.mxu0 0.0
    %2652 = vmatprep.subr.mxu0 0.0
    %2653 = vmatpush1.msra.mxu0 0.0
    %2654 = vmatprep.subr.mxu0 0.0
    %2655 = vmatpush1.msra.mxu0 0.0
    %2656 = vmatprep.subr.mxu0 0.0
    %2657 = vmatpush1.msra.mxu0 0.0
    %2658 = vmatprep.subr.mxu0 0.0
    %2659 = vmatpush1.msra.mxu0 %v2297
    %2660 = vmatprep.subr.mxu0 0.0
    %2661 = vmatpush1.msra.mxu0 %v2296
    %2662 = vmatprep.subr.mxu0 0.0
    %2663 = vmatpush1.msra.mxu0 %v2295
    %2664 = vmatprep.subr.mxu0 0.0
    %2665 = vmatpush1.msra.mxu0 %v2294
    %2666 = vmatprep.subr.mxu0 0.0
    %2667 = vmatpush2.msra.mxu0 0.0
    %2668 = vmatprep.subr.mxu0 0.0
    %2669 = vmatpush2.msra.mxu0 0.0
    %2670 = vmatprep.subr.mxu0 0.0
    %2671 = vmatpush2.msra.mxu0 0.0
    %2672 = vmatprep.subr.mxu0 0.0
    %2673 = vmatpush2.msra.mxu0 0.0
    %2674 = vmatprep.subr.mxu0 0.0
    %2675 = vmatpush2.msra.mxu0 0.0
    %2676 = vmatprep.subr.mxu0 0.0
    %2677 = vmatpush2.msra.mxu0 0.0
    %2678 = vmatprep.subr.mxu0 0.0
    %2679 = vmatpush2.msra.mxu0 0.0
    %2680 = vmatprep.subr.mxu0 0.0
    %2681 = vmatpush2.msra.mxu0 0.0
    %2682 = vmatprep.subr.mxu0 0.0
    %2683 = vmatpush2.msra.mxu0 0.0
    %2684 = vmatprep.subr.mxu0 0.0
    %2685 = vmatpush2.msra.mxu0 0.0
    %2686 = vmatprep.subr.mxu0 0.0
    %2687 = vmatpush2.msra.mxu0 0.0
    %2688 = vmatprep.subr.mxu0 0.0
    %2689 = vmatpush2.msra.mxu0 0.0
    %2690 = vmatprep.subr.mxu0 0.0
    %2691 = vmatpush2.msra.mxu0 0.0
    %2692 = vmatprep.subr.mxu0 0.0
    %2693 = vmatpush2.msra.mxu0 0.0
    %2694 = vmatprep.subr.mxu0 0.0
    %2695 = vmatpush2.msra.mxu0 0.0
    %2696 = vmatprep.subr.mxu0 0.0
    %2697 = vmatpush2.msra.mxu0 0.0
    %2698 = vmatprep.mubr.f32.mxu0 0.0
    %2699 = vmatmul.mubr.f32.gmra.mxu0 %v2397
    %v2700 = vpop.f32.mrf.mxu0
    %v2701 = vadd.f32 0.0, %v2700
    %v2702 = vpop.f32.mrf.mxu0
    %2703 = vmatprep.mubr.f32.mxu0 0.0
    %2704 = vmatmul.mubr.f32.gmra.mxu0 %v2400
    %v2705 = vpop.f32.mrf.mxu0
    %v2706 = vadd.f32 0.0, %v2705
    %v2707 = vpop.f32.mrf.mxu0
    %2708 = vmatprep.mubr.f32.mxu0 0.0
    %2709 = vmatmul.mubr.f32.gmra.mxu0 %v2403
    %v2710 = vpop.f32.mrf.mxu0
    %v2711 = vadd.f32 0.0, %v2710
    %v2712 = vpop.f32.mrf.mxu0
    %2713 = vmatprep.mubr.f32.mxu0 0.0
    %2714 = vmatmul.mubr.f32.gmra.mxu0 %v2406
    %v2715 = vpop.f32.mrf.mxu0
    %v2716 = vadd.f32 0.0, %v2715
    %v2717 = vpop.f32.mrf.mxu0
    %2718 = vdwg.mxu0
    %2719 = vmatprep.subr.mxu0 0.0
    %2720 = vmatpush1.msra.mxu0 0.0
    %2721 = vmatprep.subr.mxu0 0.0
    %2722 = vmatpush1.msra.mxu0 0.0
    %2723 = vmatprep.subr.mxu0 0.0
    %2724 = vmatpush1.msra.mxu0 0.0
    %2725 = vmatprep.subr.mxu0 0.0
    %2726 = vmatpush1.msra.mxu0 0.0
    %2727 = vmatprep.subr.mxu0 0.0
    %2728 = vmatpush1.msra.mxu0 0.0
    %2729 = vmatprep.subr.mxu0 0.0
    %2730 = vmatpush1.msra.mxu0 0.0
    %2731 = vmatprep.subr.mxu0 0.0
    %2732 = vmatpush1.msra.mxu0 0.0
    %2733 = vmatprep.subr.mxu0 0.0
    %2734 = vmatpush1.msra.mxu0 0.0
    %2735 = vmatprep.subr.mxu0 0.0
    %2736 = vmatpush1.msra.mxu0 0.0
    %2737 = vmatprep.subr.mxu0 0.0
    %2738 = vmatpush1.msra.mxu0 0.0
    %2739 = vmatprep.subr.mxu0 0.0
    %2740 = vmatpush1.msra.mxu0 0.0
    %2741 = vmatprep.subr.mxu0 0.0
    %2742 = vmatpush1.msra.mxu0 0.0
    %2743 = vmatprep.subr.mxu0 0.0
    %2744 = vmatpush1.msra.mxu0 %v2284
    %2745 = vmatprep.subr.mxu0 0.0
    %2746 = vmatpush1.msra.mxu0 %v2283
    %2747 = vmatprep.subr.mxu0 0.0
    %2748 = vmatpush1.msra.mxu0 %v2282
    %2749 = vmatprep.subr.mxu0 0.0
    %2750 = vmatpush1.msra.mxu0 %v2281
    %2751 = vmatprep.subr.mxu0 0.0
    %2752 = vmatpush2.msra.mxu0 0.0
    %2753 = vmatprep.subr.mxu0 0.0
    %2754 = vmatpush2.msra.mxu0 0.0
    %2755 = vmatprep.subr.mxu0 0.0
    %2756 = vmatpush2.msra.mxu0 0.0
    %2757 = vmatprep.subr.mxu0 0.0
    %2758 = vmatpush2.msra.mxu0 0.0
    %2759 = vmatprep.subr.mxu0 0.0
    %2760 = vmatpush2.msra.mxu0 0.0
    %2761 = vmatprep.subr.mxu0 0.0
    %2762 = vmatpush2.msra.mxu0 0.0
    %2763 = vmatprep.subr.mxu0 0.0
    %2764 = vmatpush2.msra.mxu0 0.0
    %2765 = vmatprep.subr.mxu0 0.0
    %2766 = vmatpush2.msra.mxu0 0.0
    %2767 = vmatprep.subr.mxu0 0.0
    %2768 = vmatpush2.msra.mxu0 0.0
    %2769 = vmatprep.subr.mxu0 0.0
    %2770 = vmatpush2.msra.mxu0 0.0
    %2771 = vmatprep.subr.mxu0 0.0
    %2772 = vmatpush2.msra.mxu0 0.0
    %2773 = vmatprep.subr.mxu0 0.0
    %2774 = vmatpush2.msra.mxu0 0.0
    %2775 = vmatprep.subr.mxu0 0.0
    %2776 = vmatpush2.msra.mxu0 0.0
    %2777 = vmatprep.subr.mxu0 0.0
    %2778 = vmatpush2.msra.mxu0 0.0
    %2779 = vmatprep.subr.mxu0 0.0
    %2780 = vmatpush2.msra.mxu0 0.0
    %2781 = vmatprep.subr.mxu0 0.0
    %2782 = vmatpush2.msra.mxu0 0.0
    %2783 = vmatprep.mubr.f32.mxu0 0.0
    %2784 = vmatmul.mubr.f32.gmra.mxu0 %v2397
    %v2785 = vpop.f32.mrf.mxu0
    %v2786 = vadd.f32 0.0, %v2785
    %v2787 = vpop.f32.mrf.mxu0
    %2788 = vmatprep.mubr.f32.mxu0 0.0
    %2789 = vmatmul.mubr.f32.gmra.mxu0 %v2400
    %v2790 = vpop.f32.mrf.mxu0
    %v2791 = vadd.f32 0.0, %v2790
    %v2792 = vpop.f32.mrf.mxu0
    %2793 = vmatprep.mubr.f32.mxu0 0.0
    %2794 = vmatmul.mubr.f32.gmra.mxu0 %v2403
    %v2795 = vpop.f32.mrf.mxu0
    %v2796 = vadd.f32 0.0, %v2795
    %v2797 = vpop.f32.mrf.mxu0
    %2798 = vmatprep.mubr.f32.mxu0 0.0
    %2799 = vmatmul.mubr.f32.gmra.mxu0 %v2406
    %v2800 = vpop.f32.mrf.mxu0
    %v2801 = vadd.f32 0.0, %v2800
    %v2802 = vpop.f32.mrf.mxu0
    %2803 = vdwg.mxu0
    %v2805 = vsel %vm156, %v2786, 0
    %v2808 = vsel %vm156, %v2791, 0
    %v2811 = vsel %vm156, %v2796, 0
    %v2814 = vsel %vm156, %v2801, 0
    %2816 = vmatprep.subr.mxu0 0.0
    %2817 = vmatpush1.xpose.msra.mxu0 0.0
    %2818 = vmatprep.subr.mxu0 0.0
    %2819 = vmatpush1.xpose.msra.mxu0 0.0
    %2820 = vmatprep.subr.mxu0 0.0
    %2821 = vmatpush1.xpose.msra.mxu0 0.0
    %2822 = vmatprep.subr.mxu0 0.0
    %2823 = vmatpush1.xpose.msra.mxu0 0.0
    %2824 = vmatprep.subr.mxu0 0.0
    %2825 = vmatpush1.xpose.msra.mxu0 0.0
    %2826 = vmatprep.subr.mxu0 0.0
    %2827 = vmatpush1.xpose.msra.mxu0 0.0
    %2828 = vmatprep.subr.mxu0 0.0
    %2829 = vmatpush1.xpose.msra.mxu0 0.0
    %2830 = vmatprep.subr.mxu0 0.0
    %2831 = vmatpush1.xpose.msra.mxu0 0.0
    %2832 = vmatprep.subr.mxu0 0.0
    %2833 = vmatpush1.xpose.msra.mxu0 0.0
    %2834 = vmatprep.subr.mxu0 0.0
    %2835 = vmatpush1.xpose.msra.mxu0 0.0
    %2836 = vmatprep.subr.mxu0 0.0
    %2837 = vmatpush1.xpose.msra.mxu0 0.0
    %2838 = vmatprep.subr.mxu0 0.0
    %2839 = vmatpush1.xpose.msra.mxu0 0.0
    %2840 = vmatprep.subr.mxu0 0.0
    %2841 = vmatpush1.xpose.msra.mxu0 %v2406
    %2842 = vmatprep.subr.mxu0 0.0
    %2843 = vmatpush1.xpose.msra.mxu0 %v2403
    %2844 = vmatprep.subr.mxu0 0.0
    %2845 = vmatpush1.xpose.msra.mxu0 %v2400
    %2846 = vmatprep.subr.mxu0 0.0
    %2847 = vmatpush1.xpose.msra.mxu0 %v2397
    %2848 = vmatprep.subr.mxu0 0.0
    %2849 = vmatpush2.xpose.msra.mxu0 0.0
    %2850 = vmatprep.subr.mxu0 0.0
    %2851 = vmatpush2.xpose.msra.mxu0 0.0
    %2852 = vmatprep.subr.mxu0 0.0
    %2853 = vmatpush2.xpose.msra.mxu0 0.0
    %2854 = vmatprep.subr.mxu0 0.0
    %2855 = vmatpush2.xpose.msra.mxu0 0.0
    %2856 = vmatprep.subr.mxu0 0.0
    %2857 = vmatpush2.xpose.msra.mxu0 0.0
    %2858 = vmatprep.subr.mxu0 0.0
    %2859 = vmatpush2.xpose.msra.mxu0 0.0
    %2860 = vmatprep.subr.mxu0 0.0
    %2861 = vmatpush2.xpose.msra.mxu0 0.0
    %2862 = vmatprep.subr.mxu0 0.0
    %2863 = vmatpush2.xpose.msra.mxu0 0.0
    %2864 = vmatprep.subr.mxu0 0.0
    %2865 = vmatpush2.xpose.msra.mxu0 0.0
    %2866 = vmatprep.subr.mxu0 0.0
    %2867 = vmatpush2.xpose.msra.mxu0 0.0
    %2868 = vmatprep.subr.mxu0 0.0
    %2869 = vmatpush2.xpose.msra.mxu0 0.0
    %2870 = vmatprep.subr.mxu0 0.0
    %2871 = vmatpush2.xpose.msra.mxu0 0.0
    %2872 = vmatprep.subr.mxu0 0.0
    %2873 = vmatpush2.xpose.msra.mxu0 0.0
    %2874 = vmatprep.subr.mxu0 0.0
    %2875 = vmatpush2.xpose.msra.mxu0 0.0
    %2876 = vmatprep.subr.mxu0 0.0
    %2877 = vmatpush2.xpose.msra.mxu0 0.0
    %2878 = vmatprep.subr.mxu0 0.0
    %2879 = vmatpush2.xpose.msra.mxu0 0.0
    %2880 = vmatprep.mubr.f32.mxu0 0.0
    %2881 = vmatmul.mubr.f32.gmra.mxu0 %v2805
    %v2882 = vpop.f32.mrf.mxu0
    %v2883 = vadd.f32 %v103, %v2882
    %v2884 = vpop.f32.mrf.mxu0
    %2885 = vmatprep.mubr.f32.mxu0 0.0
    %2886 = vmatmul.mubr.f32.gmra.mxu0 %v2808
    %v2887 = vpop.f32.mrf.mxu0
    %v2888 = vadd.f32 %v104, %v2887
    %v2889 = vpop.f32.mrf.mxu0
    %2890 = vmatprep.mubr.f32.mxu0 0.0
    %2891 = vmatmul.mubr.f32.gmra.mxu0 %v2811
    %v2892 = vpop.f32.mrf.mxu0
    %v2893 = vadd.f32 %v105, %v2892
    %v2894 = vpop.f32.mrf.mxu0
    %2895 = vmatprep.mubr.f32.mxu0 0.0
    %2896 = vmatmul.mubr.f32.gmra.mxu0 %v2814
    %v2897 = vpop.f32.mrf.mxu0
    %v2898 = vadd.f32 %v106, %v2897
    %v2899 = vpop.f32.mrf.mxu0
    %2900 = vdwg.mxu0
    %v2901 = vsel %vm156, %v2883, -inf
    %2902 = vmax.xlane.f32.xlu0 %v2901
    %v2903 = vpop.xlane.xlu0 %2902
    %v2904 = vsel %vm156, %v2888, -inf
    %2905 = vmax.xlane.f32.xlu0 %v2904
    %v2906 = vpop.xlane.xlu0 %2905
    %v2907 = vsel %vm156, %v2893, -inf
    %2908 = vmax.xlane.f32.xlu0 %v2907
    %v2909 = vpop.xlane.xlu0 %2908
    %v2910 = vsel %vm156, %v2898, -inf
    %2911 = vmax.xlane.f32.xlu0 %v2910
    %v2912 = vpop.xlane.xlu0 %2911
    %v2913 = vsub.f32 %v2883, %v2903
    %v2914 = vsub.f32 %v2888, %v2906
    %v2915 = vsub.f32 %v2893, %v2909
    %v2916 = vsub.f32 %v2898, %v2912
    %v2917 = vmul.f32 %v2913, 1.442695
    %v2918 = vpow.pop %v2917
    %v2919 = vmul.f32 %v2914, 1.442695
    %v2920 = vpow.pop %v2919
    %v2921 = vmul.f32 %v2915, 1.442695
    %v2922 = vpow.pop %v2921
    %v2923 = vmul.f32 %v2916, 1.442695
    %v2924 = vpow.pop %v2923
    %v2925 = vsel %vm156, %v2918, 0.0
    %2926 = vadd.xlane.f32.xlu0 %v2925
    %v2927 = vpop.xlane.xlu0 %2926
    %v2928 = vsel %vm156, %v2920, 0.0
    %2929 = vadd.xlane.f32.xlu0 %v2928
    %v2930 = vpop.xlane.xlu0 %2929
    %v2931 = vsel %vm156, %v2922, 0.0
    %2932 = vadd.xlane.f32.xlu0 %v2931
    %v2933 = vpop.xlane.xlu0 %2932
    %v2934 = vsel %vm156, %v2924, 0.0
    %2935 = vadd.xlane.f32.xlu0 %v2934
    %v2936 = vpop.xlane.xlu0 %2935
    %v2937 = vrcp.pop %v2927
    %v2938 = vmul.f32 %v2918, %v2937
    %v2939 = vrcp.pop %v2930
    %v2940 = vmul.f32 %v2920, %v2939
    %v2941 = vrcp.pop %v2933
    %v2942 = vmul.f32 %v2922, %v2941
    %v2943 = vrcp.pop %v2936
    %v2944 = vmul.f32 %v2924, %v2943
    %2945 = vmatprep.subr.mxu0 0.0
    %2946 = vmatpush1.msra.mxu0 0.0
    %2947 = vmatprep.subr.mxu0 0.0
    %2948 = vmatpush1.msra.mxu0 0.0
    %2949 = vmatprep.subr.mxu0 0.0
    %2950 = vmatpush1.msra.mxu0 0.0
    %2951 = vmatprep.subr.mxu0 0.0
    %2952 = vmatpush1.msra.mxu0 0.0
    %2953 = vmatprep.subr.mxu0 0.0
    %2954 = vmatpush1.msra.mxu0 0.0
    %2955 = vmatprep.subr.mxu0 0.0
    %2956 = vmatpush1.msra.mxu0 0.0
    %2957 = vmatprep.subr.mxu0 0.0
    %2958 = vmatpush1.msra.mxu0 0.0
    %2959 = vmatprep.subr.mxu0 0.0
    %2960 = vmatpush1.msra.mxu0 0.0
    %2961 = vmatprep.subr.mxu0 0.0
    %2962 = vmatpush1.msra.mxu0 0.0
    %2963 = vmatprep.subr.mxu0 0.0
    %2964 = vmatpush1.msra.mxu0 0.0
    %2965 = vmatprep.subr.mxu0 0.0
    %2966 = vmatpush1.msra.mxu0 0.0
    %2967 = vmatprep.subr.mxu0 0.0
    %2968 = vmatpush1.msra.mxu0 0.0
    %2969 = vmatprep.subr.mxu0 0.0
    %2970 = vmatpush1.msra.mxu0 %v2301
    %2971 = vmatprep.subr.mxu0 0.0
    %2972 = vmatpush1.msra.mxu0 %v2300
    %2973 = vmatprep.subr.mxu0 0.0
    %2974 = vmatpush1.msra.mxu0 %v2299
    %2975 = vmatprep.subr.mxu0 0.0
    %2976 = vmatpush1.msra.mxu0 %v2298
    %2977 = vmatprep.subr.mxu0 0.0
    %2978 = vmatpush2.msra.mxu0 0.0
    %2979 = vmatprep.subr.mxu0 0.0
    %2980 = vmatpush2.msra.mxu0 0.0
    %2981 = vmatprep.subr.mxu0 0.0
    %2982 = vmatpush2.msra.mxu0 0.0
    %2983 = vmatprep.subr.mxu0 0.0
    %2984 = vmatpush2.msra.mxu0 0.0
    %2985 = vmatprep.subr.mxu0 0.0
    %2986 = vmatpush2.msra.mxu0 0.0
    %2987 = vmatprep.subr.mxu0 0.0
    %2988 = vmatpush2.msra.mxu0 0.0
    %2989 = vmatprep.subr.mxu0 0.0
    %2990 = vmatpush2.msra.mxu0 0.0
    %2991 = vmatprep.subr.mxu0 0.0
    %2992 = vmatpush2.msra.mxu0 0.0
    %2993 = vmatprep.subr.mxu0 0.0
    %2994 = vmatpush2.msra.mxu0 0.0
    %2995 = vmatprep.subr.mxu0 0.0
    %2996 = vmatpush2.msra.mxu0 0.0
    %2997 = vmatprep.subr.mxu0 0.0
    %2998 = vmatpush2.msra.mxu0 0.0
    %2999 = vmatprep.subr.mxu0 0.0
    %3000 = vmatpush2.msra.mxu0 0.0
    %3001 = vmatprep.subr.mxu0 0.0
    %3002 = vmatpush2.msra.mxu0 0.0
    %3003 = vmatprep.subr.mxu0 0.0
    %3004 = vmatpush2.msra.mxu0 0.0
    %3005 = vmatprep.subr.mxu0 0.0
    %3006 = vmatpush2.msra.mxu0 0.0
    %3007 = vmatprep.subr.mxu0 0.0
    %3008 = vmatpush2.msra.mxu0 0.0
    %3009 = vmatprep.mubr.f32.mxu0 0.0
    %3010 = vmatmul.mubr.f32.gmra.mxu0 %v2397
    %v3011 = vpop.f32.mrf.mxu0
    %v3012 = vadd.f32 0.0, %v3011
    %v3013 = vpop.f32.mrf.mxu0
    %3014 = vmatprep.mubr.f32.mxu0 0.0
    %3015 = vmatmul.mubr.f32.gmra.mxu0 %v2400
    %v3016 = vpop.f32.mrf.mxu0
    %v3017 = vadd.f32 0.0, %v3016
    %v3018 = vpop.f32.mrf.mxu0
    %3019 = vmatprep.mubr.f32.mxu0 0.0
    %3020 = vmatmul.mubr.f32.gmra.mxu0 %v2403
    %v3021 = vpop.f32.mrf.mxu0
    %v3022 = vadd.f32 0.0, %v3021
    %v3023 = vpop.f32.mrf.mxu0
    %3024 = vmatprep.mubr.f32.mxu0 0.0
    %3025 = vmatmul.mubr.f32.gmra.mxu0 %v2406
    %v3026 = vpop.f32.mrf.mxu0
    %v3027 = vadd.f32 0.0, %v3026
    %v3028 = vpop.f32.mrf.mxu0
    %3029 = vdwg.mxu0
    %v3031 = vsel %vm156, %v2938, 0
    %v3034 = vsel %vm156, %v2940, 0
    %v3037 = vsel %vm156, %v2942, 0
    %v3040 = vsel %vm156, %v2944, 0
    %3042 = vmatprep.subr.mxu0 0.0
    %3043 = vmatpush1.msra.mxu0 0.0
    %3044 = vmatprep.subr.mxu0 0.0
    %3045 = vmatpush1.msra.mxu0 0.0
    %3046 = vmatprep.subr.mxu0 0.0
    %3047 = vmatpush1.msra.mxu0 0.0
    %3048 = vmatprep.subr.mxu0 0.0
    %3049 = vmatpush1.msra.mxu0 0.0
    %3050 = vmatprep.subr.mxu0 0.0
    %3051 = vmatpush1.msra.mxu0 0.0
    %3052 = vmatprep.subr.mxu0 0.0
    %3053 = vmatpush1.msra.mxu0 0.0
    %3054 = vmatprep.subr.mxu0 0.0
    %3055 = vmatpush1.msra.mxu0 0.0
    %3056 = vmatprep.subr.mxu0 0.0
    %3057 = vmatpush1.msra.mxu0 0.0
    %3058 = vmatprep.subr.mxu0 0.0
    %3059 = vmatpush1.msra.mxu0 0.0
    %3060 = vmatprep.subr.mxu0 0.0
    %3061 = vmatpush1.msra.mxu0 0.0
    %3062 = vmatprep.subr.mxu0 0.0
    %3063 = vmatpush1.msra.mxu0 0.0
    %3064 = vmatprep.subr.mxu0 0.0
    %3065 = vmatpush1.msra.mxu0 0.0
    %3066 = vmatprep.subr.mxu0 0.0
    %3067 = vmatpush1.msra.mxu0 %v3027
    %3068 = vmatprep.subr.mxu0 0.0
    %3069 = vmatpush1.msra.mxu0 %v3022
    %3070 = vmatprep.subr.mxu0 0.0
    %3071 = vmatpush1.msra.mxu0 %v3017
    %3072 = vmatprep.subr.mxu0 0.0
    %3073 = vmatpush1.msra.mxu0 %v3012
    %3074 = vmatprep.subr.mxu0 0.0
    %3075 = vmatpush2.msra.mxu0 0.0
    %3076 = vmatprep.subr.mxu0 0.0
    %3077 = vmatpush2.msra.mxu0 0.0
    %3078 = vmatprep.subr.mxu0 0.0
    %3079 = vmatpush2.msra.mxu0 0.0
    %3080 = vmatprep.subr.mxu0 0.0
    %3081 = vmatpush2.msra.mxu0 0.0
    %3082 = vmatprep.subr.mxu0 0.0
    %3083 = vmatpush2.msra.mxu0 0.0
    %3084 = vmatprep.subr.mxu0 0.0
    %3085 = vmatpush2.msra.mxu0 0.0
    %3086 = vmatprep.subr.mxu0 0.0
    %3087 = vmatpush2.msra.mxu0 0.0
    %3088 = vmatprep.subr.mxu0 0.0
    %3089 = vmatpush2.msra.mxu0 0.0
    %3090 = vmatprep.subr.mxu0 0.0
    %3091 = vmatpush2.msra.mxu0 0.0
    %3092 = vmatprep.subr.mxu0 0.0
    %3093 = vmatpush2.msra.mxu0 0.0
    %3094 = vmatprep.subr.mxu0 0.0
    %3095 = vmatpush2.msra.mxu0 0.0
    %3096 = vmatprep.subr.mxu0 0.0
    %3097 = vmatpush2.msra.mxu0 0.0
    %3098 = vmatprep.subr.mxu0 0.0
    %3099 = vmatpush2.msra.mxu0 0.0
    %3100 = vmatprep.subr.mxu0 0.0
    %3101 = vmatpush2.msra.mxu0 0.0
    %3102 = vmatprep.subr.mxu0 0.0
    %3103 = vmatpush2.msra.mxu0 0.0
    %3104 = vmatprep.subr.mxu0 0.0
    %3105 = vmatpush2.msra.mxu0 0.0
    %3106 = vmatprep.mubr.f32.mxu0 0.0
    %3107 = vmatmul.mubr.f32.gmra.mxu0 %v3031
    %v3108 = vpop.f32.mrf.mxu0
    %v3109 = vadd.f32 0.0, %v3108
    %v3110 = vpop.f32.mrf.mxu0
    %3111 = vmatprep.mubr.f32.mxu0 0.0
    %3112 = vmatmul.mubr.f32.gmra.mxu0 %v3034
    %v3113 = vpop.f32.mrf.mxu0
    %v3114 = vadd.f32 0.0, %v3113
    %v3115 = vpop.f32.mrf.mxu0
    %3116 = vmatprep.mubr.f32.mxu0 0.0
    %3117 = vmatmul.mubr.f32.gmra.mxu0 %v3037
    %v3118 = vpop.f32.mrf.mxu0
    %v3119 = vadd.f32 0.0, %v3118
    %v3120 = vpop.f32.mrf.mxu0
    %3121 = vmatprep.mubr.f32.mxu0 0.0
    %3122 = vmatmul.mubr.f32.gmra.mxu0 %v3040
    %v3123 = vpop.f32.mrf.mxu0
    %v3124 = vadd.f32 0.0, %v3123
    %v3125 = vpop.f32.mrf.mxu0
    %3126 = vdwg.mxu0
    %v3128 = vsel %vm156, %v2627, 0
    %v3131 = vsel %vm156, %v2629, 0
    %v3134 = vsel %vm156, %v2631, 0
    %v3137 = vsel %vm156, %v2633, 0
    %3139 = vmatprep.subr.mxu0 0.0
    %3140 = vmatpush1.msra.mxu0 0.0
    %3141 = vmatprep.subr.mxu0 0.0
    %3142 = vmatpush1.msra.mxu0 0.0
    %3143 = vmatprep.subr.mxu0 0.0
    %3144 = vmatpush1.msra.mxu0 0.0
    %3145 = vmatprep.subr.mxu0 0.0
    %3146 = vmatpush1.msra.mxu0 0.0
    %3147 = vmatprep.subr.mxu0 0.0
    %3148 = vmatpush1.msra.mxu0 0.0
    %3149 = vmatprep.subr.mxu0 0.0
    %3150 = vmatpush1.msra.mxu0 0.0
    %3151 = vmatprep.subr.mxu0 0.0
    %3152 = vmatpush1.msra.mxu0 0.0
    %3153 = vmatprep.subr.mxu0 0.0
    %3154 = vmatpush1.msra.mxu0 0.0
    %3155 = vmatprep.subr.mxu0 0.0
    %3156 = vmatpush1.msra.mxu0 0.0
    %3157 = vmatprep.subr.mxu0 0.0
    %3158 = vmatpush1.msra.mxu0 0.0
    %3159 = vmatprep.subr.mxu0 0.0
    %3160 = vmatpush1.msra.mxu0 0.0
    %3161 = vmatprep.subr.mxu0 0.0
    %3162 = vmatpush1.msra.mxu0 0.0
    %3163 = vmatprep.subr.mxu0 0.0
    %3164 = vmatpush1.msra.mxu0 %v2716
    %3165 = vmatprep.subr.mxu0 0.0
    %3166 = vmatpush1.msra.mxu0 %v2711
    %3167 = vmatprep.subr.mxu0 0.0
    %3168 = vmatpush1.msra.mxu0 %v2706
    %3169 = vmatprep.subr.mxu0 0.0
    %3170 = vmatpush1.msra.mxu0 %v2701
    %3171 = vmatprep.subr.mxu0 0.0
    %3172 = vmatpush2.msra.mxu0 0.0
    %3173 = vmatprep.subr.mxu0 0.0
    %3174 = vmatpush2.msra.mxu0 0.0
    %3175 = vmatprep.subr.mxu0 0.0
    %3176 = vmatpush2.msra.mxu0 0.0
    %3177 = vmatprep.subr.mxu0 0.0
    %3178 = vmatpush2.msra.mxu0 0.0
    %3179 = vmatprep.subr.mxu0 0.0
    %3180 = vmatpush2.msra.mxu0 0.0
    %3181 = vmatprep.subr.mxu0 0.0
    %3182 = vmatpush2.msra.mxu0 0.0
    %3183 = vmatprep.subr.mxu0 0.0
    %3184 = vmatpush2.msra.mxu0 0.0
    %3185 = vmatprep.subr.mxu0 0.0
    %3186 = vmatpush2.msra.mxu0 0.0
    %3187 = vmatprep.subr.mxu0 0.0
    %3188 = vmatpush2.msra.mxu0 0.0
    %3189 = vmatprep.subr.mxu0 0.0
    %3190 = vmatpush2.msra.mxu0 0.0
    %3191 = vmatprep.subr.mxu0 0.0
    %3192 = vmatpush2.msra.mxu0 0.0
    %3193 = vmatprep.subr.mxu0 0.0
    %3194 = vmatpush2.msra.mxu0 0.0
    %3195 = vmatprep.subr.mxu0 0.0
    %3196 = vmatpush2.msra.mxu0 0.0
    %3197 = vmatprep.subr.mxu0 0.0
    %3198 = vmatpush2.msra.mxu0 0.0
    %3199 = vmatprep.subr.mxu0 0.0
    %3200 = vmatpush2.msra.mxu0 0.0
    %3201 = vmatprep.subr.mxu0 0.0
    %3202 = vmatpush2.msra.mxu0 0.0
    %3203 = vmatprep.mubr.f32.mxu0 0.0
    %3204 = vmatmul.mubr.f32.gmra.mxu0 %v3128
    %v3205 = vpop.f32.mrf.mxu0
    %v3206 = vadd.f32 %v3109, %v3205
    %v3207 = vpop.f32.mrf.mxu0
    %3208 = vmatprep.mubr.f32.mxu0 0.0
    %3209 = vmatmul.mubr.f32.gmra.mxu0 %v3131
    %v3210 = vpop.f32.mrf.mxu0
    %v3211 = vadd.f32 %v3114, %v3210
    %v3212 = vpop.f32.mrf.mxu0
    %3213 = vmatprep.mubr.f32.mxu0 0.0
    %3214 = vmatmul.mubr.f32.gmra.mxu0 %v3134
    %v3215 = vpop.f32.mrf.mxu0
    %v3216 = vadd.f32 %v3119, %v3215
    %v3217 = vpop.f32.mrf.mxu0
    %3218 = vmatprep.mubr.f32.mxu0 0.0
    %3219 = vmatmul.mubr.f32.gmra.mxu0 %v3137
    %v3220 = vpop.f32.mrf.mxu0
    %v3221 = vadd.f32 %v3124, %v3220
    %v3222 = vpop.f32.mrf.mxu0
    %3223 = vdwg.mxu0
    %3224 = vmatprep.subr.mxu0 0.0
    %3225 = vmatpush1.msra.mxu0 0.0
    %3226 = vmatprep.subr.mxu0 0.0
    %3227 = vmatpush1.msra.mxu0 0.0
    %3228 = vmatprep.subr.mxu0 0.0
    %3229 = vmatpush1.msra.mxu0 0.0
    %3230 = vmatprep.subr.mxu0 0.0
    %3231 = vmatpush1.msra.mxu0 0.0
    %3232 = vmatprep.subr.mxu0 0.0
    %3233 = vmatpush1.msra.mxu0 0.0
    %3234 = vmatprep.subr.mxu0 0.0
    %3235 = vmatpush1.msra.mxu0 0.0
    %3236 = vmatprep.subr.mxu0 0.0
    %3237 = vmatpush1.msra.mxu0 0.0
    %3238 = vmatprep.subr.mxu0 0.0
    %3239 = vmatpush1.msra.mxu0 0.0
    %3240 = vmatprep.subr.mxu0 0.0
    %3241 = vmatpush1.msra.mxu0 0.0
    %3242 = vmatprep.subr.mxu0 0.0
    %3243 = vmatpush1.msra.mxu0 0.0
    %3244 = vmatprep.subr.mxu0 0.0
    %3245 = vmatpush1.msra.mxu0 0.0
    %3246 = vmatprep.subr.mxu0 0.0
    %3247 = vmatpush1.msra.mxu0 0.0
    %3248 = vmatprep.subr.mxu0 0.0
    %3249 = vmatpush1.msra.mxu0 %v2288
    %3250 = vmatprep.subr.mxu0 0.0
    %3251 = vmatpush1.msra.mxu0 %v2287
    %3252 = vmatprep.subr.mxu0 0.0
    %3253 = vmatpush1.msra.mxu0 %v2286
    %3254 = vmatprep.subr.mxu0 0.0
    %3255 = vmatpush1.msra.mxu0 %v2285
    %3256 = vmatprep.subr.mxu0 0.0
    %3257 = vmatpush2.msra.mxu0 0.0
    %3258 = vmatprep.subr.mxu0 0.0
    %3259 = vmatpush2.msra.mxu0 0.0
    %3260 = vmatprep.subr.mxu0 0.0
    %3261 = vmatpush2.msra.mxu0 0.0
    %3262 = vmatprep.subr.mxu0 0.0
    %3263 = vmatpush2.msra.mxu0 0.0
    %3264 = vmatprep.subr.mxu0 0.0
    %3265 = vmatpush2.msra.mxu0 0.0
    %3266 = vmatprep.subr.mxu0 0.0
    %3267 = vmatpush2.msra.mxu0 0.0
    %3268 = vmatprep.subr.mxu0 0.0
    %3269 = vmatpush2.msra.mxu0 0.0
    %3270 = vmatprep.subr.mxu0 0.0
    %3271 = vmatpush2.msra.mxu0 0.0
    %3272 = vmatprep.subr.mxu0 0.0
    %3273 = vmatpush2.msra.mxu0 0.0
    %3274 = vmatprep.subr.mxu0 0.0
    %3275 = vmatpush2.msra.mxu0 0.0
    %3276 = vmatprep.subr.mxu0 0.0
    %3277 = vmatpush2.msra.mxu0 0.0
    %3278 = vmatprep.subr.mxu0 0.0
    %3279 = vmatpush2.msra.mxu0 0.0
    %3280 = vmatprep.subr.mxu0 0.0
    %3281 = vmatpush2.msra.mxu0 0.0
    %3282 = vmatprep.subr.mxu0 0.0
    %3283 = vmatpush2.msra.mxu0 0.0
    %3284 = vmatprep.subr.mxu0 0.0
    %3285 = vmatpush2.msra.mxu0 0.0
    %3286 = vmatprep.subr.mxu0 0.0
    %3287 = vmatpush2.msra.mxu0 0.0
    %3288 = vmatprep.mubr.f32.mxu0 0.0
    %3289 = vmatmul.mubr.f32.gmra.mxu0 %v2397
    %v3290 = vpop.f32.mrf.mxu0
    %v3291 = vadd.f32 0.0, %v3290
    %v3292 = vpop.f32.mrf.mxu0
    %3293 = vmatprep.mubr.f32.mxu0 0.0
    %3294 = vmatmul.mubr.f32.gmra.mxu0 %v2400
    %v3295 = vpop.f32.mrf.mxu0
    %v3296 = vadd.f32 0.0, %v3295
    %v3297 = vpop.f32.mrf.mxu0
    %3298 = vmatprep.mubr.f32.mxu0 0.0
    %3299 = vmatmul.mubr.f32.gmra.mxu0 %v2403
    %v3300 = vpop.f32.mrf.mxu0
    %v3301 = vadd.f32 0.0, %v3300
    %v3302 = vpop.f32.mrf.mxu0
    %3303 = vmatprep.mubr.f32.mxu0 0.0
    %3304 = vmatmul.mubr.f32.gmra.mxu0 %v2406
    %v3305 = vpop.f32.mrf.mxu0
    %v3306 = vadd.f32 0.0, %v3305
    %v3307 = vpop.f32.mrf.mxu0
    %3308 = vdwg.mxu0
    %v3310 = vsel %vm156, %v3291, 0
    %v3313 = vsel %vm156, %v3296, 0
    %v3316 = vsel %vm156, %v3301, 0
    %v3319 = vsel %vm156, %v3306, 0
    %3321 = vmatprep.subr.mxu0 0.0
    %3322 = vmatpush1.xpose.msra.mxu0 0.0
    %3323 = vmatprep.subr.mxu0 0.0
    %3324 = vmatpush1.xpose.msra.mxu0 0.0
    %3325 = vmatprep.subr.mxu0 0.0
    %3326 = vmatpush1.xpose.msra.mxu0 0.0
    %3327 = vmatprep.subr.mxu0 0.0
    %3328 = vmatpush1.xpose.msra.mxu0 0.0
    %3329 = vmatprep.subr.mxu0 0.0
    %3330 = vmatpush1.xpose.msra.mxu0 0.0
    %3331 = vmatprep.subr.mxu0 0.0
    %3332 = vmatpush1.xpose.msra.mxu0 0.0
    %3333 = vmatprep.subr.mxu0 0.0
    %3334 = vmatpush1.xpose.msra.mxu0 0.0
    %3335 = vmatprep.subr.mxu0 0.0
    %3336 = vmatpush1.xpose.msra.mxu0 0.0
    %3337 = vmatprep.subr.mxu0 0.0
    %3338 = vmatpush1.xpose.msra.mxu0 0.0
    %3339 = vmatprep.subr.mxu0 0.0
    %3340 = vmatpush1.xpose.msra.mxu0 0.0
    %3341 = vmatprep.subr.mxu0 0.0
    %3342 = vmatpush1.xpose.msra.mxu0 0.0
    %3343 = vmatprep.subr.mxu0 0.0
    %3344 = vmatpush1.xpose.msra.mxu0 0.0
    %3345 = vmatprep.subr.mxu0 0.0
    %3346 = vmatpush1.xpose.msra.mxu0 %v2406
    %3347 = vmatprep.subr.mxu0 0.0
    %3348 = vmatpush1.xpose.msra.mxu0 %v2403
    %3349 = vmatprep.subr.mxu0 0.0
    %3350 = vmatpush1.xpose.msra.mxu0 %v2400
    %3351 = vmatprep.subr.mxu0 0.0
    %3352 = vmatpush1.xpose.msra.mxu0 %v2397
    %3353 = vmatprep.subr.mxu0 0.0
    %3354 = vmatpush2.xpose.msra.mxu0 0.0
    %3355 = vmatprep.subr.mxu0 0.0
    %3356 = vmatpush2.xpose.msra.mxu0 0.0
    %3357 = vmatprep.subr.mxu0 0.0
    %3358 = vmatpush2.xpose.msra.mxu0 0.0
    %3359 = vmatprep.subr.mxu0 0.0
    %3360 = vmatpush2.xpose.msra.mxu0 0.0
    %3361 = vmatprep.subr.mxu0 0.0
    %3362 = vmatpush2.xpose.msra.mxu0 0.0
    %3363 = vmatprep.subr.mxu0 0.0
    %3364 = vmatpush2.xpose.msra.mxu0 0.0
    %3365 = vmatprep.subr.mxu0 0.0
    %3366 = vmatpush2.xpose.msra.mxu0 0.0
    %3367 = vmatprep.subr.mxu0 0.0
    %3368 = vmatpush2.xpose.msra.mxu0 0.0
    %3369 = vmatprep.subr.mxu0 0.0
    %3370 = vmatpush2.xpose.msra.mxu0 0.0
    %3371 = vmatprep.subr.mxu0 0.0
    %3372 = vmatpush2.xpose.msra.mxu0 0.0
    %3373 = vmatprep.subr.mxu0 0.0
    %3374 = vmatpush2.xpose.msra.mxu0 0.0
    %3375 = vmatprep.subr.mxu0 0.0
    %3376 = vmatpush2.xpose.msra.mxu0 0.0
    %3377 = vmatprep.subr.mxu0 0.0
    %3378 = vmatpush2.xpose.msra.mxu0 0.0
    %3379 = vmatprep.subr.mxu0 0.0
    %3380 = vmatpush2.xpose.msra.mxu0 0.0
    %3381 = vmatprep.subr.mxu0 0.0
    %3382 = vmatpush2.xpose.msra.mxu0 0.0
    %3383 = vmatprep.subr.mxu0 0.0
    %3384 = vmatpush2.xpose.msra.mxu0 0.0
    %3385 = vmatprep.mubr.f32.mxu0 0.0
    %3386 = vmatmul.mubr.f32.gmra.mxu0 %v3310
    %v3387 = vpop.f32.mrf.mxu0
    %v3388 = vadd.f32 %v103, %v3387
    %v3389 = vpop.f32.mrf.mxu0
    %3390 = vmatprep.mubr.f32.mxu0 0.0
    %3391 = vmatmul.mubr.f32.gmra.mxu0 %v3313
    %v3392 = vpop.f32.mrf.mxu0
    %v3393 = vadd.f32 %v104, %v3392
    %v3394 = vpop.f32.mrf.mxu0
    %3395 = vmatprep.mubr.f32.mxu0 0.0
    %3396 = vmatmul.mubr.f32.gmra.mxu0 %v3316
    %v3397 = vpop.f32.mrf.mxu0
    %v3398 = vadd.f32 %v105, %v3397
    %v3399 = vpop.f32.mrf.mxu0
    %3400 = vmatprep.mubr.f32.mxu0 0.0
    %3401 = vmatmul.mubr.f32.gmra.mxu0 %v3319
    %v3402 = vpop.f32.mrf.mxu0
    %v3403 = vadd.f32 %v106, %v3402
    %v3404 = vpop.f32.mrf.mxu0
    %3405 = vdwg.mxu0
    %v3406 = vsel %vm156, %v3388, -inf
    %3407 = vmax.xlane.f32.xlu0 %v3406
    %v3408 = vpop.xlane.xlu0 %3407
    %v3409 = vsel %vm156, %v3393, -inf
    %3410 = vmax.xlane.f32.xlu0 %v3409
    %v3411 = vpop.xlane.xlu0 %3410
    %v3412 = vsel %vm156, %v3398, -inf
    %3413 = vmax.xlane.f32.xlu0 %v3412
    %v3414 = vpop.xlane.xlu0 %3413
    %v3415 = vsel %vm156, %v3403, -inf
    %3416 = vmax.xlane.f32.xlu0 %v3415
    %v3417 = vpop.xlane.xlu0 %3416
    %v3418 = vsub.f32 %v3388, %v3408
    %v3419 = vsub.f32 %v3393, %v3411
    %v3420 = vsub.f32 %v3398, %v3414
    %v3421 = vsub.f32 %v3403, %v3417
    %v3422 = vmul.f32 %v3418, 1.442695
    %v3423 = vpow.pop %v3422
    %v3424 = vmul.f32 %v3419, 1.442695
    %v3425 = vpow.pop %v3424
    %v3426 = vmul.f32 %v3420, 1.442695
    %v3427 = vpow.pop %v3426
    %v3428 = vmul.f32 %v3421, 1.442695
    %v3429 = vpow.pop %v3428
    %v3430 = vsel %vm156, %v3423, 0.0
    %3431 = vadd.xlane.f32.xlu0 %v3430
    %v3432 = vpop.xlane.xlu0 %3431
    %v3433 = vsel %vm156, %v3425, 0.0
    %3434 = vadd.xlane.f32.xlu0 %v3433
    %v3435 = vpop.xlane.xlu0 %3434
    %v3436 = vsel %vm156, %v3427, 0.0
    %3437 = vadd.xlane.f32.xlu0 %v3436
    %v3438 = vpop.xlane.xlu0 %3437
    %v3439 = vsel %vm156, %v3429, 0.0
    %3440 = vadd.xlane.f32.xlu0 %v3439
    %v3441 = vpop.xlane.xlu0 %3440
    %v3442 = vrcp.pop %v3432
    %v3443 = vmul.f32 %v3423, %v3442
    %v3444 = vrcp.pop %v3435
    %v3445 = vmul.f32 %v3425, %v3444
    %v3446 = vrcp.pop %v3438
    %v3447 = vmul.f32 %v3427, %v3446
    %v3448 = vrcp.pop %v3441
    %v3449 = vmul.f32 %v3429, %v3448
    %3450 = vmatprep.subr.mxu0 0.0
    %3451 = vmatpush1.msra.mxu0 0.0
    %3452 = vmatprep.subr.mxu0 0.0
    %3453 = vmatpush1.msra.mxu0 0.0
    %3454 = vmatprep.subr.mxu0 0.0
    %3455 = vmatpush1.msra.mxu0 0.0
    %3456 = vmatprep.subr.mxu0 0.0
    %3457 = vmatpush1.msra.mxu0 0.0
    %3458 = vmatprep.subr.mxu0 0.0
    %3459 = vmatpush1.msra.mxu0 0.0
    %3460 = vmatprep.subr.mxu0 0.0
    %3461 = vmatpush1.msra.mxu0 0.0
    %3462 = vmatprep.subr.mxu0 0.0
    %3463 = vmatpush1.msra.mxu0 0.0
    %3464 = vmatprep.subr.mxu0 0.0
    %3465 = vmatpush1.msra.mxu0 0.0
    %3466 = vmatprep.subr.mxu0 0.0
    %3467 = vmatpush1.msra.mxu0 0.0
    %3468 = vmatprep.subr.mxu0 0.0
    %3469 = vmatpush1.msra.mxu0 0.0
    %3470 = vmatprep.subr.mxu0 0.0
    %3471 = vmatpush1.msra.mxu0 0.0
    %3472 = vmatprep.subr.mxu0 0.0
    %3473 = vmatpush1.msra.mxu0 0.0
    %3474 = vmatprep.subr.mxu0 0.0
    %3475 = vmatpush1.msra.mxu0 %v2305
    %3476 = vmatprep.subr.mxu0 0.0
    %3477 = vmatpush1.msra.mxu0 %v2304
    %3478 = vmatprep.subr.mxu0 0.0
    %3479 = vmatpush1.msra.mxu0 %v2303
    %3480 = vmatprep.subr.mxu0 0.0
    %3481 = vmatpush1.msra.mxu0 %v2302
    %3482 = vmatprep.subr.mxu0 0.0
    %3483 = vmatpush2.msra.mxu0 0.0
    %3484 = vmatprep.subr.mxu0 0.0
    %3485 = vmatpush2.msra.mxu0 0.0
    %3486 = vmatprep.subr.mxu0 0.0
    %3487 = vmatpush2.msra.mxu0 0.0
    %3488 = vmatprep.subr.mxu0 0.0
    %3489 = vmatpush2.msra.mxu0 0.0
    %3490 = vmatprep.subr.mxu0 0.0
    %3491 = vmatpush2.msra.mxu0 0.0
    %3492 = vmatprep.subr.mxu0 0.0
    %3493 = vmatpush2.msra.mxu0 0.0
    %3494 = vmatprep.subr.mxu0 0.0
    %3495 = vmatpush2.msra.mxu0 0.0
    %3496 = vmatprep.subr.mxu0 0.0
    %3497 = vmatpush2.msra.mxu0 0.0
    %3498 = vmatprep.subr.mxu0 0.0
    %3499 = vmatpush2.msra.mxu0 0.0
    %3500 = vmatprep.subr.mxu0 0.0
    %3501 = vmatpush2.msra.mxu0 0.0
    %3502 = vmatprep.subr.mxu0 0.0
    %3503 = vmatpush2.msra.mxu0 0.0
    %3504 = vmatprep.subr.mxu0 0.0
    %3505 = vmatpush2.msra.mxu0 0.0
    %3506 = vmatprep.subr.mxu0 0.0
    %3507 = vmatpush2.msra.mxu0 0.0
    %3508 = vmatprep.subr.mxu0 0.0
    %3509 = vmatpush2.msra.mxu0 0.0
    %3510 = vmatprep.subr.mxu0 0.0
    %3511 = vmatpush2.msra.mxu0 0.0
    %3512 = vmatprep.subr.mxu0 0.0
    %3513 = vmatpush2.msra.mxu0 0.0
    %3514 = vmatprep.mubr.f32.mxu0 0.0
    %3515 = vmatmul.mubr.f32.gmra.mxu0 %v2397
    %v3516 = vpop.f32.mrf.mxu0
    %v3517 = vadd.f32 0.0, %v3516
    %v3518 = vpop.f32.mrf.mxu0
    %3519 = vmatprep.mubr.f32.mxu0 0.0
    %3520 = vmatmul.mubr.f32.gmra.mxu0 %v2400
    %v3521 = vpop.f32.mrf.mxu0
    %v3522 = vadd.f32 0.0, %v3521
    %v3523 = vpop.f32.mrf.mxu0
    %3524 = vmatprep.mubr.f32.mxu0 0.0
    %3525 = vmatmul.mubr.f32.gmra.mxu0 %v2403
    %v3526 = vpop.f32.mrf.mxu0
    %v3527 = vadd.f32 0.0, %v3526
    %v3528 = vpop.f32.mrf.mxu0
    %3529 = vmatprep.mubr.f32.mxu0 0.0
    %3530 = vmatmul.mubr.f32.gmra.mxu0 %v2406
    %v3531 = vpop.f32.mrf.mxu0
    %v3532 = vadd.f32 0.0, %v3531
    %v3533 = vpop.f32.mrf.mxu0
    %3534 = vdwg.mxu0
    %v3536 = vsel %vm156, %v3443, 0
    %v3539 = vsel %vm156, %v3445, 0
    %v3542 = vsel %vm156, %v3447, 0
    %v3545 = vsel %vm156, %v3449, 0
    %3547 = vmatprep.subr.mxu0 0.0
    %3548 = vmatpush1.msra.mxu0 0.0
    %3549 = vmatprep.subr.mxu0 0.0
    %3550 = vmatpush1.msra.mxu0 0.0
    %3551 = vmatprep.subr.mxu0 0.0
    %3552 = vmatpush1.msra.mxu0 0.0
    %3553 = vmatprep.subr.mxu0 0.0
    %3554 = vmatpush1.msra.mxu0 0.0
    %3555 = vmatprep.subr.mxu0 0.0
    %3556 = vmatpush1.msra.mxu0 0.0
    %3557 = vmatprep.subr.mxu0 0.0
    %3558 = vmatpush1.msra.mxu0 0.0
    %3559 = vmatprep.subr.mxu0 0.0
    %3560 = vmatpush1.msra.mxu0 0.0
    %3561 = vmatprep.subr.mxu0 0.0
    %3562 = vmatpush1.msra.mxu0 0.0
    %3563 = vmatprep.subr.mxu0 0.0
    %3564 = vmatpush1.msra.mxu0 0.0
    %3565 = vmatprep.subr.mxu0 0.0
    %3566 = vmatpush1.msra.mxu0 0.0
    %3567 = vmatprep.subr.mxu0 0.0
    %3568 = vmatpush1.msra.mxu0 0.0
    %3569 = vmatprep.subr.mxu0 0.0
    %3570 = vmatpush1.msra.mxu0 0.0
    %3571 = vmatprep.subr.mxu0 0.0
    %3572 = vmatpush1.msra.mxu0 %v3532
    %3573 = vmatprep.subr.mxu0 0.0
    %3574 = vmatpush1.msra.mxu0 %v3527
    %3575 = vmatprep.subr.mxu0 0.0
    %3576 = vmatpush1.msra.mxu0 %v3522
    %3577 = vmatprep.subr.mxu0 0.0
    %3578 = vmatpush1.msra.mxu0 %v3517
    %3579 = vmatprep.subr.mxu0 0.0
    %3580 = vmatpush2.msra.mxu0 0.0
    %3581 = vmatprep.subr.mxu0 0.0
    %3582 = vmatpush2.msra.mxu0 0.0
    %3583 = vmatprep.subr.mxu0 0.0
    %3584 = vmatpush2.msra.mxu0 0.0
    %3585 = vmatprep.subr.mxu0 0.0
    %3586 = vmatpush2.msra.mxu0 0.0
    %3587 = vmatprep.subr.mxu0 0.0
    %3588 = vmatpush2.msra.mxu0 0.0
    %3589 = vmatprep.subr.mxu0 0.0
    %3590 = vmatpush2.msra.mxu0 0.0
    %3591 = vmatprep.subr.mxu0 0.0
    %3592 = vmatpush2.msra.mxu0 0.0
    %3593 = vmatprep.subr.mxu0 0.0
    %3594 = vmatpush2.msra.mxu0 0.0
    %3595 = vmatprep.subr.mxu0 0.0
    %3596 = vmatpush2.msra.mxu0 0.0
    %3597 = vmatprep.subr.mxu0 0.0
    %3598 = vmatpush2.msra.mxu0 0.0
    %3599 = vmatprep.subr.mxu0 0.0
    %3600 = vmatpush2.msra.mxu0 0.0
    %3601 = vmatprep.subr.mxu0 0.0
    %3602 = vmatpush2.msra.mxu0 0.0
    %3603 = vmatprep.subr.mxu0 0.0
    %3604 = vmatpush2.msra.mxu0 0.0
    %3605 = vmatprep.subr.mxu0 0.0
    %3606 = vmatpush2.msra.mxu0 0.0
    %3607 = vmatprep.subr.mxu0 0.0
    %3608 = vmatpush2.msra.mxu0 0.0
    %3609 = vmatprep.subr.mxu0 0.0
    %3610 = vmatpush2.msra.mxu0 0.0
    %3611 = vmatprep.mubr.f32.mxu0 0.0
    %3612 = vmatmul.mubr.f32.gmra.mxu0 %v3536
    %v3613 = vpop.f32.mrf.mxu0
    %v3614 = vadd.f32 0.0, %v3613
    %v3615 = vpop.f32.mrf.mxu0
    %3616 = vmatprep.mubr.f32.mxu0 0.0
    %3617 = vmatmul.mubr.f32.gmra.mxu0 %v3539
    %v3618 = vpop.f32.mrf.mxu0
    %v3619 = vadd.f32 0.0, %v3618
    %v3620 = vpop.f32.mrf.mxu0
    %3621 = vmatprep.mubr.f32.mxu0 0.0
    %3622 = vmatmul.mubr.f32.gmra.mxu0 %v3542
    %v3623 = vpop.f32.mrf.mxu0
    %v3624 = vadd.f32 0.0, %v3623
    %v3625 = vpop.f32.mrf.mxu0
    %3626 = vmatprep.mubr.f32.mxu0 0.0
    %3627 = vmatmul.mubr.f32.gmra.mxu0 %v3545
    %v3628 = vpop.f32.mrf.mxu0
    %v3629 = vadd.f32 0.0, %v3628
    %v3630 = vpop.f32.mrf.mxu0
    %3631 = vdwg.mxu0
    %v3632 = vadd.f32 %v3206, %v3614
    %v3633 = vadd.f32 %v3211, %v3619
    %v3634 = vadd.f32 %v3216, %v3624
    %v3635 = vadd.f32 %v3221, %v3629
    %3636 = vmatprep.subr.mxu0 0.0
    %3637 = vmatpush1.msra.mxu0 0.0
    %3638 = vmatprep.subr.mxu0 0.0
    %3639 = vmatpush1.msra.mxu0 0.0
    %3640 = vmatprep.subr.mxu0 0.0
    %3641 = vmatpush1.msra.mxu0 0.0
    %3642 = vmatprep.subr.mxu0 0.0
    %3643 = vmatpush1.msra.mxu0 0.0
    %3644 = vmatprep.subr.mxu0 0.0
    %3645 = vmatpush1.msra.mxu0 0.0
    %3646 = vmatprep.subr.mxu0 0.0
    %3647 = vmatpush1.msra.mxu0 0.0
    %3648 = vmatprep.subr.mxu0 0.0
    %3649 = vmatpush1.msra.mxu0 0.0
    %3650 = vmatprep.subr.mxu0 0.0
    %3651 = vmatpush1.msra.mxu0 0.0
    %3652 = vmatprep.subr.mxu0 0.0
    %3653 = vmatpush1.msra.mxu0 0.0
    %3654 = vmatprep.subr.mxu0 0.0
    %3655 = vmatpush1.msra.mxu0 0.0
    %3656 = vmatprep.subr.mxu0 0.0
    %3657 = vmatpush1.msra.mxu0 0.0
    %3658 = vmatprep.subr.mxu0 0.0
    %3659 = vmatpush1.msra.mxu0 0.0
    %3660 = vmatprep.subr.mxu0 0.0
    %3661 = vmatpush1.msra.mxu0 %v2292
    %3662 = vmatprep.subr.mxu0 0.0
    %3663 = vmatpush1.msra.mxu0 %v2291
    %3664 = vmatprep.subr.mxu0 0.0
    %3665 = vmatpush1.msra.mxu0 %v2290
    %3666 = vmatprep.subr.mxu0 0.0
    %3667 = vmatpush1.msra.mxu0 %v2289
    %3668 = vmatprep.subr.mxu0 0.0
    %3669 = vmatpush2.msra.mxu0 0.0
    %3670 = vmatprep.subr.mxu0 0.0
    %3671 = vmatpush2.msra.mxu0 0.0
    %3672 = vmatprep.subr.mxu0 0.0
    %3673 = vmatpush2.msra.mxu0 0.0
    %3674 = vmatprep.subr.mxu0 0.0
    %3675 = vmatpush2.msra.mxu0 0.0
    %3676 = vmatprep.subr.mxu0 0.0
    %3677 = vmatpush2.msra.mxu0 0.0
    %3678 = vmatprep.subr.mxu0 0.0
    %3679 = vmatpush2.msra.mxu0 0.0
    %3680 = vmatprep.subr.mxu0 0.0
    %3681 = vmatpush2.msra.mxu0 0.0
    %3682 = vmatprep.subr.mxu0 0.0
    %3683 = vmatpush2.msra.mxu0 0.0
    %3684 = vmatprep.subr.mxu0 0.0
    %3685 = vmatpush2.msra.mxu0 0.0
    %3686 = vmatprep.subr.mxu0 0.0
    %3687 = vmatpush2.msra.mxu0 0.0
    %3688 = vmatprep.subr.mxu0 0.0
    %3689 = vmatpush2.msra.mxu0 0.0
    %3690 = vmatprep.subr.mxu0 0.0
    %3691 = vmatpush2.msra.mxu0 0.0
    %3692 = vmatprep.subr.mxu0 0.0
    %3693 = vmatpush2.msra.mxu0 0.0
    %3694 = vmatprep.subr.mxu0 0.0
    %3695 = vmatpush2.msra.mxu0 0.0
    %3696 = vmatprep.subr.mxu0 0.0
    %3697 = vmatpush2.msra.mxu0 0.0
    %3698 = vmatprep.subr.mxu0 0.0
    %3699 = vmatpush2.msra.mxu0 0.0
    %3700 = vmatprep.mubr.f32.mxu0 0.0
    %3701 = vmatmul.mubr.f32.gmra.mxu0 %v2397
    %v3702 = vpop.f32.mrf.mxu0
    %v3703 = vadd.f32 0.0, %v3702
    %v3704 = vpop.f32.mrf.mxu0
    %3705 = vmatprep.mubr.f32.mxu0 0.0
    %3706 = vmatmul.mubr.f32.gmra.mxu0 %v2400
    %v3707 = vpop.f32.mrf.mxu0
    %v3708 = vadd.f32 0.0, %v3707
    %v3709 = vpop.f32.mrf.mxu0
    %3710 = vmatprep.mubr.f32.mxu0 0.0
    %3711 = vmatmul.mubr.f32.gmra.mxu0 %v2403
    %v3712 = vpop.f32.mrf.mxu0
    %v3713 = vadd.f32 0.0, %v3712
    %v3714 = vpop.f32.mrf.mxu0
    %3715 = vmatprep.mubr.f32.mxu0 0.0
    %3716 = vmatmul.mubr.f32.gmra.mxu0 %v2406
    %v3717 = vpop.f32.mrf.mxu0
    %v3718 = vadd.f32 0.0, %v3717
    %v3719 = vpop.f32.mrf.mxu0
    %3720 = vdwg.mxu0
    %v3722 = vsel %vm156, %v3703, 0
    %v3725 = vsel %vm156, %v3708, 0
    %v3728 = vsel %vm156, %v3713, 0
    %v3731 = vsel %vm156, %v3718, 0
    %3733 = vmatprep.subr.mxu0 0.0
    %3734 = vmatpush1.xpose.msra.mxu0 0.0
    %3735 = vmatprep.subr.mxu0 0.0
    %3736 = vmatpush1.xpose.msra.mxu0 0.0
    %3737 = vmatprep.subr.mxu0 0.0
    %3738 = vmatpush1.xpose.msra.mxu0 0.0
    %3739 = vmatprep.subr.mxu0 0.0
    %3740 = vmatpush1.xpose.msra.mxu0 0.0
    %3741 = vmatprep.subr.mxu0 0.0
    %3742 = vmatpush1.xpose.msra.mxu0 0.0
    %3743 = vmatprep.subr.mxu0 0.0
    %3744 = vmatpush1.xpose.msra.mxu0 0.0
    %3745 = vmatprep.subr.mxu0 0.0
    %3746 = vmatpush1.xpose.msra.mxu0 0.0
    %3747 = vmatprep.subr.mxu0 0.0
    %3748 = vmatpush1.xpose.msra.mxu0 0.0
    %3749 = vmatprep.subr.mxu0 0.0
    %3750 = vmatpush1.xpose.msra.mxu0 0.0
    %3751 = vmatprep.subr.mxu0 0.0
    %3752 = vmatpush1.xpose.msra.mxu0 0.0
    %3753 = vmatprep.subr.mxu0 0.0
    %3754 = vmatpush1.xpose.msra.mxu0 0.0
    %3755 = vmatprep.subr.mxu0 0.0
    %3756 = vmatpush1.xpose.msra.mxu0 0.0
    %3757 = vmatprep.subr.mxu0 0.0
    %3758 = vmatpush1.xpose.msra.mxu0 %v2406
    %3759 = vmatprep.subr.mxu0 0.0
    %3760 = vmatpush1.xpose.msra.mxu0 %v2403
    %3761 = vmatprep.subr.mxu0 0.0
    %3762 = vmatpush1.xpose.msra.mxu0 %v2400
    %3763 = vmatprep.subr.mxu0 0.0
    %3764 = vmatpush1.xpose.msra.mxu0 %v2397
    %3765 = vmatprep.subr.mxu0 0.0
    %3766 = vmatpush2.xpose.msra.mxu0 0.0
    %3767 = vmatprep.subr.mxu0 0.0
    %3768 = vmatpush2.xpose.msra.mxu0 0.0
    %3769 = vmatprep.subr.mxu0 0.0
    %3770 = vmatpush2.xpose.msra.mxu0 0.0
    %3771 = vmatprep.subr.mxu0 0.0
    %3772 = vmatpush2.xpose.msra.mxu0 0.0
    %3773 = vmatprep.subr.mxu0 0.0
    %3774 = vmatpush2.xpose.msra.mxu0 0.0
    %3775 = vmatprep.subr.mxu0 0.0
    %3776 = vmatpush2.xpose.msra.mxu0 0.0
    %3777 = vmatprep.subr.mxu0 0.0
    %3778 = vmatpush2.xpose.msra.mxu0 0.0
    %3779 = vmatprep.subr.mxu0 0.0
    %3780 = vmatpush2.xpose.msra.mxu0 0.0
    %3781 = vmatprep.subr.mxu0 0.0
    %3782 = vmatpush2.xpose.msra.mxu0 0.0
    %3783 = vmatprep.subr.mxu0 0.0
    %3784 = vmatpush2.xpose.msra.mxu0 0.0
    %3785 = vmatprep.subr.mxu0 0.0
    %3786 = vmatpush2.xpose.msra.mxu0 0.0
    %3787 = vmatprep.subr.mxu0 0.0
    %3788 = vmatpush2.xpose.msra.mxu0 0.0
    %3789 = vmatprep.subr.mxu0 0.0
    %3790 = vmatpush2.xpose.msra.mxu0 0.0
    %3791 = vmatprep.subr.mxu0 0.0
    %3792 = vmatpush2.xpose.msra.mxu0 0.0
    %3793 = vmatprep.subr.mxu0 0.0
    %3794 = vmatpush2.xpose.msra.mxu0 0.0
    %3795 = vmatprep.subr.mxu0 0.0
    %3796 = vmatpush2.xpose.msra.mxu0 0.0
    %3797 = vmatprep.mubr.f32.mxu0 0.0
    %3798 = vmatmul.mubr.f32.gmra.mxu0 %v3722
    %v3799 = vpop.f32.mrf.mxu0
    %v3800 = vadd.f32 %v103, %v3799
    %v3801 = vpop.f32.mrf.mxu0
    %3802 = vmatprep.mubr.f32.mxu0 0.0
    %3803 = vmatmul.mubr.f32.gmra.mxu0 %v3725
    %v3804 = vpop.f32.mrf.mxu0
    %v3805 = vadd.f32 %v104, %v3804
    %v3806 = vpop.f32.mrf.mxu0
    %3807 = vmatprep.mubr.f32.mxu0 0.0
    %3808 = vmatmul.mubr.f32.gmra.mxu0 %v3728
    %v3809 = vpop.f32.mrf.mxu0
    %v3810 = vadd.f32 %v105, %v3809
    %v3811 = vpop.f32.mrf.mxu0
    %3812 = vmatprep.mubr.f32.mxu0 0.0
    %3813 = vmatmul.mubr.f32.gmra.mxu0 %v3731
    %v3814 = vpop.f32.mrf.mxu0
    %v3815 = vadd.f32 %v106, %v3814
    %v3816 = vpop.f32.mrf.mxu0
    %3817 = vdwg.mxu0
    %v3818 = vsel %vm156, %v3800, -inf
    %3819 = vmax.xlane.f32.xlu0 %v3818
    %v3820 = vpop.xlane.xlu0 %3819
    %v3821 = vsel %vm156, %v3805, -inf
    %3822 = vmax.xlane.f32.xlu0 %v3821
    %v3823 = vpop.xlane.xlu0 %3822
    %v3824 = vsel %vm156, %v3810, -inf
    %3825 = vmax.xlane.f32.xlu0 %v3824
    %v3826 = vpop.xlane.xlu0 %3825
    %v3827 = vsel %vm156, %v3815, -inf
    %3828 = vmax.xlane.f32.xlu0 %v3827
    %v3829 = vpop.xlane.xlu0 %3828
    %v3830 = vsub.f32 %v3800, %v3820
    %v3831 = vsub.f32 %v3805, %v3823
    %v3832 = vsub.f32 %v3810, %v3826
    %v3833 = vsub.f32 %v3815, %v3829
    %v3834 = vmul.f32 %v3830, 1.442695
    %v3835 = vpow.pop %v3834
    %v3836 = vmul.f32 %v3831, 1.442695
    %v3837 = vpow.pop %v3836
    %v3838 = vmul.f32 %v3832, 1.442695
    %v3839 = vpow.pop %v3838
    %v3840 = vmul.f32 %v3833, 1.442695
    %v3841 = vpow.pop %v3840
    %v3842 = vsel %vm156, %v3835, 0.0
    %3843 = vadd.xlane.f32.xlu0 %v3842
    %v3844 = vpop.xlane.xlu0 %3843
    %v3845 = vsel %vm156, %v3837, 0.0
    %3846 = vadd.xlane.f32.xlu0 %v3845
    %v3847 = vpop.xlane.xlu0 %3846
    %v3848 = vsel %vm156, %v3839, 0.0
    %3849 = vadd.xlane.f32.xlu0 %v3848
    %v3850 = vpop.xlane.xlu0 %3849
    %v3851 = vsel %vm156, %v3841, 0.0
    %3852 = vadd.xlane.f32.xlu0 %v3851
    %v3853 = vpop.xlane.xlu0 %3852
    %v3854 = vrcp.pop %v3844
    %v3855 = vmul.f32 %v3835, %v3854
    %v3856 = vrcp.pop %v3847
    %v3857 = vmul.f32 %v3837, %v3856
    %v3858 = vrcp.pop %v3850
    %v3859 = vmul.f32 %v3839, %v3858
    %v3860 = vrcp.pop %v3853
    %v3861 = vmul.f32 %v3841, %v3860
    %3862 = vmatprep.subr.mxu0 0.0
    %3863 = vmatpush1.msra.mxu0 0.0
    %3864 = vmatprep.subr.mxu0 0.0
    %3865 = vmatpush1.msra.mxu0 0.0
    %3866 = vmatprep.subr.mxu0 0.0
    %3867 = vmatpush1.msra.mxu0 0.0
    %3868 = vmatprep.subr.mxu0 0.0
    %3869 = vmatpush1.msra.mxu0 0.0
    %3870 = vmatprep.subr.mxu0 0.0
    %3871 = vmatpush1.msra.mxu0 0.0
    %3872 = vmatprep.subr.mxu0 0.0
    %3873 = vmatpush1.msra.mxu0 0.0
    %3874 = vmatprep.subr.mxu0 0.0
    %3875 = vmatpush1.msra.mxu0 0.0
    %3876 = vmatprep.subr.mxu0 0.0
    %3877 = vmatpush1.msra.mxu0 0.0
    %3878 = vmatprep.subr.mxu0 0.0
    %3879 = vmatpush1.msra.mxu0 0.0
    %3880 = vmatprep.subr.mxu0 0.0
    %3881 = vmatpush1.msra.mxu0 0.0
    %3882 = vmatprep.subr.mxu0 0.0
    %3883 = vmatpush1.msra.mxu0 0.0
    %3884 = vmatprep.subr.mxu0 0.0
    %3885 = vmatpush1.msra.mxu0 0.0
    %3886 = vmatprep.subr.mxu0 0.0
    %3887 = vmatpush1.msra.mxu0 %v2309
    %3888 = vmatprep.subr.mxu0 0.0
    %3889 = vmatpush1.msra.mxu0 %v2308
    %3890 = vmatprep.subr.mxu0 0.0
    %3891 = vmatpush1.msra.mxu0 %v2307
    %3892 = vmatprep.subr.mxu0 0.0
    %3893 = vmatpush1.msra.mxu0 %v2306
    %3894 = vmatprep.subr.mxu0 0.0
    %3895 = vmatpush2.msra.mxu0 0.0
    %3896 = vmatprep.subr.mxu0 0.0
    %3897 = vmatpush2.msra.mxu0 0.0
    %3898 = vmatprep.subr.mxu0 0.0
    %3899 = vmatpush2.msra.mxu0 0.0
    %3900 = vmatprep.subr.mxu0 0.0
    %3901 = vmatpush2.msra.mxu0 0.0
    %3902 = vmatprep.subr.mxu0 0.0
    %3903 = vmatpush2.msra.mxu0 0.0
    %3904 = vmatprep.subr.mxu0 0.0
    %3905 = vmatpush2.msra.mxu0 0.0
    %3906 = vmatprep.subr.mxu0 0.0
    %3907 = vmatpush2.msra.mxu0 0.0
    %3908 = vmatprep.subr.mxu0 0.0
    %3909 = vmatpush2.msra.mxu0 0.0
    %3910 = vmatprep.subr.mxu0 0.0
    %3911 = vmatpush2.msra.mxu0 0.0
    %3912 = vmatprep.subr.mxu0 0.0
    %3913 = vmatpush2.msra.mxu0 0.0
    %3914 = vmatprep.subr.mxu0 0.0
    %3915 = vmatpush2.msra.mxu0 0.0
    %3916 = vmatprep.subr.mxu0 0.0
    %3917 = vmatpush2.msra.mxu0 0.0
    %3918 = vmatprep.subr.mxu0 0.0
    %3919 = vmatpush2.msra.mxu0 0.0
    %3920 = vmatprep.subr.mxu0 0.0
    %3921 = vmatpush2.msra.mxu0 0.0
    %3922 = vmatprep.subr.mxu0 0.0
    %3923 = vmatpush2.msra.mxu0 0.0
    %3924 = vmatprep.subr.mxu0 0.0
    %3925 = vmatpush2.msra.mxu0 0.0
    %3926 = vmatprep.mubr.f32.mxu0 0.0
    %3927 = vmatmul.mubr.f32.gmra.mxu0 %v2397
    %v3928 = vpop.f32.mrf.mxu0
    %v3929 = vadd.f32 0.0, %v3928
    %v3930 = vpop.f32.mrf.mxu0
    %3931 = vmatprep.mubr.f32.mxu0 0.0
    %3932 = vmatmul.mubr.f32.gmra.mxu0 %v2400
    %v3933 = vpop.f32.mrf.mxu0
    %v3934 = vadd.f32 0.0, %v3933
    %v3935 = vpop.f32.mrf.mxu0
    %3936 = vmatprep.mubr.f32.mxu0 0.0
    %3937 = vmatmul.mubr.f32.gmra.mxu0 %v2403
    %v3938 = vpop.f32.mrf.mxu0
    %v3939 = vadd.f32 0.0, %v3938
    %v3940 = vpop.f32.mrf.mxu0
    %3941 = vmatprep.mubr.f32.mxu0 0.0
    %3942 = vmatmul.mubr.f32.gmra.mxu0 %v2406
    %v3943 = vpop.f32.mrf.mxu0
    %v3944 = vadd.f32 0.0, %v3943
    %v3945 = vpop.f32.mrf.mxu0
    %3946 = vdwg.mxu0
    %v3948 = vsel %vm156, %v3855, 0
    %v3951 = vsel %vm156, %v3857, 0
    %v3954 = vsel %vm156, %v3859, 0
    %v3957 = vsel %vm156, %v3861, 0
    %3959 = vmatprep.subr.mxu0 0.0
    %3960 = vmatpush1.msra.mxu0 0.0
    %3961 = vmatprep.subr.mxu0 0.0
    %3962 = vmatpush1.msra.mxu0 0.0
    %3963 = vmatprep.subr.mxu0 0.0
    %3964 = vmatpush1.msra.mxu0 0.0
    %3965 = vmatprep.subr.mxu0 0.0
    %3966 = vmatpush1.msra.mxu0 0.0
    %3967 = vmatprep.subr.mxu0 0.0
    %3968 = vmatpush1.msra.mxu0 0.0
    %3969 = vmatprep.subr.mxu0 0.0
    %3970 = vmatpush1.msra.mxu0 0.0
    %3971 = vmatprep.subr.mxu0 0.0
    %3972 = vmatpush1.msra.mxu0 0.0
    %3973 = vmatprep.subr.mxu0 0.0
    %3974 = vmatpush1.msra.mxu0 0.0
    %3975 = vmatprep.subr.mxu0 0.0
    %3976 = vmatpush1.msra.mxu0 0.0
    %3977 = vmatprep.subr.mxu0 0.0
    %3978 = vmatpush1.msra.mxu0 0.0
    %3979 = vmatprep.subr.mxu0 0.0
    %3980 = vmatpush1.msra.mxu0 0.0
    %3981 = vmatprep.subr.mxu0 0.0
    %3982 = vmatpush1.msra.mxu0 0.0
    %3983 = vmatprep.subr.mxu0 0.0
    %3984 = vmatpush1.msra.mxu0 %v3944
    %3985 = vmatprep.subr.mxu0 0.0
    %3986 = vmatpush1.msra.mxu0 %v3939
    %3987 = vmatprep.subr.mxu0 0.0
    %3988 = vmatpush1.msra.mxu0 %v3934
    %3989 = vmatprep.subr.mxu0 0.0
    %3990 = vmatpush1.msra.mxu0 %v3929
    %3991 = vmatprep.subr.mxu0 0.0
    %3992 = vmatpush2.msra.mxu0 0.0
    %3993 = vmatprep.subr.mxu0 0.0
    %3994 = vmatpush2.msra.mxu0 0.0
    %3995 = vmatprep.subr.mxu0 0.0
    %3996 = vmatpush2.msra.mxu0 0.0
    %3997 = vmatprep.subr.mxu0 0.0
    %3998 = vmatpush2.msra.mxu0 0.0
    %3999 = vmatprep.subr.mxu0 0.0
    %4000 = vmatpush2.msra.mxu0 0.0
    %4001 = vmatprep.subr.mxu0 0.0
    %4002 = vmatpush2.msra.mxu0 0.0
    %4003 = vmatprep.subr.mxu0 0.0
    %4004 = vmatpush2.msra.mxu0 0.0
    %4005 = vmatprep.subr.mxu0 0.0
    %4006 = vmatpush2.msra.mxu0 0.0
    %4007 = vmatprep.subr.mxu0 0.0
    %4008 = vmatpush2.msra.mxu0 0.0
    %4009 = vmatprep.subr.mxu0 0.0
    %4010 = vmatpush2.msra.mxu0 0.0
    %4011 = vmatprep.subr.mxu0 0.0
    %4012 = vmatpush2.msra.mxu0 0.0
    %4013 = vmatprep.subr.mxu0 0.0
    %4014 = vmatpush2.msra.mxu0 0.0
    %4015 = vmatprep.subr.mxu0 0.0
    %4016 = vmatpush2.msra.mxu0 0.0
    %4017 = vmatprep.subr.mxu0 0.0
    %4018 = vmatpush2.msra.mxu0 0.0
    %4019 = vmatprep.subr.mxu0 0.0
    %4020 = vmatpush2.msra.mxu0 0.0
    %4021 = vmatprep.subr.mxu0 0.0
    %4022 = vmatpush2.msra.mxu0 0.0
    %4023 = vmatprep.mubr.f32.mxu0 0.0
    %4024 = vmatmul.mubr.f32.gmra.mxu0 %v3948
    %v4025 = vpop.f32.mrf.mxu0
    %v4026 = vadd.f32 0.0, %v4025
    %v4027 = vpop.f32.mrf.mxu0
    %4028 = vmatprep.mubr.f32.mxu0 0.0
    %4029 = vmatmul.mubr.f32.gmra.mxu0 %v3951
    %v4030 = vpop.f32.mrf.mxu0
    %v4031 = vadd.f32 0.0, %v4030
    %v4032 = vpop.f32.mrf.mxu0
    %4033 = vmatprep.mubr.f32.mxu0 0.0
    %4034 = vmatmul.mubr.f32.gmra.mxu0 %v3954
    %v4035 = vpop.f32.mrf.mxu0
    %v4036 = vadd.f32 0.0, %v4035
    %v4037 = vpop.f32.mrf.mxu0
    %4038 = vmatprep.mubr.f32.mxu0 0.0
    %4039 = vmatmul.mubr.f32.gmra.mxu0 %v3957
    %v4040 = vpop.f32.mrf.mxu0
    %v4041 = vadd.f32 0.0, %v4040
    %v4042 = vpop.f32.mrf.mxu0
    %4043 = vdwg.mxu0
    %v4044 = vadd.f32 %v3632, %v4026
    %v4045 = vadd.f32 %v3633, %v4031
    %v4046 = vadd.f32 %v3634, %v4036
    %v4047 = vadd.f32 %v3635, %v4041
    %v4048 = vadd.f32 %v2270, %v4044
    %v4049 = vadd.f32 %v2271, %v4045
    %v4050 = vadd.f32 %v2272, %v4046
    %v4051 = vadd.f32 %v2273, %v4047
    %v4052 = vsel %vm156, %v4048, 0.0
    %4053 = vadd.xlane.f32.xlu0 %v4052
    %v4054 = vpop.xlane.xlu0 %4053
    %v4055 = vsel %vm156, %v4049, 0.0
    %4056 = vadd.xlane.f32.xlu0 %v4055
    %v4057 = vpop.xlane.xlu0 %4056
    %v4058 = vsel %vm156, %v4050, 0.0
    %4059 = vadd.xlane.f32.xlu0 %v4058
    %v4060 = vpop.xlane.xlu0 %4059
    %v4061 = vsel %vm156, %v4051, 0.0
    %4062 = vadd.xlane.f32.xlu0 %v4061
    %v4063 = vpop.xlane.xlu0 %4062
    %v4064 = vmul.f32 %v4054, %v169
    %v4065 = vmul.f32 %v4057, %v169
    %v4066 = vmul.f32 %v4060, %v169
    %v4067 = vmul.f32 %v4063, %v169
    %v4068 = vsub.f32 %v4048, %v4064
    %v4069 = vsub.f32 %v4049, %v4065
    %v4070 = vsub.f32 %v4050, %v4066
    %v4071 = vsub.f32 %v4051, %v4067
    %v4072 = vmul.f32 %v4068, %v4068
    %v4073 = vmul.f32 %v4069, %v4069
    %v4074 = vmul.f32 %v4070, %v4070
    %v4075 = vmul.f32 %v4071, %v4071
    %v4076 = vsel %vm156, %v4072, 0.0
    %4077 = vadd.xlane.f32.xlu0 %v4076
    %v4078 = vpop.xlane.xlu0 %4077
    %v4079 = vsel %vm156, %v4073, 0.0
    %4080 = vadd.xlane.f32.xlu0 %v4079
    %v4081 = vpop.xlane.xlu0 %4080
    %v4082 = vsel %vm156, %v4074, 0.0
    %4083 = vadd.xlane.f32.xlu0 %v4082
    %v4084 = vpop.xlane.xlu0 %4083
    %v4085 = vsel %vm156, %v4075, 0.0
    %4086 = vadd.xlane.f32.xlu0 %v4085
    %v4087 = vpop.xlane.xlu0 %4086
    %v4088 = vmul.f32 %v4078, %v169
    %v4089 = vmul.f32 %v4081, %v169
    %v4090 = vmul.f32 %v4084, %v169
    %v4091 = vmul.f32 %v4087, %v169
    %v4092 = vadd.f32 %v4088, 1e-05
    %v4093 = vadd.f32 %v4089, 1e-05
    %v4094 = vadd.f32 %v4090, 1e-05
    %v4095 = vadd.f32 %v4091, 1e-05
    %v4096 = vrsqrt.pop %v4092
    %v4097 = vrsqrt.pop %v4093
    %v4098 = vrsqrt.pop %v4094
    %v4099 = vrsqrt.pop %v4095
    %v4100 = vmul.f32 %v4068, %v4096
    %v4101 = vmul.f32 %v4069, %v4097
    %v4102 = vmul.f32 %v4070, %v4098
    %v4103 = vmul.f32 %v4071, %v4099
    %v4104 = vlaneseq
    %v4105 = vshrl.u32 %v4104, 7
    %v4106 = vsub.s32 2, %v4105
    %v4107 = vrot.slane %v2275, %v4106
    %v4108 = vmul.f32 %v4100, %v4107
    %v4109 = vmul.f32 %v4101, %v4107
    %v4110 = vmul.f32 %v4102, %v4107
    %v4111 = vmul.f32 %v4103, %v4107
    %v4112 = vlaneseq
    %v4113 = vshrl.u32 %v4112, 7
    %v4114 = vsub.s32 3, %v4113
    %v4115 = vrot.slane %v2275, %v4114
    %v4116 = vadd.f32 %v4108, %v4115
    %v4117 = vadd.f32 %v4109, %v4115
    %v4118 = vadd.f32 %v4110, %v4115
    %v4119 = vadd.f32 %v4111, %v4115
    %v4121 = vsel %vm156, %v4116, 0
    %v4124 = vsel %vm156, %v4117, 0
    %v4127 = vsel %vm156, %v4118, 0
    %v4130 = vsel %vm156, %v4119, 0
    %4132 = vmatprep.subr.mxu0 0.0
    %4133 = vmatpush1.msra.mxu0 0.0
    %4134 = vmatprep.subr.mxu0 0.0
    %4135 = vmatpush1.msra.mxu0 0.0
    %4136 = vmatprep.subr.mxu0 0.0
    %4137 = vmatpush1.msra.mxu0 0.0
    %4138 = vmatprep.subr.mxu0 0.0
    %4139 = vmatpush1.msra.mxu0 0.0
    %4140 = vmatprep.subr.mxu0 0.0
    %4141 = vmatpush1.msra.mxu0 0.0
    %4142 = vmatprep.subr.mxu0 0.0
    %4143 = vmatpush1.msra.mxu0 0.0
    %4144 = vmatprep.subr.mxu0 0.0
    %4145 = vmatpush1.msra.mxu0 0.0
    %4146 = vmatprep.subr.mxu0 0.0
    %4147 = vmatpush1.msra.mxu0 0.0
    %4148 = vmatprep.subr.mxu0 0.0
    %4149 = vmatpush1.msra.mxu0 0.0
    %4150 = vmatprep.subr.mxu0 0.0
    %4151 = vmatpush1.msra.mxu0 0.0
    %4152 = vmatprep.subr.mxu0 0.0
    %4153 = vmatpush1.msra.mxu0 0.0
    %4154 = vmatprep.subr.mxu0 0.0
    %4155 = vmatpush1.msra.mxu0 0.0
    %4156 = vmatprep.subr.mxu0 0.0
    %4157 = vmatpush1.msra.mxu0 %v2314
    %4158 = vmatprep.subr.mxu0 0.0
    %4159 = vmatpush1.msra.mxu0 %v2313
    %4160 = vmatprep.subr.mxu0 0.0
    %4161 = vmatpush1.msra.mxu0 %v2312
    %4162 = vmatprep.subr.mxu0 0.0
    %4163 = vmatpush1.msra.mxu0 %v2311
    %4164 = vmatprep.subr.mxu0 0.0
    %4165 = vmatpush2.msra.mxu0 0.0
    %4166 = vmatprep.subr.mxu0 0.0
    %4167 = vmatpush2.msra.mxu0 0.0
    %4168 = vmatprep.subr.mxu0 0.0
    %4169 = vmatpush2.msra.mxu0 0.0
    %4170 = vmatprep.subr.mxu0 0.0
    %4171 = vmatpush2.msra.mxu0 0.0
    %4172 = vmatprep.subr.mxu0 0.0
    %4173 = vmatpush2.msra.mxu0 0.0
    %4174 = vmatprep.subr.mxu0 0.0
    %4175 = vmatpush2.msra.mxu0 0.0
    %4176 = vmatprep.subr.mxu0 0.0
    %4177 = vmatpush2.msra.mxu0 0.0
    %4178 = vmatprep.subr.mxu0 0.0
    %4179 = vmatpush2.msra.mxu0 0.0
    %4180 = vmatprep.subr.mxu0 0.0
    %4181 = vmatpush2.msra.mxu0 0.0
    %4182 = vmatprep.subr.mxu0 0.0
    %4183 = vmatpush2.msra.mxu0 0.0
    %4184 = vmatprep.subr.mxu0 0.0
    %4185 = vmatpush2.msra.mxu0 0.0
    %4186 = vmatprep.subr.mxu0 0.0
    %4187 = vmatpush2.msra.mxu0 0.0
    %4188 = vmatprep.subr.mxu0 0.0
    %4189 = vmatpush2.msra.mxu0 0.0
    %4190 = vmatprep.subr.mxu0 0.0
    %4191 = vmatpush2.msra.mxu0 0.0
    %4192 = vmatprep.subr.mxu0 0.0
    %4193 = vmatpush2.msra.mxu0 0.0
    %4194 = vmatprep.subr.mxu0 0.0
    %4195 = vmatpush2.msra.mxu0 0.0
    %4196 = vmatprep.mubr.f32.mxu0 0.0
    %4197 = vmatmul.mubr.f32.gmra.mxu0 %v4121
    %v4198 = vpop.f32.mrf.mxu0
    %v4199 = vadd.f32 0.0, %v4198
    %v4200 = vpop.f32.mrf.mxu0
    %4201 = vmatprep.mubr.f32.mxu0 0.0
    %4202 = vmatmul.mubr.f32.gmra.mxu0 %v4124
    %v4203 = vpop.f32.mrf.mxu0
    %v4204 = vadd.f32 0.0, %v4203
    %v4205 = vpop.f32.mrf.mxu0
    %4206 = vmatprep.mubr.f32.mxu0 0.0
    %4207 = vmatmul.mubr.f32.gmra.mxu0 %v4127
    %v4208 = vpop.f32.mrf.mxu0
    %v4209 = vadd.f32 0.0, %v4208
    %v4210 = vpop.f32.mrf.mxu0
    %4211 = vmatprep.mubr.f32.mxu0 0.0
    %4212 = vmatmul.mubr.f32.gmra.mxu0 %v4130
    %v4213 = vpop.f32.mrf.mxu0
    %v4214 = vadd.f32 0.0, %v4213
    %v4215 = vpop.f32.mrf.mxu0
    %4216 = vdwg.mxu0
    %4217 = vmatprep.subr.mxu0 0.0
    %4218 = vmatpush1.msra.mxu0 0.0
    %4219 = vmatprep.subr.mxu0 0.0
    %4220 = vmatpush1.msra.mxu0 0.0
    %4221 = vmatprep.subr.mxu0 0.0
    %4222 = vmatpush1.msra.mxu0 0.0
    %4223 = vmatprep.subr.mxu0 0.0
    %4224 = vmatpush1.msra.mxu0 0.0
    %4225 = vmatprep.subr.mxu0 0.0
    %4226 = vmatpush1.msra.mxu0 0.0
    %4227 = vmatprep.subr.mxu0 0.0
    %4228 = vmatpush1.msra.mxu0 0.0
    %4229 = vmatprep.subr.mxu0 0.0
    %4230 = vmatpush1.msra.mxu0 0.0
    %4231 = vmatprep.subr.mxu0 0.0
    %4232 = vmatpush1.msra.mxu0 0.0
    %4233 = vmatprep.subr.mxu0 0.0
    %4234 = vmatpush1.msra.mxu0 0.0
    %4235 = vmatprep.subr.mxu0 0.0
    %4236 = vmatpush1.msra.mxu0 0.0
    %4237 = vmatprep.subr.mxu0 0.0
    %4238 = vmatpush1.msra.mxu0 0.0
    %4239 = vmatprep.subr.mxu0 0.0
    %4240 = vmatpush1.msra.mxu0 0.0
    %4241 = vmatprep.subr.mxu0 0.0
    %4242 = vmatpush1.msra.mxu0 %v2318
    %4243 = vmatprep.subr.mxu0 0.0
    %4244 = vmatpush1.msra.mxu0 %v2317
    %4245 = vmatprep.subr.mxu0 0.0
    %4246 = vmatpush1.msra.mxu0 %v2316
    %4247 = vmatprep.subr.mxu0 0.0
    %4248 = vmatpush1.msra.mxu0 %v2315
    %4249 = vmatprep.subr.mxu0 0.0
    %4250 = vmatpush2.msra.mxu0 0.0
    %4251 = vmatprep.subr.mxu0 0.0
    %4252 = vmatpush2.msra.mxu0 0.0
    %4253 = vmatprep.subr.mxu0 0.0
    %4254 = vmatpush2.msra.mxu0 0.0
    %4255 = vmatprep.subr.mxu0 0.0
    %4256 = vmatpush2.msra.mxu0 0.0
    %4257 = vmatprep.subr.mxu0 0.0
    %4258 = vmatpush2.msra.mxu0 0.0
    %4259 = vmatprep.subr.mxu0 0.0
    %4260 = vmatpush2.msra.mxu0 0.0
    %4261 = vmatprep.subr.mxu0 0.0
    %4262 = vmatpush2.msra.mxu0 0.0
    %4263 = vmatprep.subr.mxu0 0.0
    %4264 = vmatpush2.msra.mxu0 0.0
    %4265 = vmatprep.subr.mxu0 0.0
    %4266 = vmatpush2.msra.mxu0 0.0
    %4267 = vmatprep.subr.mxu0 0.0
    %4268 = vmatpush2.msra.mxu0 0.0
    %4269 = vmatprep.subr.mxu0 0.0
    %4270 = vmatpush2.msra.mxu0 0.0
    %4271 = vmatprep.subr.mxu0 0.0
    %4272 = vmatpush2.msra.mxu0 0.0
    %4273 = vmatprep.subr.mxu0 0.0
    %4274 = vmatpush2.msra.mxu0 0.0
    %4275 = vmatprep.subr.mxu0 0.0
    %4276 = vmatpush2.msra.mxu0 0.0
    %4277 = vmatprep.subr.mxu0 0.0
    %4278 = vmatpush2.msra.mxu0 0.0
    %4279 = vmatprep.subr.mxu0 0.0
    %4280 = vmatpush2.msra.mxu0 0.0
    %4281 = vmatprep.mubr.f32.mxu0 0.0
    %4282 = vmatmul.mubr.f32.gmra.mxu0 %v4121
    %v4283 = vpop.f32.mrf.mxu0
    %v4284 = vadd.f32 0.0, %v4283
    %v4285 = vpop.f32.mrf.mxu0
    %4286 = vmatprep.mubr.f32.mxu0 0.0
    %4287 = vmatmul.mubr.f32.gmra.mxu0 %v4124
    %v4288 = vpop.f32.mrf.mxu0
    %v4289 = vadd.f32 0.0, %v4288
    %v4290 = vpop.f32.mrf.mxu0
    %4291 = vmatprep.mubr.f32.mxu0 0.0
    %4292 = vmatmul.mubr.f32.gmra.mxu0 %v4127
    %v4293 = vpop.f32.mrf.mxu0
    %v4294 = vadd.f32 0.0, %v4293
    %v4295 = vpop.f32.mrf.mxu0
    %4296 = vmatprep.mubr.f32.mxu0 0.0
    %4297 = vmatmul.mubr.f32.gmra.mxu0 %v4130
    %v4298 = vpop.f32.mrf.mxu0
    %v4299 = vadd.f32 0.0, %v4298
    %v4300 = vpop.f32.mrf.mxu0
    %4301 = vdwg.mxu0
    %v4302 = vmul.f32 %v4284, %v4284
    %v4303 = vmul.f32 %v4289, %v4289
    %v4304 = vmul.f32 %v4294, %v4294
    %v4305 = vmul.f32 %v4299, %v4299
    %v4306 = vmul.f32 %v4284, %v4302
    %v4307 = vmul.f32 %v4289, %v4303
    %v4308 = vmul.f32 %v4294, %v4304
    %v4309 = vmul.f32 %v4299, %v4305
    %v4310 = vmul.f32 %v4306, 0.044715
    %v4311 = vmul.f32 %v4307, 0.044715
    %v4312 = vmul.f32 %v4308, 0.044715
    %v4313 = vmul.f32 %v4309, 0.044715
    %v4314 = vadd.f32 %v4284, %v4310
    %v4315 = vadd.f32 %v4289, %v4311
    %v4316 = vadd.f32 %v4294, %v4312
    %v4317 = vadd.f32 %v4299, %v4313
    %v4318 = vmul.f32 %v4314, 0.7978846
    %v4319 = vmul.f32 %v4315, 0.7978846
    %v4320 = vmul.f32 %v4316, 0.7978846
    %v4321 = vmul.f32 %v4317, 0.7978846
    %v4322 = vtanh.pop %v4318
    %v4323 = vtanh.pop %v4319
    %v4324 = vtanh.pop %v4320
    %v4325 = vtanh.pop %v4321
    %v4326 = vadd.f32 %v4322, 1.0
    %v4327 = vadd.f32 %v4323, 1.0
    %v4328 = vadd.f32 %v4324, 1.0
    %v4329 = vadd.f32 %v4325, 1.0
    %v4330 = vmul.f32 %v4326, 0.5
    %v4331 = vmul.f32 %v4327, 0.5
    %v4332 = vmul.f32 %v4328, 0.5
    %v4333 = vmul.f32 %v4329, 0.5
    %v4334 = vmul.f32 %v4284, %v4330
    %v4335 = vmul.f32 %v4289, %v4331
    %v4336 = vmul.f32 %v4294, %v4332
    %v4337 = vmul.f32 %v4299, %v4333
    %v4338 = vmul.f32 %v4199, %v4334
    %v4339 = vmul.f32 %v4204, %v4335
    %v4340 = vmul.f32 %v4209, %v4336
    %v4341 = vmul.f32 %v4214, %v4337
    %v4343 = vsel %vm2172, %v4338, 0
    %v4346 = vsel %vm2172, %v4339, 0
    %v4349 = vsel %vm2172, %v4340, 0
    %v4352 = vsel %vm2172, %v4341, 0
    %4354 = vmatprep.subr.mxu0 0.0
    %4355 = vmatpush1.msra.mxu0 0.0
    %4356 = vmatprep.subr.mxu0 0.0
    %4357 = vmatpush1.msra.mxu0 0.0
    %4358 = vmatprep.subr.mxu0 0.0
    %4359 = vmatpush1.msra.mxu0 0.0
    %4360 = vmatprep.subr.mxu0 0.0
    %4361 = vmatpush1.msra.mxu0 0.0
    %4362 = vmatprep.subr.mxu0 0.0
    %4363 = vmatpush1.msra.mxu0 0.0
    %4364 = vmatprep.subr.mxu0 0.0
    %4365 = vmatpush1.msra.mxu0 0.0
    %4366 = vmatprep.subr.mxu0 0.0
    %4367 = vmatpush1.msra.mxu0 0.0
    %4368 = vmatprep.subr.mxu0 0.0
    %4369 = vmatpush1.msra.mxu0 0.0
    %4370 = vmatprep.subr.mxu0 0.0
    %4371 = vmatpush1.msra.mxu0 %v2327
    %4372 = vmatprep.subr.mxu0 0.0
    %4373 = vmatpush1.msra.mxu0 %v2326
    %4374 = vmatprep.subr.mxu0 0.0
    %4375 = vmatpush1.msra.mxu0 %v2325
    %4376 = vmatprep.subr.mxu0 0.0
    %4377 = vmatpush1.msra.mxu0 %v2324
    %4378 = vmatprep.subr.mxu0 0.0
    %4379 = vmatpush1.msra.mxu0 %v2323
    %4380 = vmatprep.subr.mxu0 0.0
    %4381 = vmatpush1.msra.mxu0 %v2322
    %4382 = vmatprep.subr.mxu0 0.0
    %4383 = vmatpush1.msra.mxu0 %v2321
    %4384 = vmatprep.subr.mxu0 0.0
    %4385 = vmatpush1.msra.mxu0 %v2320
    %4386 = vmatprep.subr.mxu0 0.0
    %4387 = vmatpush2.msra.mxu0 0.0
    %4388 = vmatprep.subr.mxu0 0.0
    %4389 = vmatpush2.msra.mxu0 0.0
    %4390 = vmatprep.subr.mxu0 0.0
    %4391 = vmatpush2.msra.mxu0 0.0
    %4392 = vmatprep.subr.mxu0 0.0
    %4393 = vmatpush2.msra.mxu0 0.0
    %4394 = vmatprep.subr.mxu0 0.0
    %4395 = vmatpush2.msra.mxu0 0.0
    %4396 = vmatprep.subr.mxu0 0.0
    %4397 = vmatpush2.msra.mxu0 0.0
    %4398 = vmatprep.subr.mxu0 0.0
    %4399 = vmatpush2.msra.mxu0 0.0
    %4400 = vmatprep.subr.mxu0 0.0
    %4401 = vmatpush2.msra.mxu0 0.0
    %4402 = vmatprep.subr.mxu0 0.0
    %4403 = vmatpush2.msra.mxu0 0.0
    %4404 = vmatprep.subr.mxu0 0.0
    %4405 = vmatpush2.msra.mxu0 0.0
    %4406 = vmatprep.subr.mxu0 0.0
    %4407 = vmatpush2.msra.mxu0 0.0
    %4408 = vmatprep.subr.mxu0 0.0
    %4409 = vmatpush2.msra.mxu0 0.0
    %4410 = vmatprep.subr.mxu0 0.0
    %4411 = vmatpush2.msra.mxu0 0.0
    %4412 = vmatprep.subr.mxu0 0.0
    %4413 = vmatpush2.msra.mxu0 0.0
    %4414 = vmatprep.subr.mxu0 0.0
    %4415 = vmatpush2.msra.mxu0 0.0
    %4416 = vmatprep.subr.mxu0 0.0
    %4417 = vmatpush2.msra.mxu0 0.0
    %4418 = vmatprep.mubr.f32.mxu0 0.0
    %4419 = vmatmul.mubr.f32.gmra.mxu0 %v4343
    %v4420 = vpop.f32.mrf.mxu0
    %v4421 = vadd.f32 0.0, %v4420
    %v4422 = vpop.f32.mrf.mxu0
    %4423 = vmatprep.mubr.f32.mxu0 0.0
    %4424 = vmatmul.mubr.f32.gmra.mxu0 %v4346
    %v4425 = vpop.f32.mrf.mxu0
    %v4426 = vadd.f32 0.0, %v4425
    %v4427 = vpop.f32.mrf.mxu0
    %4428 = vmatprep.mubr.f32.mxu0 0.0
    %4429 = vmatmul.mubr.f32.gmra.mxu0 %v4349
    %v4430 = vpop.f32.mrf.mxu0
    %v4431 = vadd.f32 0.0, %v4430
    %v4432 = vpop.f32.mrf.mxu0
    %4433 = vmatprep.mubr.f32.mxu0 0.0
    %4434 = vmatmul.mubr.f32.gmra.mxu0 %v4352
    %v4435 = vpop.f32.mrf.mxu0
    %v4436 = vadd.f32 0.0, %v4435
    %v4437 = vpop.f32.mrf.mxu0
    %4438 = vdwg.mxu0
    %v4439 = vadd.f32 %v4048, %v4421
    %v4440 = vadd.f32 %v4049, %v4426
    %v4441 = vadd.f32 %v4050, %v4431
    %v4442 = vadd.f32 %v4051, %v4436
    %v4443 = vld [vmem:[%s8] sm:$0x1]
    %v4444 = vld [vmem:[%s8 + $0x1] sm:$0x1]
    %v4445 = vsel %vm156, %v4439, 0.0
    %4446 = vadd.xlane.f32.xlu0 %v4445
    %v4447 = vpop.xlane.xlu0 %4446
    %v4448 = vsel %vm156, %v4440, 0.0
    %4449 = vadd.xlane.f32.xlu0 %v4448
    %v4450 = vpop.xlane.xlu0 %4449
    %v4451 = vsel %vm156, %v4441, 0.0
    %4452 = vadd.xlane.f32.xlu0 %v4451
    %v4453 = vpop.xlane.xlu0 %4452
    %v4454 = vsel %vm156, %v4442, 0.0
    %4455 = vadd.xlane.f32.xlu0 %v4454
    %v4456 = vpop.xlane.xlu0 %4455
    %v4457 = vmul.f32 %v4447, %v169
    %v4458 = vmul.f32 %v4450, %v169
    %v4459 = vmul.f32 %v4453, %v169
    %v4460 = vmul.f32 %v4456, %v169
    %v4461 = vsub.f32 %v4439, %v4457
    %v4462 = vsub.f32 %v4440, %v4458
    %v4463 = vsub.f32 %v4441, %v4459
    %v4464 = vsub.f32 %v4442, %v4460
    %v4465 = vmul.f32 %v4461, %v4461
    %v4466 = vmul.f32 %v4462, %v4462
    %v4467 = vmul.f32 %v4463, %v4463
    %v4468 = vmul.f32 %v4464, %v4464
    %v4469 = vsel %vm156, %v4465, 0.0
    %4470 = vadd.xlane.f32.xlu0 %v4469
    %v4471 = vpop.xlane.xlu0 %4470
    %v4472 = vsel %vm156, %v4466, 0.0
    %4473 = vadd.xlane.f32.xlu0 %v4472
    %v4474 = vpop.xlane.xlu0 %4473
    %v4475 = vsel %vm156, %v4467, 0.0
    %4476 = vadd.xlane.f32.xlu0 %v4475
    %v4477 = vpop.xlane.xlu0 %4476
    %v4478 = vsel %vm156, %v4468, 0.0
    %4479 = vadd.xlane.f32.xlu0 %v4478
    %v4480 = vpop.xlane.xlu0 %4479
    %v4481 = vmul.f32 %v4471, %v169
    %v4482 = vmul.f32 %v4474, %v169
    %v4483 = vmul.f32 %v4477, %v169
    %v4484 = vmul.f32 %v4480, %v169
    %v4485 = vadd.f32 %v4481, 1e-05
    %v4486 = vadd.f32 %v4482, 1e-05
    %v4487 = vadd.f32 %v4483, 1e-05
    %v4488 = vadd.f32 %v4484, 1e-05
    %v4489 = vrsqrt.pop %v4485
    %v4490 = vrsqrt.pop %v4486
    %v4491 = vrsqrt.pop %v4487
    %v4492 = vrsqrt.pop %v4488
    %v4493 = vmul.f32 %v4461, %v4489
    %v4494 = vmul.f32 %v4462, %v4490
    %v4495 = vmul.f32 %v4463, %v4491
    %v4496 = vmul.f32 %v4464, %v4492
    %v4497 = vlaneseq
    %v4498 = vshrl.u32 %v4497, 7
    %v4499 = vsub.s32 0, %v4498
    %v4500 = vrot.slane %v4443, %v4499
    %v4501 = vmul.f32 %v4493, %v4500
    %v4502 = vmul.f32 %v4494, %v4500
    %v4503 = vmul.f32 %v4495, %v4500
    %v4504 = vmul.f32 %v4496, %v4500
    %v4505 = vlaneseq
    %v4506 = vshrl.u32 %v4505, 7
    %v4507 = vsub.s32 0, %v4506
    %v4508 = vrot.slane %v4444, %v4507
    %v4509 = vadd.f32 %v4501, %v4508
    %v4510 = vadd.f32 %v4502, %v4508
    %v4511 = vadd.f32 %v4503, %v4508
    %v4512 = vadd.f32 %v4504, %v4508
    %v4513 = vld [vmem:[%s9] sm:$0xff]
    %v4514 = vld [vmem:[%s9 + $0x8] sm:$0xff]
    %v4515 = vld [vmem:[%s9 + $0x10] sm:$0xff]
    %v4516 = vld [vmem:[%s9 + $0x18] sm:$0xff]
    %v4518 = vsel %vm156, %v4509, 0
    %v4521 = vsel %vm156, %v4510, 0
    %v4524 = vsel %vm156, %v4511, 0
    %v4527 = vsel %vm156, %v4512, 0
    %4529 = vmatprep.subr.mxu0 0.0
    %4530 = vmatpush1.msra.mxu0 0.0
    %4531 = vmatprep.subr.mxu0 0.0
    %4532 = vmatpush1.msra.mxu0 0.0
    %4533 = vmatprep.subr.mxu0 0.0
    %4534 = vmatpush1.msra.mxu0 0.0
    %4535 = vmatprep.subr.mxu0 0.0
    %4536 = vmatpush1.msra.mxu0 0.0
    %4537 = vmatprep.subr.mxu0 0.0
    %4538 = vmatpush1.msra.mxu0 0.0
    %4539 = vmatprep.subr.mxu0 0.0
    %4540 = vmatpush1.msra.mxu0 0.0
    %4541 = vmatprep.subr.mxu0 0.0
    %4542 = vmatpush1.msra.mxu0 0.0
    %4543 = vmatprep.subr.mxu0 0.0
    %4544 = vmatpush1.msra.mxu0 0.0
    %4545 = vmatprep.subr.mxu0 0.0
    %4546 = vmatpush1.msra.mxu0 0.0
    %4547 = vmatprep.subr.mxu0 0.0
    %4548 = vmatpush1.msra.mxu0 0.0
    %4549 = vmatprep.subr.mxu0 0.0
    %4550 = vmatpush1.msra.mxu0 0.0
    %4551 = vmatprep.subr.mxu0 0.0
    %4552 = vmatpush1.msra.mxu0 0.0
    %4553 = vmatprep.subr.mxu0 0.0
    %4554 = vmatpush1.msra.mxu0 %v4516
    %4555 = vmatprep.subr.mxu0 0.0
    %4556 = vmatpush1.msra.mxu0 %v4515
    %4557 = vmatprep.subr.mxu0 0.0
    %4558 = vmatpush1.msra.mxu0 %v4514
    %4559 = vmatprep.subr.mxu0 0.0
    %4560 = vmatpush1.msra.mxu0 %v4513
    %4561 = vmatprep.subr.mxu0 0.0
    %4562 = vmatpush2.msra.mxu0 0.0
    %4563 = vmatprep.subr.mxu0 0.0
    %4564 = vmatpush2.msra.mxu0 0.0
    %4565 = vmatprep.subr.mxu0 0.0
    %4566 = vmatpush2.msra.mxu0 0.0
    %4567 = vmatprep.subr.mxu0 0.0
    %4568 = vmatpush2.msra.mxu0 0.0
    %4569 = vmatprep.subr.mxu0 0.0
    %4570 = vmatpush2.msra.mxu0 0.0
    %4571 = vmatprep.subr.mxu0 0.0
    %4572 = vmatpush2.msra.mxu0 0.0
    %4573 = vmatprep.subr.mxu0 0.0
    %4574 = vmatpush2.msra.mxu0 0.0
    %4575 = vmatprep.subr.mxu0 0.0
    %4576 = vmatpush2.msra.mxu0 0.0
    %4577 = vmatprep.subr.mxu0 0.0
    %4578 = vmatpush2.msra.mxu0 0.0
    %4579 = vmatprep.subr.mxu0 0.0
    %4580 = vmatpush2.msra.mxu0 0.0
    %4581 = vmatprep.subr.mxu0 0.0
    %4582 = vmatpush2.msra.mxu0 0.0
    %4583 = vmatprep.subr.mxu0 0.0
    %4584 = vmatpush2.msra.mxu0 0.0
    %4585 = vmatprep.subr.mxu0 0.0
    %4586 = vmatpush2.msra.mxu0 0.0
    %4587 = vmatprep.subr.mxu0 0.0
    %4588 = vmatpush2.msra.mxu0 0.0
    %4589 = vmatprep.subr.mxu0 0.0
    %4590 = vmatpush2.msra.mxu0 0.0
    %4591 = vmatprep.subr.mxu0 0.0
    %4592 = vmatpush2.msra.mxu0 0.0
    %4593 = vmatprep.mubr.f32.mxu0 0.0
    %4594 = vmatmul.mubr.f32.gmra.mxu0 %v4518
    %v4595 = vpop.f32.mrf.mxu0
    %v4596 = vadd.f32 0.0, %v4595
    %v4597 = vpop.f32.mrf.mxu0
    %4598 = vmatprep.mubr.f32.mxu0 0.0
    %4599 = vmatmul.mubr.f32.gmra.mxu0 %v4521
    %v4600 = vpop.f32.mrf.mxu0
    %v4601 = vadd.f32 0.0, %v4600
    %v4602 = vpop.f32.mrf.mxu0
    %4603 = vmatprep.mubr.f32.mxu0 0.0
    %4604 = vmatmul.mubr.f32.gmra.mxu0 %v4524
    %v4605 = vpop.f32.mrf.mxu0
    %v4606 = vadd.f32 0.0, %v4605
    %v4607 = vpop.f32.mrf.mxu0
    %4608 = vmatprep.mubr.f32.mxu0 0.0
    %4609 = vmatmul.mubr.f32.gmra.mxu0 %v4527
    %v4610 = vpop.f32.mrf.mxu0
    %v4611 = vadd.f32 0.0, %v4610
    %v4612 = vpop.f32.mrf.mxu0
    %4613 = vdwg.mxu0
    %4614 = vst [vmem:[%s10] sm:$0xff] %v4596
    %4615 = vst [vmem:[%s10 + $0x8] sm:$0xff] %v4601
    %4616 = vst [vmem:[%s10 + $0x10] sm:$0xff] %v4606
    %4617 = vst [vmem:[%s10 + $0x18] sm:$0xff] %v4611
    // Predicated region
    $region46: #{_lambda_.1} parent=1 // pred_check
      _
    $region47: #{_lambda_.1} parent=1 // pred_check_branch
      %4619 = sbr.rel (0) target = $region49
    $region48: #{_lambda_.1} parent=1 // pred_region
      _
    $region49: #{_lambda_.1} parent=1 // pred_fallthru
      _
    // Predicated region
    $region50: #{_lambda_.1} parent=1 // pred_check
      _
    $region51: #{_lambda_.1} parent=1 // pred_check_branch
      %4621 = sbr.rel (0) target = $region53
    $region52: #{_lambda_.1} parent=1 // pred_region
      _
    $region53: #{_lambda_.1} parent=1 // pred_fallthru
      _
    %4622 = vsyncpa [#allocation3], 1

</llo_original>
